<compile_context>
chip_gen: v7x
topology: tpu7x:2x2x1
jax: 0.10.0
libtpu: 0.0.40
codegen_flags: <defaults>
</compile_context>

<pallas_src>
import jax
import jax.numpy as jnp
from jax.experimental import pallas as pl
from jax.experimental.pallas import tpu as pltpu

_HIGHEST = jax.lax.Precision.HIGHEST


def mean_net_kernel(obs_ref, w0_ref, b0_ref, w1_ref, b1_ref,
                    wo_ref, bo_ref, mean_ref):
    # All operands are in (feature, batch) orientation: the batch rides the
    # 128-wide lane axis, so loads/stores are lane-dense and the (ac_dim, TB)
    # output store is a full-width unmasked vst.
    x = obs_ref[...]                                               # (ob_dim, TB)
    h = jnp.tanh(
        jnp.dot(w0_ref[...], x,
                preferred_element_type=jnp.float32, precision=_HIGHEST)
        + b0_ref[...]                                              # (size, 1) bcast
    )
    h = jnp.tanh(
        jnp.dot(w1_ref[...], h,
                preferred_element_type=jnp.float32, precision=_HIGHEST)
        + b1_ref[...]
    )
    mean_ref[...] = (
        jnp.dot(wo_ref[...], h,
                preferred_element_type=jnp.float32, precision=_HIGHEST)
        + bo_ref[...]                                              # (ac_dim, TB)
    )


def _round_up(x, m):
    return ((x + m - 1) // m) * m


def _mean_net_xla(obs, w0, b0, w1, b1, wo, bo):
    h = jnp.tanh(jnp.dot(obs, w0, precision=_HIGHEST) + b0)
    h = jnp.tanh(jnp.dot(h, w1, precision=_HIGHEST) + b1)
    return jnp.dot(h, wo, precision=_HIGHEST) + bo


def mlp_policy_forward(obs, params, *, tile_b=8192, min_pallas_batch=2048):
    """obs: (B, ob_dim) float32.

    Returns (batch_mean (B, ac_dim), batch_scale_tril (B, ac_dim, ac_dim)) --
    the tensors defining the MultivariateNormal action distribution.
    """
    w0, b0, w1, b1, wo, bo, logstd = params
    B, ob_dim = obs.shape
    size = w0.shape[1]
    ac_dim = wo.shape[1]

    if B < min_pallas_batch:
        # Tiny batches (e.g. get_action on one observation): XLA fuses the
        # three GEMMs fine; a single-step pallas_call would be pure overhead.
        batch_mean = _mean_net_xla(obs, w0, b0, w1, b1, wo, bo)
    else:
        # Batch tile: as large as tile_b, multiple of 128 (lane axis), but no
        # more than ceil(B/2) so the grid always has >= 2 steps (lets the
        # "parallel" batch axis shard across v7x's two TensorCores).
        half = _round_up(pl.cdiv(B, 2), 128)
        TB = min(tile_b, half, _round_up(B, 128))
        if TB >= B:
            TB = B  # full-dim block is always legal
        grid = (pl.cdiv(B, TB),)

        # One-time layout plumbing: features on sublanes, batch on lanes.
        obs_t = obs.T                      # (ob_dim, B)
        w0_t, w1_t, wo_t = w0.T, w1.T, wo.T
        b0_c = b0.reshape(size, 1)
        b1_c = b1.reshape(size, 1)
        bo_c = bo.reshape(ac_dim, 1)

        # Replicated parameters: constant index_map -> DMA'd once, no re-fetch.
        rep = lambda a: pl.BlockSpec(a.shape, lambda i: (0, 0))

        cost = pl.CostEstimate(
            flops=2 * B * (ob_dim * size + size * size + size * ac_dim),
            transcendentals=2 * B * size,  # tanh on both hidden layers
            bytes_accessed=4 * (B * ob_dim + B * ac_dim
                                + ob_dim * size + size * size + size * ac_dim
                                + 2 * size + ac_dim),
        )

        # Double-buffered obs/mean tiles + weights; only override the scoped
        # VMEM limit if an aggressive tile sweep would actually need it.
        vmem_need = (2 * 4 * TB * (ob_dim + ac_dim)
                     + 4 * (ob_dim * size + size * size + size * ac_dim
                            + 2 * size + ac_dim)
                     + (2 << 20))
        compiler_params = pltpu.CompilerParams(
            dimension_semantics=("parallel",),
            vmem_limit_bytes=vmem_need if vmem_need > (16 << 20) else None,
        )

        mean_t = pl.pallas_call(
            mean_net_kernel,
            out_shape=jax.ShapeDtypeStruct((ac_dim, B), jnp.float32),
            grid=grid,
            in_specs=[
                pl.BlockSpec((ob_dim, TB), lambda i: (0, i)),
                rep(w0_t), rep(b0_c),
                rep(w1_t), rep(b1_c),
                rep(wo_t), rep(bo_c),
            ],
            out_specs=pl.BlockSpec((ac_dim, TB), lambda i: (0, i)),
            compiler_params=compiler_params,
            cost_estimate=cost,
        )(obs_t, w0_t, b0_c, w1_t, b1_c, wo_t, bo_c)
        batch_mean = mean_t.T              # back to (B, ac_dim)

    # scale_tril = diag(exp(logstd)) is observation-independent broadcast data;
    # build it in the wrapper and broadcast lazily (no (B, ac, ac) HBM slab
    # under jit; callers that materialize it eagerly pay for it themselves).
    scale_tril = jnp.diag(jnp.exp(logstd))                 # (ac, ac)
    batch_scale_tril = jnp.broadcast_to(scale_tril[None], (B, ac_dim, ac_dim))
    return batch_mean, batch_scale_tril


def init_params(key, ob_dim, ac_dim, n_layers, size):
    # Deterministic synthetic init (small uniform, like torch Linear default range-ish).
    assert n_layers == 2, "script builds exactly the n_layers=2 MLP used below"
    keys = jax.random.split(key, 3)

    def lin(k, fan_in, fan_out):
        bound = 1.0 / jnp.sqrt(fan_in)
        kw, kb = jax.random.split(k)
        w = jax.random.uniform(kw, (fan_in, fan_out), jnp.float32, -bound, bound)
        b = jax.random.uniform(kb, (1, fan_out), jnp.float32, -bound, bound)
        return w, b

    w0, b0 = lin(keys[0], ob_dim, size)
    w1, b1 = lin(keys[1], size, size)
    wo, bo = lin(keys[2], size, ac_dim)
    logstd = jnp.zeros((ac_dim,), jnp.float32)  # nn.Parameter(torch.zeros(ac_dim))
    return (w0, b0, w1, b1, wo, bo, logstd)


def reference_forward(obs, params):
    w0, b0, w1, b1, wo, bo, logstd = params
    mean = _mean_net_xla(obs, w0, b0, w1, b1, wo, bo)
    scale = jnp.diag(jnp.exp(logstd))
    scale = jnp.broadcast_to(scale[None], (obs.shape[0],) + scale.shape)
    return mean, scale


if __name__ == "__main__":
    # Shapes consistent with the module: ob_dim=16, ac_dim=4, n_layers=2, size=32.
    ob_dim, ac_dim, n_layers, size = 16, 4, 2, 32

    key = jax.random.PRNGKey(0)
    kp, ko_small, ko_big = jax.random.split(key, 3)
    params = init_params(kp, ob_dim, ac_dim, n_layers, size)

    # (1) Tiny get_action-style batch -> small-batch fast path (plain XLA).
    B_small = 8
    obs_small = jax.random.normal(ko_small, (B_small, ob_dim), jnp.float32)
    mean_s, scale_s = mlp_policy_forward(obs_small, params)
    mean_s = jax.block_until_ready(mean_s)
    scale_s = jax.block_until_ready(scale_s)
    ref_mean_s, ref_scale_s = reference_forward(obs_small, params)
    assert mean_s.shape == (B_small, ac_dim)
    assert scale_s.shape == (B_small, ac_dim, ac_dim)
    assert jnp.allclose(mean_s, ref_mean_s, atol=1e-5, rtol=1e-5)
    assert jnp.allclose(scale_s, ref_scale_s, atol=1e-6, rtol=1e-6)

    # (2) Rollout-sized batch through the Pallas kernel (force past the
    #     small-batch cutoff so the kernel path is exercised here).
    B = 1024
    obs = jax.random.normal(ko_big, (B, ob_dim), jnp.float32)
    mean, scale_tril = mlp_policy_forward(obs, params, min_pallas_batch=0)
    mean = jax.block_until_ready(mean)
    scale_tril = jax.block_until_ready(scale_tril)

    ref_mean, ref_scale = reference_forward(obs, params)
    assert mean.shape == (B, ac_dim)
    assert scale_tril.shape == (B, ac_dim, ac_dim)
    assert jnp.allclose(mean, ref_mean, atol=1e-5, rtol=1e-5)
    assert jnp.allclose(scale_tril, ref_scale, atol=1e-6, rtol=1e-6)

    # TODO(synk): the MultivariateNormal distribution object / .sample() and the
    # Adam optimizer live outside the kernel; the kernel returns the defining
    # tensors of the action distribution.
    print("KERNEL_OK")
</pallas_src>

<mosaic_0001>
module attributes {stable_mosaic.version = 11 : i64} {
  func.func @mean_net_kernel(%arg0: i32, %arg1: memref<16x512xf32, #tpu.memory_space<vmem>>, %arg2: memref<32x16xf32, #tpu.memory_space<vmem>>, %arg3: memref<32x1xf32, #tpu.memory_space<vmem>>, %arg4: memref<32x32xf32, #tpu.memory_space<vmem>>, %arg5: memref<32x1xf32, #tpu.memory_space<vmem>>, %arg6: memref<4x32xf32, #tpu.memory_space<vmem>>, %arg7: memref<4x1xf32, #tpu.memory_space<vmem>>, %arg8: memref<4x512xf32, #tpu.memory_space<vmem>>) attributes {dimension_semantics = [#tpu.dimension_semantics<parallel>], iteration_bounds = array<i64: 2>, scalar_prefetch = 0 : i64, scratch_operands = 0 : i64, tpu.core_type = #tpu.core_type<tc>, window_params = [{transform_indices = @transform_0, window_bounds = array<i64: 16, 512>}, {pipeline_mode = #tpu.pipeline_mode<synchronous>, transform_indices = @transform_1, window_bounds = array<i64: 32, 16>}, {pipeline_mode = #tpu.pipeline_mode<synchronous>, transform_indices = @transform_2, window_bounds = array<i64: 32, 1>}, {pipeline_mode = #tpu.pipeline_mode<synchronous>, transform_indices = @transform_3, window_bounds = array<i64: 32, 32>}, {pipeline_mode = #tpu.pipeline_mode<synchronous>, transform_indices = @transform_4, window_bounds = array<i64: 32, 1>}, {pipeline_mode = #tpu.pipeline_mode<synchronous>, transform_indices = @transform_5, window_bounds = array<i64: 4, 32>}, {pipeline_mode = #tpu.pipeline_mode<synchronous>, transform_indices = @transform_6, window_bounds = array<i64: 4, 1>}, {transform_indices = @transform_7, window_bounds = array<i64: 4, 512>}]} {
    %c0 = arith.constant 0 : index
    %c0_0 = arith.constant 0 : index
    %0 = vector.load %arg1[%c0, %c0_0] : memref<16x512xf32, #tpu.memory_space<vmem>>, vector<16x512xf32>
    %c0_1 = arith.constant 0 : index
    %c0_2 = arith.constant 0 : index
    %1 = vector.load %arg2[%c0_1, %c0_2] : memref<32x16xf32, #tpu.memory_space<vmem>>, vector<32x16xf32>
    %cst = arith.constant dense<0.000000e+00> : vector<32x512xf32>
    %2 = tpu.matmul %1, %0, %cst {dimension_numbers = #tpu.dot_dimension_numbers<[1], [0], [0], [1], [0, 0, 1, 1], [], []>, precision = #tpu.contract_precision<fp32>} : vector<32x16xf32>, vector<16x512xf32>, vector<32x512xf32> -> vector<32x512xf32>
    %c0_3 = arith.constant 0 : index
    %c0_4 = arith.constant 0 : index
    %3 = vector.load %arg3[%c0_3, %c0_4] : memref<32x1xf32, #tpu.memory_space<vmem>>, vector<32x1xf32>
    %4 = vector.broadcast %3 : vector<32x1xf32> to vector<32x512xf32>
    %5 = arith.addf %2, %4 : vector<32x512xf32>
    %6 = math.tanh %5 : vector<32x512xf32>
    %c0_5 = arith.constant 0 : index
    %c0_6 = arith.constant 0 : index
    %7 = vector.load %arg4[%c0_5, %c0_6] : memref<32x32xf32, #tpu.memory_space<vmem>>, vector<32x32xf32>
    %cst_7 = arith.constant dense<0.000000e+00> : vector<32x512xf32>
    %8 = tpu.matmul %7, %6, %cst_7 {dimension_numbers = #tpu.dot_dimension_numbers<[1], [0], [0], [1], [0, 0, 1, 1], [], []>, precision = #tpu.contract_precision<fp32>} : vector<32x32xf32>, vector<32x512xf32>, vector<32x512xf32> -> vector<32x512xf32>
    %c0_8 = arith.constant 0 : index
    %c0_9 = arith.constant 0 : index
    %9 = vector.load %arg5[%c0_8, %c0_9] : memref<32x1xf32, #tpu.memory_space<vmem>>, vector<32x1xf32>
    %10 = vector.broadcast %9 : vector<32x1xf32> to vector<32x512xf32>
    %11 = arith.addf %8, %10 : vector<32x512xf32>
    %12 = math.tanh %11 : vector<32x512xf32>
    %c0_10 = arith.constant 0 : index
    %c0_11 = arith.constant 0 : index
    %13 = vector.load %arg6[%c0_10, %c0_11] : memref<4x32xf32, #tpu.memory_space<vmem>>, vector<4x32xf32>
    %cst_12 = arith.constant dense<0.000000e+00> : vector<4x512xf32>
    %14 = tpu.matmul %13, %12, %cst_12 {dimension_numbers = #tpu.dot_dimension_numbers<[1], [0], [0], [1], [0, 0, 1, 1], [], []>, precision = #tpu.contract_precision<fp32>} : vector<4x32xf32>, vector<32x512xf32>, vector<4x512xf32> -> vector<4x512xf32>
    %c0_13 = arith.constant 0 : index
    %c0_14 = arith.constant 0 : index
    %15 = vector.load %arg7[%c0_13, %c0_14] : memref<4x1xf32, #tpu.memory_space<vmem>>, vector<4x1xf32>
    %16 = vector.broadcast %15 : vector<4x1xf32> to vector<4x512xf32>
    %17 = arith.addf %14, %16 : vector<4x512xf32>
    %c0_15 = arith.constant 0 : index
    %c0_16 = arith.constant 0 : index
    %18 = vector.load %arg8[%c0_15, %c0_16] : memref<4x512xf32, #tpu.memory_space<vmem>>, vector<4x512xf32>
    tpu.vector_store %arg8[%c0_15, %c0_16], %17 {strides = array<i32>} : memref<4x512xf32, #tpu.memory_space<vmem>>, vector<4x512xf32>,
    return
  }
  func.func @transform_0(%arg0: i32) -> (i32, i32) {
    %c0_i32 = arith.constant 0 : i32
    %c0_i32_0 = arith.constant 0 : i32
    return %c0_i32, %arg0 : i32, i32
  }
  func.func @transform_1(%arg0: i32) -> (i32, i32) {
    %c0_i32 = arith.constant 0 : i32
    %c0_i32_0 = arith.constant 0 : i32
    %c0_i32_1 = arith.constant 0 : i32
    return %c0_i32, %c0_i32_0 : i32, i32
  }
  func.func @transform_2(%arg0: i32) -> (i32, i32) {
    %c0_i32 = arith.constant 0 : i32
    %c0_i32_0 = arith.constant 0 : i32
    %c0_i32_1 = arith.constant 0 : i32
    return %c0_i32, %c0_i32_0 : i32, i32
  }
  func.func @transform_3(%arg0: i32) -> (i32, i32) {
    %c0_i32 = arith.constant 0 : i32
    %c0_i32_0 = arith.constant 0 : i32
    %c0_i32_1 = arith.constant 0 : i32
    return %c0_i32, %c0_i32_0 : i32, i32
  }
  func.func @transform_4(%arg0: i32) -> (i32, i32) {
    %c0_i32 = arith.constant 0 : i32
    %c0_i32_0 = arith.constant 0 : i32
    %c0_i32_1 = arith.constant 0 : i32
    return %c0_i32, %c0_i32_0 : i32, i32
  }
  func.func @transform_5(%arg0: i32) -> (i32, i32) {
    %c0_i32 = arith.constant 0 : i32
    %c0_i32_0 = arith.constant 0 : i32
    %c0_i32_1 = arith.constant 0 : i32
    return %c0_i32, %c0_i32_0 : i32, i32
  }
  func.func @transform_6(%arg0: i32) -> (i32, i32) {
    %c0_i32 = arith.constant 0 : i32
    %c0_i32_0 = arith.constant 0 : i32
    %c0_i32_1 = arith.constant 0 : i32
    return %c0_i32, %c0_i32_0 : i32, i32
  }
  func.func @transform_7(%arg0: i32) -> (i32, i32) {
    %c0_i32 = arith.constant 0 : i32
    %c0_i32_0 = arith.constant 0 : i32
    return %c0_i32, %arg0 : i32, i32
  }
}

</mosaic_0001>

<llo_original>
// kernel: tpu_custom_call.1
$region0: #{tpu_custom_call.1}
  #allocation0 [shape = 'u32[]', space=smem, size = 0x4, offset = 0x4, fixed_abs, tag = 'smem constant byte address 0x4 - core index']
  #allocation1 [shape = 'u32[144,128]{1,0:T(1,128)}', space=vmem, size = 0x12000, scoped, tag = 'internal scratch']
  %s0 = inlined_call_operand.hbm [shape: f32[16,1024], index: 0, kind: input, shape index: {}]
  %s1 = inlined_call_operand.vmem [shape: f32[32,16], index: 1, kind: input, shape index: {}]
  %s2 = inlined_call_operand.vmem [shape: f32[32,1], index: 2, kind: input, shape index: {}]
  %s3 = inlined_call_operand.vmem [shape: f32[32,32], index: 3, kind: input, shape index: {}]
  %s4 = inlined_call_operand.vmem [shape: f32[32,1], index: 4, kind: input, shape index: {}]
  %s5 = inlined_call_operand.vmem [shape: f32[4,32], index: 5, kind: input, shape index: {}]
  %s6 = inlined_call_operand.vmem [shape: f32[4,1], index: 6, kind: input, shape index: {}]
  %s7 = inlined_call_operand.hbm [shape: f32[4,1024], index: 7, kind: output, shape index: {}]
  %s8 = sld [smem:[#allocation0]]
  $region65: #{tpu_custom_call.1} parent=0
    _
  %s10 = ssub.s32 1, %s8
  %s11 = scalar_select 0, %s10, %s8
  $region1: #{tpu_custom_call.1} parent=0
    #allocation2 [shape = 'u8[65536]{0}', space=vmem, size = 0x10000, scoped, tag = 'input window, operand 0']
    #allocation3 [shape = 's32[2]{0}', space=sflag, size = 0x8, scoped, tag = 'scoped memory for tpu_custom_call.1']
    #allocation4 [shape = 's32[2]{0}', space=sflag, size = 0x8, scoped, tag = 'scoped memory for tpu_custom_call.1']
    #allocation5 [shape = 'u8[16384]{0}', space=vmem, size = 0x4000, scoped, tag = 'output window, operand 0']
    %12 = vsyncpa [#allocation3], 0
    %s13 = scalar_lea.sflag [#allocation3], 1
    %14 = vsyncpa %s13, 0
    %15 = vsyncpa [#allocation4], 0
    %s16 = scalar_lea.sflag [#allocation4], 1
    %17 = vsyncpa %s16, 0
    loop: start=0, step=1, limit=4
    $region2: #{tpu_custom_call.1} parent=1 // loop_pre_header
      _
    $region3: #{tpu_custom_call.1} parent=1 // loop_header
      %s19 = sphi 0, %s23
      %p20 = scmp.ge.s32.totalorder %s19, 4
      %s29 = sphi 0, %s31
      %s32 = sphi 0, %s29
      %s33 = sphi 0, %s32
      %s49 = sphi 0, %s33
      %s53 = sphi 0, %s53
      %s55 = sphi 0, %s53
      %s56 = sphi 0, %s55
      %s70 = sphi 0, %s56
      %s74 = sphi 0, %s74
      %s76 = sphi 0, %s74
      %s77 = sphi 0, %s76
      %s91 = sphi 0, %s77
      %s95 = sphi 0, %s95
      %s97 = sphi 0, %s95
      %s98 = sphi 0, %s97
      %s112 = sphi 0, %s98
      %s116 = sphi 0, %s116
      %s118 = sphi 0, %s116
      %s119 = sphi 0, %s118
      %s133 = sphi 0, %s119
      %s137 = sphi 0, %s137
      %s139 = sphi 0, %s137
      %s140 = sphi 0, %s139
      %s154 = sphi 0, %s140
      %s158 = sphi 0, %s158
      %s160 = sphi 0, %s158
      %s161 = sphi 0, %s160
      %s175 = sphi 0, %s161
      %s181 = sphi 0, %s183
      %s184 = sphi 0, %s181
      %s185 = sphi 0, %s184
      %s201 = sphi 0, %s185
    $region4: #{tpu_custom_call.1} parent=1 // loop_header_branch
      %22 = sbr.rel (%p20) target = $region8
    $region5: #{tpu_custom_call.1} parent=1 // loop_body
      %s24 = ssub.s32 %s19, 1
      %s25 = ssub.s32 %s19, 2
      %s26 = sadd.s32 %s19, 1
      %s27 = ssub.s32 %s19, %s26
      %p28 = scmp.eq.s32.totalorder %s27, 0
      %s30 = sadd.s32 %s29, 1
      %s31 = scalar_select %p28, %s29, %s30
      %p34 = pneg %p28
      %p35 = scmp.eq.s32.totalorder %s19, 1
      %p36 = por %p34, %p35
      %p37 = scmp.ne.s32.totalorder %s29, %s32
      %p38 = scmp.eq.s32.totalorder %s19, 0
      %p39 = por %p37, %p38
      %p40 = scmp.ne.s32.totalorder %s29, %s32
      %p41 = scmp.eq.s32.totalorder %s24, 1
      %p42 = por %p40, %p41
      %p43 = scmp.ne.s32.totalorder %s32, %s33
      %p44 = scmp.eq.s32.totalorder %s24, 0
      %p45 = por %p43, %p44
      %p46 = scmp.ne.s32.totalorder %s32, %s33
      %p47 = scmp.eq.s32.totalorder %s25, 1
      %p48 = por %p46, %p47
      %p50 = scmp.ne.s32.totalorder %s33, %s49
      %p51 = scmp.eq.s32.totalorder %s25, 0
      %p52 = por %p50, %p51
      %s54 = sadd.s32 %s53, 1
      %p57 = scmp.eq.s32.totalorder %s19, 1
      %p58 = scmp.ne.s32.totalorder %s53, %s55
      %p59 = scmp.eq.s32.totalorder %s19, 0
      %p60 = por %p58, %p59
      %p61 = scmp.ne.s32.totalorder %s53, %s55
      %p62 = scmp.eq.s32.totalorder %s24, 1
      %p63 = por %p61, %p62
      %p64 = scmp.ne.s32.totalorder %s55, %s56
      %p65 = scmp.eq.s32.totalorder %s24, 0
      %p66 = por %p64, %p65
      %p67 = scmp.ne.s32.totalorder %s55, %s56
      %p68 = scmp.eq.s32.totalorder %s25, 1
      %p69 = por %p67, %p68
      %p71 = scmp.ne.s32.totalorder %s56, %s70
      %p72 = scmp.eq.s32.totalorder %s25, 0
      %p73 = por %p71, %p72
      %s75 = sadd.s32 %s74, 1
      %p78 = scmp.eq.s32.totalorder %s19, 1
      %p79 = scmp.ne.s32.totalorder %s74, %s76
      %p80 = scmp.eq.s32.totalorder %s19, 0
      %p81 = por %p79, %p80
      %p82 = scmp.ne.s32.totalorder %s74, %s76
      %p83 = scmp.eq.s32.totalorder %s24, 1
      %p84 = por %p82, %p83
      %p85 = scmp.ne.s32.totalorder %s76, %s77
      %p86 = scmp.eq.s32.totalorder %s24, 0
      %p87 = por %p85, %p86
      %p88 = scmp.ne.s32.totalorder %s76, %s77
      %p89 = scmp.eq.s32.totalorder %s25, 1
      %p90 = por %p88, %p89
      %p92 = scmp.ne.s32.totalorder %s77, %s91
      %p93 = scmp.eq.s32.totalorder %s25, 0
      %p94 = por %p92, %p93
      %s96 = sadd.s32 %s95, 1
      %p99 = scmp.eq.s32.totalorder %s19, 1
      %p100 = scmp.ne.s32.totalorder %s95, %s97
      %p101 = scmp.eq.s32.totalorder %s19, 0
      %p102 = por %p100, %p101
      %p103 = scmp.ne.s32.totalorder %s95, %s97
      %p104 = scmp.eq.s32.totalorder %s24, 1
      %p105 = por %p103, %p104
      %p106 = scmp.ne.s32.totalorder %s97, %s98
      %p107 = scmp.eq.s32.totalorder %s24, 0
      %p108 = por %p106, %p107
      %p109 = scmp.ne.s32.totalorder %s97, %s98
      %p110 = scmp.eq.s32.totalorder %s25, 1
      %p111 = por %p109, %p110
      %p113 = scmp.ne.s32.totalorder %s98, %s112
      %p114 = scmp.eq.s32.totalorder %s25, 0
      %p115 = por %p113, %p114
      %s117 = sadd.s32 %s116, 1
      %p120 = scmp.eq.s32.totalorder %s19, 1
      %p121 = scmp.ne.s32.totalorder %s116, %s118
      %p122 = scmp.eq.s32.totalorder %s19, 0
      %p123 = por %p121, %p122
      %p124 = scmp.ne.s32.totalorder %s116, %s118
      %p125 = scmp.eq.s32.totalorder %s24, 1
      %p126 = por %p124, %p125
      %p127 = scmp.ne.s32.totalorder %s118, %s119
      %p128 = scmp.eq.s32.totalorder %s24, 0
      %p129 = por %p127, %p128
      %p130 = scmp.ne.s32.totalorder %s118, %s119
      %p131 = scmp.eq.s32.totalorder %s25, 1
      %p132 = por %p130, %p131
      %p134 = scmp.ne.s32.totalorder %s119, %s133
      %p135 = scmp.eq.s32.totalorder %s25, 0
      %p136 = por %p134, %p135
      %s138 = sadd.s32 %s137, 1
      %p141 = scmp.eq.s32.totalorder %s19, 1
      %p142 = scmp.ne.s32.totalorder %s137, %s139
      %p143 = scmp.eq.s32.totalorder %s19, 0
      %p144 = por %p142, %p143
      %p145 = scmp.ne.s32.totalorder %s137, %s139
      %p146 = scmp.eq.s32.totalorder %s24, 1
      %p147 = por %p145, %p146
      %p148 = scmp.ne.s32.totalorder %s139, %s140
      %p149 = scmp.eq.s32.totalorder %s24, 0
      %p150 = por %p148, %p149
      %p151 = scmp.ne.s32.totalorder %s139, %s140
      %p152 = scmp.eq.s32.totalorder %s25, 1
      %p153 = por %p151, %p152
      %p155 = scmp.ne.s32.totalorder %s140, %s154
      %p156 = scmp.eq.s32.totalorder %s25, 0
      %p157 = por %p155, %p156
      %s159 = sadd.s32 %s158, 1
      %p162 = scmp.eq.s32.totalorder %s19, 1
      %p163 = scmp.ne.s32.totalorder %s158, %s160
      %p164 = scmp.eq.s32.totalorder %s19, 0
      %p165 = por %p163, %p164
      %p166 = scmp.ne.s32.totalorder %s158, %s160
      %p167 = scmp.eq.s32.totalorder %s24, 1
      %p168 = por %p166, %p167
      %p169 = scmp.ne.s32.totalorder %s160, %s161
      %p170 = scmp.eq.s32.totalorder %s24, 0
      %p171 = por %p169, %p170
      %p172 = scmp.ne.s32.totalorder %s160, %s161
      %p173 = scmp.eq.s32.totalorder %s25, 1
      %p174 = por %p172, %p173
      %p176 = scmp.ne.s32.totalorder %s161, %s175
      %p177 = scmp.eq.s32.totalorder %s25, 0
      %p178 = por %p176, %p177
      %s179 = ssub.s32 %s19, %s26
      %p180 = scmp.eq.s32.totalorder %s179, 0
      %s182 = sadd.s32 %s181, 1
      %s183 = scalar_select %p180, %s181, %s182
      %p186 = pneg %p180
      %p187 = scmp.eq.s32.totalorder %s19, 1
      %p188 = por %p186, %p187
      %p189 = scmp.ne.s32.totalorder %s181, %s184
      %p190 = scmp.eq.s32.totalorder %s19, 0
      %p191 = por %p189, %p190
      %p192 = scmp.ne.s32.totalorder %s181, %s184
      %p193 = scmp.eq.s32.totalorder %s24, 1
      %p194 = por %p192, %p193
      %p195 = scmp.ne.s32.totalorder %s184, %s185
      %p196 = scmp.eq.s32.totalorder %s24, 0
      %p197 = por %p195, %p196
      %p198 = scmp.ne.s32.totalorder %s184, %s185
      %p199 = scmp.eq.s32.totalorder %s25, 1
      %p200 = por %p198, %p199
      %p202 = scmp.ne.s32.totalorder %s185, %s201
      %p203 = scmp.eq.s32.totalorder %s25, 0
      %p204 = por %p202, %p203
      %p205 = scmp.le.s32.totalorder 1, %s19
      %p206 = scmp.lt.s32.totalorder %s19, 3
      %p207 = pnand %p205, %p206
      %p208 = pneg %p207
      // Predicated region
      $region9: #{tpu_custom_call.1} parent=5 // pred_check
        _
      $region10: #{tpu_custom_call.1} parent=5 // pred_check_branch
        %210 = sbr.rel (%p207) target = $region12
      $region11: #{tpu_custom_call.1} parent=5 // pred_region
        %s211 = ssub.s32 %s19, 1
        // Predicated region
        $region13: #{tpu_custom_call.1} parent=11 // pred_check
          %p212 = pneg %p66
        $region14: #{tpu_custom_call.1} parent=11 // pred_check_branch
          %214 = sbr.rel (%p212) target = $region16
        $region15: #{tpu_custom_call.1} parent=11 // pred_region
          _
        $region16: #{tpu_custom_call.1} parent=11 // pred_fallthru
          _
        // Predicated region
        $region17: #{tpu_custom_call.1} parent=11 // pred_check
          %p215 = pneg %p87
        $region18: #{tpu_custom_call.1} parent=11 // pred_check_branch
          %217 = sbr.rel (%p215) target = $region20
        $region19: #{tpu_custom_call.1} parent=11 // pred_region
          _
        $region20: #{tpu_custom_call.1} parent=11 // pred_fallthru
          _
        // Predicated region
        $region21: #{tpu_custom_call.1} parent=11 // pred_check
          %p218 = pneg %p108
        $region22: #{tpu_custom_call.1} parent=11 // pred_check_branch
          %220 = sbr.rel (%p218) target = $region24
        $region23: #{tpu_custom_call.1} parent=11 // pred_region
          _
        $region24: #{tpu_custom_call.1} parent=11 // pred_fallthru
          _
        // Predicated region
        $region25: #{tpu_custom_call.1} parent=11 // pred_check
          %p221 = pneg %p129
        $region26: #{tpu_custom_call.1} parent=11 // pred_check_branch
          %223 = sbr.rel (%p221) target = $region28
        $region27: #{tpu_custom_call.1} parent=11 // pred_region
          _
        $region28: #{tpu_custom_call.1} parent=11 // pred_fallthru
          _
        // Predicated region
        $region29: #{tpu_custom_call.1} parent=11 // pred_check
          %p224 = pneg %p150
        $region30: #{tpu_custom_call.1} parent=11 // pred_check_branch
          %226 = sbr.rel (%p224) target = $region32
        $region31: #{tpu_custom_call.1} parent=11 // pred_region
          _
        $region32: #{tpu_custom_call.1} parent=11 // pred_fallthru
          _
        // Predicated region
        $region33: #{tpu_custom_call.1} parent=11 // pred_check
          %p227 = pneg %p171
        $region34: #{tpu_custom_call.1} parent=11 // pred_check_branch
          %229 = sbr.rel (%p227) target = $region36
        $region35: #{tpu_custom_call.1} parent=11 // pred_region
          _
        $region36: #{tpu_custom_call.1} parent=11 // pred_fallthru
          _
      $region12: #{tpu_custom_call.1} parent=5 // pred_fallthru
        _
      %p230 = scmp.lt.s32.totalorder %s19, 2
      // Predicated region
      $region37: #{tpu_custom_call.1} parent=5 // pred_check
        %p231 = pneg %p230
      $region38: #{tpu_custom_call.1} parent=5 // pred_check_branch
        %233 = sbr.rel (%p231) target = $region40
      $region39: #{tpu_custom_call.1} parent=5 // pred_region
        // Predicated region
        $region41: #{tpu_custom_call.1} parent=39 // pred_check
          %p234 = pneg %p39
        $region42: #{tpu_custom_call.1} parent=39 // pred_check_branch
          %236 = sbr.rel (%p234) target = $region44
        $region43: #{tpu_custom_call.1} parent=39 // pred_region
          %s237 = sand.u32 %s29, 1
          %s238 = scalar_lea.sflag [#allocation3], %s237
          %s239 = sand.u32 %s29, 1
          %s240 = smul.addr %s239, 64
          %s241 = scalar_lea.vmem [#allocation2], %s240
          %s242 = smul.u32 4, %s19
          %s244 = ssub.s32 1024, 1024
          %245 = vsyncadd %s238, %s244
          %s246 = smul.addr %s242, 128
          %s247 = scalar_lea.hbm %s0, %s246
          %s248 = sshll.u32 %s241, 4
          %s249 = int_to_ptr.vmem [resolvable:$true] %s248
          %254 = dma.hbm_to_vmem [thread:$0]  %s247, 1024, %s249, %s238, 1024, 512, 32
        $region44: #{tpu_custom_call.1} parent=39 // pred_fallthru
          _
      $region40: #{tpu_custom_call.1} parent=5 // pred_fallthru
        _
      %p255 = scmp.le.s32.totalorder 1, %s19
      %p256 = scmp.lt.s32.totalorder %s19, 3
      %p257 = pnand %p255, %p256
      %p258 = pneg %p257
      // Predicated region
      $region45: #{tpu_custom_call.1} parent=5 // pred_check
        _
      $region46: #{tpu_custom_call.1} parent=5 // pred_check_branch
        %260 = sbr.rel (%p257) target = $region48
      $region47: #{tpu_custom_call.1} parent=5 // pred_region
        %s261 = ssub.s32 %s19, 1
        %s262 = sand.u32 %s32, 1
        %s263 = scalar_lea.sflag [#allocation3], %s262
        %s264 = sand.u32 %s32, 1
        %s265 = smul.addr %s264, 64
        %s266 = scalar_lea.vmem [#allocation2], %s265
        // Predicated region
        $region49: #{tpu_custom_call.1} parent=47 // pred_check
          %p267 = pneg %p45
        $region50: #{tpu_custom_call.1} parent=47 // pred_check_branch
          %269 = sbr.rel (%p267) target = $region52
        $region51: #{tpu_custom_call.1} parent=47 // pred_region
          %270 = dma.done %s263, 1024
        $region52: #{tpu_custom_call.1} parent=47 // pred_fallthru
          _
        %s271 = sand.u32 %s32, 1
        %s272 = scalar_lea.sflag [#allocation3], %s271
        %s273 = sand.u32 %s32, 1
        %s274 = smul.addr %s273, 64
        %s275 = scalar_lea.vmem [#allocation2], %s274
        %p276 = pneg %p45
        %p277 = pneg %p42
        %p278 = pneg %p66
        %p279 = pneg %p63
        %p280 = pneg %p87
        %p281 = pneg %p84
        %p282 = pneg %p108
        %p283 = pneg %p105
        %p284 = pneg %p129
        %p285 = pneg %p126
        %p286 = pneg %p150
        %p287 = pneg %p147
        %p288 = pneg %p171
        %p289 = pneg %p168
        %p290 = pneg %p197
        %p291 = pneg %p194
        %s292 = sand.u32 %s184, 1
        %s293 = scalar_lea.sflag [#allocation4], %s292
        %s294 = sand.u32 %s184, 1
        %s295 = smul.addr %s294, 16
        %s296 = scalar_lea.vmem [#allocation5], %s295
        %s297 = smul.u32 4, %s24
        %s298 = smul.u32 4, %s24
        %v299 = vld [vmem:[%s266] sm:$0xff]
        %v300 = vld [vmem:[%s266 + $0x8] sm:$0xff]
        %v301 = vld [vmem:[%s266 + $0x10] sm:$0xff]
        %v302 = vld [vmem:[%s266 + $0x18] sm:$0xff]
        %v303 = vld [vmem:[%s266 + $0x20] sm:$0xff]
        %v304 = vld [vmem:[%s266 + $0x28] sm:$0xff]
        %v305 = vld [vmem:[%s266 + $0x30] sm:$0xff]
        %v306 = vld [vmem:[%s266 + $0x38] sm:$0xff]
        %v307 = vld [vmem:[%s1] sm:$0xff]
        %v308 = vld [vmem:[%s1 + $0x8] sm:$0xff]
        %v309 = vld [vmem:[%s1 + $0x10] sm:$0xff]
        %v310 = vld [vmem:[%s1 + $0x18] sm:$0xff]
        %v311 = vld [vmem:[%s2] sm:$0xff]
        %v312 = vld [vmem:[%s2 + $0x8] sm:$0xff]
        %v313 = vld [vmem:[%s2 + $0x10] sm:$0xff]
        %v314 = vld [vmem:[%s2 + $0x18] sm:$0xff]
        %316 = vset.pattern.permute.xlu0 0
        %317 = vperm.xlu0 %316, %v311
        %v318 = vpop.permute.xlu0 %317
        %321 = vset.pattern.permute.xlu0 0
        %322 = vperm.xlu0 %321, %v312
        %v323 = vpop.permute.xlu0 %322
        %326 = vset.pattern.permute.xlu0 0
        %327 = vperm.xlu0 %326, %v313
        %v328 = vpop.permute.xlu0 %327
        %331 = vset.pattern.permute.xlu0 0
        %332 = vperm.xlu0 %331, %v314
        %v333 = vpop.permute.xlu0 %332
        %vm335 = vcmask 130048
        %v337 = vsel %vm335, %v307, 0
        %v340 = vsel %vm335, %v308, 0
        %v343 = vsel %vm335, %v309, 0
        %v346 = vsel %vm335, %v310, 0
        %v348 = vand.u32 %v300, 4294901760
        %349 = vmatprep.subr.mxu0 %v348
        %v350 = vand.u32 %v299, 4294901760
        %351 = vmatpush1.msra.mxu0 %v350
        %v352 = vand.u32 %v304, 4294901760
        %353 = vmatprep.subr.mxu0 %v352
        %v354 = vand.u32 %v303, 4294901760
        %355 = vmatpush1.msra.mxu0 %v354
        %356 = vmatprep.subr.mxu0 0.0
        %357 = vmatpush1.msra.mxu0 0.0
        %358 = vmatprep.subr.mxu0 0.0
        %359 = vmatpush1.msra.mxu0 0.0
        %360 = vmatprep.subr.mxu0 0.0
        %361 = vmatpush1.msra.mxu0 0.0
        %362 = vmatprep.subr.mxu0 0.0
        %363 = vmatpush1.msra.mxu0 0.0
        %364 = vmatprep.subr.mxu0 0.0
        %365 = vmatpush1.msra.mxu0 0.0
        %366 = vmatprep.subr.mxu0 0.0
        %367 = vmatpush1.msra.mxu0 0.0
        %368 = vmatprep.subr.mxu0 0.0
        %369 = vmatpush1.msra.mxu0 0.0
        %370 = vmatprep.subr.mxu0 0.0
        %371 = vmatpush1.msra.mxu0 0.0
        %372 = vmatprep.subr.mxu0 0.0
        %373 = vmatpush1.msra.mxu0 0.0
        %374 = vmatprep.subr.mxu0 0.0
        %375 = vmatpush1.msra.mxu0 0.0
        %376 = vmatprep.subr.mxu0 0.0
        %377 = vmatpush1.msra.mxu0 0.0
        %378 = vmatprep.subr.mxu0 0.0
        %379 = vmatpush1.msra.mxu0 0.0
        %380 = vmatprep.subr.mxu0 0.0
        %381 = vmatpush1.msra.mxu0 0.0
        %382 = vmatprep.subr.mxu0 0.0
        %383 = vmatpush1.msra.mxu0 0.0
        %384 = vmatprep.subr.mxu0 0.0
        %385 = vmatpush1.msra.mxu0 0.0
        %386 = vmatprep.subr.mxu0 0.0
        %387 = vmatpush1.msra.mxu0 0.0
        %388 = vmatprep.subr.mxu0 0.0
        %389 = vmatpush1.msra.mxu0 0.0
        %390 = vmatprep.subr.mxu0 0.0
        %391 = vmatpush1.msra.mxu0 0.0
        %392 = vmatprep.subr.mxu0 0.0
        %393 = vmatpush1.msra.mxu0 0.0
        %394 = vmatprep.subr.mxu0 0.0
        %395 = vmatpush1.msra.mxu0 0.0
        %396 = vmatprep.subr.mxu0 0.0
        %397 = vmatpush1.msra.mxu0 0.0
        %398 = vmatprep.subr.mxu0 0.0
        %399 = vmatpush1.msra.mxu0 0.0
        %400 = vmatprep.subr.mxu0 0.0
        %401 = vmatpush1.msra.mxu0 0.0
        %402 = vmatprep.subr.mxu0 0.0
        %403 = vmatpush1.msra.mxu0 0.0
        %404 = vmatprep.subr.mxu0 0.0
        %405 = vmatpush1.msra.mxu0 0.0
        %406 = vmatprep.subr.mxu0 0.0
        %407 = vmatpush1.msra.mxu0 0.0
        %408 = vmatprep.subr.mxu0 0.0
        %409 = vmatpush1.msra.mxu0 0.0
        %410 = vmatprep.subr.mxu0 0.0
        %411 = vmatpush1.msra.mxu0 0.0
        %412 = vmatprep.subr.mxu0 0.0
        %413 = vmatpush1.msra.mxu0 0.0
        %414 = vmatprep.subr.mxu0 0.0
        %415 = vmatpush1.msra.mxu0 0.0
        %416 = vmatprep.mubr.f32.mxu0 0.0
        %v417 = vand.u32 %v337, 4294901760
        %v418 = vsub.f32 %v337, %v417
        %v419 = vand.u32 %v418, 4294901760
        %v420 = vsub.f32 %v418, %v419
        %v421 = vand.u32 %v420, 4294901760
        %422 = vmatmul.mubr.f32.gmra.mrb[0].mxu0 %v421
        %v423 = vpop.f32.mrb[0].mxu0
        %v424 = vadd.f32 %v318, %v423
        %v425 = vpop.f32.mrb[0].mxu0
        %v426 = vadd.f32 %v318, %v425
        %427 = vmatprep.mubr.f32.mxu0 0.0
        %v428 = vand.u32 %v340, 4294901760
        %v429 = vsub.f32 %v340, %v428
        %v430 = vand.u32 %v429, 4294901760
        %v431 = vsub.f32 %v429, %v430
        %v432 = vand.u32 %v431, 4294901760
        %433 = vmatmul.mubr.f32.gmra.mrb[0].mxu0 %v432
        %v434 = vpop.f32.mrb[0].mxu0
        %v435 = vadd.f32 %v323, %v434
        %v436 = vpop.f32.mrb[0].mxu0
        %v437 = vadd.f32 %v323, %v436
        %438 = vmatprep.mubr.f32.mxu0 0.0
        %v439 = vand.u32 %v343, 4294901760
        %v440 = vsub.f32 %v343, %v439
        %v441 = vand.u32 %v440, 4294901760
        %v442 = vsub.f32 %v440, %v441
        %v443 = vand.u32 %v442, 4294901760
        %444 = vmatmul.mubr.f32.gmra.mrb[0].mxu0 %v443
        %v445 = vpop.f32.mrb[0].mxu0
        %v446 = vadd.f32 %v328, %v445
        %v447 = vpop.f32.mrb[0].mxu0
        %v448 = vadd.f32 %v328, %v447
        %449 = vmatprep.mubr.f32.mxu0 0.0
        %v450 = vand.u32 %v346, 4294901760
        %v451 = vsub.f32 %v346, %v450
        %v452 = vand.u32 %v451, 4294901760
        %v453 = vsub.f32 %v451, %v452
        %v454 = vand.u32 %v453, 4294901760
        %455 = vmatmul.mubr.f32.gmra.mrb[0].mxu0 %v454
        %v456 = vpop.f32.mrb[0].mxu0
        %v457 = vadd.f32 %v333, %v456
        %v458 = vpop.f32.mrb[0].mxu0
        %v459 = vadd.f32 %v333, %v458
        %460 = vdwg.mxu0
        %v461 = vand.u32 %v300, 4294901760
        %v462 = vsub.f32 %v300, %v461
        %v463 = vand.u32 %v462, 4294901760
        %v464 = vsub.f32 %v462, %v463
        %v465 = vand.u32 %v464, 4294901760
        %466 = vmatprep.subr.mxu0 %v465
        %v467 = vand.u32 %v299, 4294901760
        %v468 = vsub.f32 %v299, %v467
        %v469 = vand.u32 %v468, 4294901760
        %v470 = vsub.f32 %v468, %v469
        %v471 = vand.u32 %v470, 4294901760
        %472 = vmatpush1.msra.mxu0 %v471
        %v473 = vand.u32 %v304, 4294901760
        %v474 = vsub.f32 %v304, %v473
        %v475 = vand.u32 %v474, 4294901760
        %v476 = vsub.f32 %v474, %v475
        %v477 = vand.u32 %v476, 4294901760
        %478 = vmatprep.subr.mxu0 %v477
        %v479 = vand.u32 %v303, 4294901760
        %v480 = vsub.f32 %v303, %v479
        %v481 = vand.u32 %v480, 4294901760
        %v482 = vsub.f32 %v480, %v481
        %v483 = vand.u32 %v482, 4294901760
        %484 = vmatpush1.msra.mxu0 %v483
        %485 = vmatprep.subr.mxu0 0.0
        %486 = vmatpush1.msra.mxu0 0.0
        %487 = vmatprep.subr.mxu0 0.0
        %488 = vmatpush1.msra.mxu0 0.0
        %489 = vmatprep.subr.mxu0 0.0
        %490 = vmatpush1.msra.mxu0 0.0
        %491 = vmatprep.subr.mxu0 0.0
        %492 = vmatpush1.msra.mxu0 0.0
        %493 = vmatprep.subr.mxu0 0.0
        %494 = vmatpush1.msra.mxu0 0.0
        %495 = vmatprep.subr.mxu0 0.0
        %496 = vmatpush1.msra.mxu0 0.0
        %497 = vmatprep.subr.mxu0 0.0
        %498 = vmatpush1.msra.mxu0 0.0
        %499 = vmatprep.subr.mxu0 0.0
        %500 = vmatpush1.msra.mxu0 0.0
        %501 = vmatprep.subr.mxu0 0.0
        %502 = vmatpush1.msra.mxu0 0.0
        %503 = vmatprep.subr.mxu0 0.0
        %504 = vmatpush1.msra.mxu0 0.0
        %505 = vmatprep.subr.mxu0 0.0
        %506 = vmatpush1.msra.mxu0 0.0
        %507 = vmatprep.subr.mxu0 0.0
        %508 = vmatpush1.msra.mxu0 0.0
        %509 = vmatprep.subr.mxu0 0.0
        %510 = vmatpush1.msra.mxu0 0.0
        %511 = vmatprep.subr.mxu0 0.0
        %512 = vmatpush1.msra.mxu0 0.0
        %513 = vmatprep.subr.mxu0 0.0
        %514 = vmatpush1.msra.mxu0 0.0
        %515 = vmatprep.subr.mxu0 0.0
        %516 = vmatpush1.msra.mxu0 0.0
        %517 = vmatprep.subr.mxu0 0.0
        %518 = vmatpush1.msra.mxu0 0.0
        %519 = vmatprep.subr.mxu0 0.0
        %520 = vmatpush1.msra.mxu0 0.0
        %521 = vmatprep.subr.mxu0 0.0
        %522 = vmatpush1.msra.mxu0 0.0
        %523 = vmatprep.subr.mxu0 0.0
        %524 = vmatpush1.msra.mxu0 0.0
        %525 = vmatprep.subr.mxu0 0.0
        %526 = vmatpush1.msra.mxu0 0.0
        %527 = vmatprep.subr.mxu0 0.0
        %528 = vmatpush1.msra.mxu0 0.0
        %529 = vmatprep.subr.mxu0 0.0
        %530 = vmatpush1.msra.mxu0 0.0
        %531 = vmatprep.subr.mxu0 0.0
        %532 = vmatpush1.msra.mxu0 0.0
        %533 = vmatprep.subr.mxu0 0.0
        %534 = vmatpush1.msra.mxu0 0.0
        %535 = vmatprep.subr.mxu0 0.0
        %536 = vmatpush1.msra.mxu0 0.0
        %537 = vmatprep.subr.mxu0 0.0
        %538 = vmatpush1.msra.mxu0 0.0
        %539 = vmatprep.subr.mxu0 0.0
        %540 = vmatpush1.msra.mxu0 0.0
        %541 = vmatprep.subr.mxu0 0.0
        %542 = vmatpush1.msra.mxu0 0.0
        %543 = vmatprep.subr.mxu0 0.0
        %544 = vmatpush1.msra.mxu0 0.0
        %545 = vmatprep.mubr.f32.mxu0 0.0
        %v546 = vand.u32 %v337, 4294901760
        %547 = vmatmul.mubr.f32.gmra.mrb[0].mxu0 %v546
        %v548 = vpop.f32.mrb[0].mxu0
        %v549 = vadd.f32 %v424, %v548
        %v550 = vpop.f32.mrb[0].mxu0
        %v551 = vadd.f32 %v426, %v550
        %552 = vmatprep.mubr.f32.mxu0 0.0
        %v553 = vand.u32 %v340, 4294901760
        %554 = vmatmul.mubr.f32.gmra.mrb[0].mxu0 %v553
        %v555 = vpop.f32.mrb[0].mxu0
        %v556 = vadd.f32 %v435, %v555
        %v557 = vpop.f32.mrb[0].mxu0
        %v558 = vadd.f32 %v437, %v557
        %559 = vmatprep.mubr.f32.mxu0 0.0
        %v560 = vand.u32 %v343, 4294901760
        %561 = vmatmul.mubr.f32.gmra.mrb[0].mxu0 %v560
        %v562 = vpop.f32.mrb[0].mxu0
        %v563 = vadd.f32 %v446, %v562
        %v564 = vpop.f32.mrb[0].mxu0
        %v565 = vadd.f32 %v448, %v564
        %566 = vmatprep.mubr.f32.mxu0 0.0
        %v567 = vand.u32 %v346, 4294901760
        %568 = vmatmul.mubr.f32.gmra.mrb[0].mxu0 %v567
        %v569 = vpop.f32.mrb[0].mxu0
        %v570 = vadd.f32 %v457, %v569
        %v571 = vpop.f32.mrb[0].mxu0
        %v572 = vadd.f32 %v459, %v571
        %573 = vdwg.mxu0
        %v574 = vand.u32 %v300, 4294901760
        %v575 = vsub.f32 %v300, %v574
        %576 = vmatprep.subr.mxu0 %v575
        %v577 = vand.u32 %v299, 4294901760
        %v578 = vsub.f32 %v299, %v577
        %579 = vmatpush1.msra.mxu0 %v578
        %v580 = vand.u32 %v304, 4294901760
        %v581 = vsub.f32 %v304, %v580
        %582 = vmatprep.subr.mxu0 %v581
        %v583 = vand.u32 %v303, 4294901760
        %v584 = vsub.f32 %v303, %v583
        %585 = vmatpush1.msra.mxu0 %v584
        %586 = vmatprep.subr.mxu0 0.0
        %587 = vmatpush1.msra.mxu0 0.0
        %588 = vmatprep.subr.mxu0 0.0
        %589 = vmatpush1.msra.mxu0 0.0
        %590 = vmatprep.subr.mxu0 0.0
        %591 = vmatpush1.msra.mxu0 0.0
        %592 = vmatprep.subr.mxu0 0.0
        %593 = vmatpush1.msra.mxu0 0.0
        %594 = vmatprep.subr.mxu0 0.0
        %595 = vmatpush1.msra.mxu0 0.0
        %596 = vmatprep.subr.mxu0 0.0
        %597 = vmatpush1.msra.mxu0 0.0
        %598 = vmatprep.subr.mxu0 0.0
        %599 = vmatpush1.msra.mxu0 0.0
        %600 = vmatprep.subr.mxu0 0.0
        %601 = vmatpush1.msra.mxu0 0.0
        %602 = vmatprep.subr.mxu0 0.0
        %603 = vmatpush1.msra.mxu0 0.0
        %604 = vmatprep.subr.mxu0 0.0
        %605 = vmatpush1.msra.mxu0 0.0
        %606 = vmatprep.subr.mxu0 0.0
        %607 = vmatpush1.msra.mxu0 0.0
        %608 = vmatprep.subr.mxu0 0.0
        %609 = vmatpush1.msra.mxu0 0.0
        %610 = vmatprep.subr.mxu0 0.0
        %611 = vmatpush1.msra.mxu0 0.0
        %612 = vmatprep.subr.mxu0 0.0
        %613 = vmatpush1.msra.mxu0 0.0
        %614 = vmatprep.subr.mxu0 0.0
        %615 = vmatpush1.msra.mxu0 0.0
        %616 = vmatprep.subr.mxu0 0.0
        %617 = vmatpush1.msra.mxu0 0.0
        %618 = vmatprep.subr.mxu0 0.0
        %619 = vmatpush1.msra.mxu0 0.0
        %620 = vmatprep.subr.mxu0 0.0
        %621 = vmatpush1.msra.mxu0 0.0
        %622 = vmatprep.subr.mxu0 0.0
        %623 = vmatpush1.msra.mxu0 0.0
        %624 = vmatprep.subr.mxu0 0.0
        %625 = vmatpush1.msra.mxu0 0.0
        %626 = vmatprep.subr.mxu0 0.0
        %627 = vmatpush1.msra.mxu0 0.0
        %628 = vmatprep.subr.mxu0 0.0
        %629 = vmatpush1.msra.mxu0 0.0
        %630 = vmatprep.subr.mxu0 0.0
        %631 = vmatpush1.msra.mxu0 0.0
        %632 = vmatprep.subr.mxu0 0.0
        %633 = vmatpush1.msra.mxu0 0.0
        %634 = vmatprep.subr.mxu0 0.0
        %635 = vmatpush1.msra.mxu0 0.0
        %636 = vmatprep.subr.mxu0 0.0
        %637 = vmatpush1.msra.mxu0 0.0
        %638 = vmatprep.subr.mxu0 0.0
        %639 = vmatpush1.msra.mxu0 0.0
        %640 = vmatprep.subr.mxu0 0.0
        %641 = vmatpush1.msra.mxu0 0.0
        %642 = vmatprep.subr.mxu0 0.0
        %643 = vmatpush1.msra.mxu0 0.0
        %644 = vmatprep.subr.mxu0 0.0
        %645 = vmatpush1.msra.mxu0 0.0
        %646 = vmatprep.mubr.f32.mxu0 0.0
        %v647 = vand.u32 %v337, 4294901760
        %v648 = vsub.f32 %v337, %v647
        %649 = vmatmul.mubr.f32.gmra.mrb[0].mxu0 %v648
        %v650 = vpop.f32.mrb[0].mxu0
        %v651 = vadd.f32 %v549, %v650
        %v652 = vpop.f32.mrb[0].mxu0
        %v653 = vadd.f32 %v551, %v652
        %654 = vmatprep.mubr.f32.mxu0 0.0
        %v655 = vand.u32 %v340, 4294901760
        %v656 = vsub.f32 %v340, %v655
        %657 = vmatmul.mubr.f32.gmra.mrb[0].mxu0 %v656
        %v658 = vpop.f32.mrb[0].mxu0
        %v659 = vadd.f32 %v556, %v658
        %v660 = vpop.f32.mrb[0].mxu0
        %v661 = vadd.f32 %v558, %v660
        %662 = vmatprep.mubr.f32.mxu0 0.0
        %v663 = vand.u32 %v343, 4294901760
        %v664 = vsub.f32 %v343, %v663
        %665 = vmatmul.mubr.f32.gmra.mrb[0].mxu0 %v664
        %v666 = vpop.f32.mrb[0].mxu0
        %v667 = vadd.f32 %v563, %v666
        %v668 = vpop.f32.mrb[0].mxu0
        %v669 = vadd.f32 %v565, %v668
        %670 = vmatprep.mubr.f32.mxu0 0.0
        %v671 = vand.u32 %v346, 4294901760
        %v672 = vsub.f32 %v346, %v671
        %673 = vmatmul.mubr.f32.gmra.mrb[0].mxu0 %v672
        %v674 = vpop.f32.mrb[0].mxu0
        %v675 = vadd.f32 %v570, %v674
        %v676 = vpop.f32.mrb[0].mxu0
        %v677 = vadd.f32 %v572, %v676
        %678 = vdwg.mxu0
        %v679 = vand.u32 %v300, 4294901760
        %680 = vmatprep.subr.mxu0 %v679
        %v681 = vand.u32 %v299, 4294901760
        %682 = vmatpush1.msra.mxu0 %v681
        %v683 = vand.u32 %v304, 4294901760
        %684 = vmatprep.subr.mxu0 %v683
        %v685 = vand.u32 %v303, 4294901760
        %686 = vmatpush1.msra.mxu0 %v685
        %687 = vmatprep.subr.mxu0 0.0
        %688 = vmatpush1.msra.mxu0 0.0
        %689 = vmatprep.subr.mxu0 0.0
        %690 = vmatpush1.msra.mxu0 0.0
        %691 = vmatprep.subr.mxu0 0.0
        %692 = vmatpush1.msra.mxu0 0.0
        %693 = vmatprep.subr.mxu0 0.0
        %694 = vmatpush1.msra.mxu0 0.0
        %695 = vmatprep.subr.mxu0 0.0
        %696 = vmatpush1.msra.mxu0 0.0
        %697 = vmatprep.subr.mxu0 0.0
        %698 = vmatpush1.msra.mxu0 0.0
        %699 = vmatprep.subr.mxu0 0.0
        %700 = vmatpush1.msra.mxu0 0.0
        %701 = vmatprep.subr.mxu0 0.0
        %702 = vmatpush1.msra.mxu0 0.0
        %703 = vmatprep.subr.mxu0 0.0
        %704 = vmatpush1.msra.mxu0 0.0
        %705 = vmatprep.subr.mxu0 0.0
        %706 = vmatpush1.msra.mxu0 0.0
        %707 = vmatprep.subr.mxu0 0.0
        %708 = vmatpush1.msra.mxu0 0.0
        %709 = vmatprep.subr.mxu0 0.0
        %710 = vmatpush1.msra.mxu0 0.0
        %711 = vmatprep.subr.mxu0 0.0
        %712 = vmatpush1.msra.mxu0 0.0
        %713 = vmatprep.subr.mxu0 0.0
        %714 = vmatpush1.msra.mxu0 0.0
        %715 = vmatprep.subr.mxu0 0.0
        %716 = vmatpush1.msra.mxu0 0.0
        %717 = vmatprep.subr.mxu0 0.0
        %718 = vmatpush1.msra.mxu0 0.0
        %719 = vmatprep.subr.mxu0 0.0
        %720 = vmatpush1.msra.mxu0 0.0
        %721 = vmatprep.subr.mxu0 0.0
        %722 = vmatpush1.msra.mxu0 0.0
        %723 = vmatprep.subr.mxu0 0.0
        %724 = vmatpush1.msra.mxu0 0.0
        %725 = vmatprep.subr.mxu0 0.0
        %726 = vmatpush1.msra.mxu0 0.0
        %727 = vmatprep.subr.mxu0 0.0
        %728 = vmatpush1.msra.mxu0 0.0
        %729 = vmatprep.subr.mxu0 0.0
        %730 = vmatpush1.msra.mxu0 0.0
        %731 = vmatprep.subr.mxu0 0.0
        %732 = vmatpush1.msra.mxu0 0.0
        %733 = vmatprep.subr.mxu0 0.0
        %734 = vmatpush1.msra.mxu0 0.0
        %735 = vmatprep.subr.mxu0 0.0
        %736 = vmatpush1.msra.mxu0 0.0
        %737 = vmatprep.subr.mxu0 0.0
        %738 = vmatpush1.msra.mxu0 0.0
        %739 = vmatprep.subr.mxu0 0.0
        %740 = vmatpush1.msra.mxu0 0.0
        %741 = vmatprep.subr.mxu0 0.0
        %742 = vmatpush1.msra.mxu0 0.0
        %743 = vmatprep.subr.mxu0 0.0
        %744 = vmatpush1.msra.mxu0 0.0
        %745 = vmatprep.subr.mxu0 0.0
        %746 = vmatpush1.msra.mxu0 0.0
        %747 = vmatprep.mubr.f32.mxu0 0.0
        %v748 = vand.u32 %v337, 4294901760
        %v749 = vsub.f32 %v337, %v748
        %v750 = vand.u32 %v749, 4294901760
        %751 = vmatmul.mubr.f32.gmra.mrb[0].mxu0 %v750
        %v752 = vpop.f32.mrb[0].mxu0
        %v753 = vadd.f32 %v651, %v752
        %v754 = vpop.f32.mrb[0].mxu0
        %v755 = vadd.f32 %v653, %v754
        %756 = vmatprep.mubr.f32.mxu0 0.0
        %v757 = vand.u32 %v340, 4294901760
        %v758 = vsub.f32 %v340, %v757
        %v759 = vand.u32 %v758, 4294901760
        %760 = vmatmul.mubr.f32.gmra.mrb[0].mxu0 %v759
        %v761 = vpop.f32.mrb[0].mxu0
        %v762 = vadd.f32 %v659, %v761
        %v763 = vpop.f32.mrb[0].mxu0
        %v764 = vadd.f32 %v661, %v763
        %765 = vmatprep.mubr.f32.mxu0 0.0
        %v766 = vand.u32 %v343, 4294901760
        %v767 = vsub.f32 %v343, %v766
        %v768 = vand.u32 %v767, 4294901760
        %769 = vmatmul.mubr.f32.gmra.mrb[0].mxu0 %v768
        %v770 = vpop.f32.mrb[0].mxu0
        %v771 = vadd.f32 %v667, %v770
        %v772 = vpop.f32.mrb[0].mxu0
        %v773 = vadd.f32 %v669, %v772
        %774 = vmatprep.mubr.f32.mxu0 0.0
        %v775 = vand.u32 %v346, 4294901760
        %v776 = vsub.f32 %v346, %v775
        %v777 = vand.u32 %v776, 4294901760
        %778 = vmatmul.mubr.f32.gmra.mrb[0].mxu0 %v777
        %v779 = vpop.f32.mrb[0].mxu0
        %v780 = vadd.f32 %v675, %v779
        %v781 = vpop.f32.mrb[0].mxu0
        %v782 = vadd.f32 %v677, %v781
        %783 = vdwg.mxu0
        %v784 = vand.u32 %v300, 4294901760
        %v785 = vsub.f32 %v300, %v784
        %v786 = vand.u32 %v785, 4294901760
        %787 = vmatprep.subr.mxu0 %v786
        %v788 = vand.u32 %v299, 4294901760
        %v789 = vsub.f32 %v299, %v788
        %v790 = vand.u32 %v789, 4294901760
        %791 = vmatpush1.msra.mxu0 %v790
        %v792 = vand.u32 %v304, 4294901760
        %v793 = vsub.f32 %v304, %v792
        %v794 = vand.u32 %v793, 4294901760
        %795 = vmatprep.subr.mxu0 %v794
        %v796 = vand.u32 %v303, 4294901760
        %v797 = vsub.f32 %v303, %v796
        %v798 = vand.u32 %v797, 4294901760
        %799 = vmatpush1.msra.mxu0 %v798
        %800 = vmatprep.subr.mxu0 0.0
        %801 = vmatpush1.msra.mxu0 0.0
        %802 = vmatprep.subr.mxu0 0.0
        %803 = vmatpush1.msra.mxu0 0.0
        %804 = vmatprep.subr.mxu0 0.0
        %805 = vmatpush1.msra.mxu0 0.0
        %806 = vmatprep.subr.mxu0 0.0
        %807 = vmatpush1.msra.mxu0 0.0
        %808 = vmatprep.subr.mxu0 0.0
        %809 = vmatpush1.msra.mxu0 0.0
        %810 = vmatprep.subr.mxu0 0.0
        %811 = vmatpush1.msra.mxu0 0.0
        %812 = vmatprep.subr.mxu0 0.0
        %813 = vmatpush1.msra.mxu0 0.0
        %814 = vmatprep.subr.mxu0 0.0
        %815 = vmatpush1.msra.mxu0 0.0
        %816 = vmatprep.subr.mxu0 0.0
        %817 = vmatpush1.msra.mxu0 0.0
        %818 = vmatprep.subr.mxu0 0.0
        %819 = vmatpush1.msra.mxu0 0.0
        %820 = vmatprep.subr.mxu0 0.0
        %821 = vmatpush1.msra.mxu0 0.0
        %822 = vmatprep.subr.mxu0 0.0
        %823 = vmatpush1.msra.mxu0 0.0
        %824 = vmatprep.subr.mxu0 0.0
        %825 = vmatpush1.msra.mxu0 0.0
        %826 = vmatprep.subr.mxu0 0.0
        %827 = vmatpush1.msra.mxu0 0.0
        %828 = vmatprep.subr.mxu0 0.0
        %829 = vmatpush1.msra.mxu0 0.0
        %830 = vmatprep.subr.mxu0 0.0
        %831 = vmatpush1.msra.mxu0 0.0
        %832 = vmatprep.subr.mxu0 0.0
        %833 = vmatpush1.msra.mxu0 0.0
        %834 = vmatprep.subr.mxu0 0.0
        %835 = vmatpush1.msra.mxu0 0.0
        %836 = vmatprep.subr.mxu0 0.0
        %837 = vmatpush1.msra.mxu0 0.0
        %838 = vmatprep.subr.mxu0 0.0
        %839 = vmatpush1.msra.mxu0 0.0
        %840 = vmatprep.subr.mxu0 0.0
        %841 = vmatpush1.msra.mxu0 0.0
        %842 = vmatprep.subr.mxu0 0.0
        %843 = vmatpush1.msra.mxu0 0.0
        %844 = vmatprep.subr.mxu0 0.0
        %845 = vmatpush1.msra.mxu0 0.0
        %846 = vmatprep.subr.mxu0 0.0
        %847 = vmatpush1.msra.mxu0 0.0
        %848 = vmatprep.subr.mxu0 0.0
        %849 = vmatpush1.msra.mxu0 0.0
        %850 = vmatprep.subr.mxu0 0.0
        %851 = vmatpush1.msra.mxu0 0.0
        %852 = vmatprep.subr.mxu0 0.0
        %853 = vmatpush1.msra.mxu0 0.0
        %854 = vmatprep.subr.mxu0 0.0
        %855 = vmatpush1.msra.mxu0 0.0
        %856 = vmatprep.subr.mxu0 0.0
        %857 = vmatpush1.msra.mxu0 0.0
        %858 = vmatprep.subr.mxu0 0.0
        %859 = vmatpush1.msra.mxu0 0.0
        %860 = vmatprep.mubr.f32.mxu0 0.0
        %v861 = vand.u32 %v337, 4294901760
        %862 = vmatmul.mubr.f32.gmra.mrb[0].mxu0 %v861
        %v863 = vpop.f32.mrb[0].mxu0
        %v864 = vadd.f32 %v753, %v863
        %v865 = vpop.f32.mrb[0].mxu0
        %v866 = vadd.f32 %v755, %v865
        %867 = vmatprep.mubr.f32.mxu0 0.0
        %v868 = vand.u32 %v340, 4294901760
        %869 = vmatmul.mubr.f32.gmra.mrb[0].mxu0 %v868
        %v870 = vpop.f32.mrb[0].mxu0
        %v871 = vadd.f32 %v762, %v870
        %v872 = vpop.f32.mrb[0].mxu0
        %v873 = vadd.f32 %v764, %v872
        %874 = vmatprep.mubr.f32.mxu0 0.0
        %v875 = vand.u32 %v343, 4294901760
        %876 = vmatmul.mubr.f32.gmra.mrb[0].mxu0 %v875
        %v877 = vpop.f32.mrb[0].mxu0
        %v878 = vadd.f32 %v771, %v877
        %v879 = vpop.f32.mrb[0].mxu0
        %v880 = vadd.f32 %v773, %v879
        %881 = vmatprep.mubr.f32.mxu0 0.0
        %v882 = vand.u32 %v346, 4294901760
        %883 = vmatmul.mubr.f32.gmra.mrb[0].mxu0 %v882
        %v884 = vpop.f32.mrb[0].mxu0
        %v885 = vadd.f32 %v780, %v884
        %v886 = vpop.f32.mrb[0].mxu0
        %v887 = vadd.f32 %v782, %v886
        %888 = vdwg.mxu0
        %v889 = vand.u32 %v300, 4294901760
        %890 = vmatprep.subr.mxu0 %v889
        %v891 = vand.u32 %v299, 4294901760
        %892 = vmatpush1.msra.mxu0 %v891
        %v893 = vand.u32 %v304, 4294901760
        %894 = vmatprep.subr.mxu0 %v893
        %v895 = vand.u32 %v303, 4294901760
        %896 = vmatpush1.msra.mxu0 %v895
        %897 = vmatprep.subr.mxu0 0.0
        %898 = vmatpush1.msra.mxu0 0.0
        %899 = vmatprep.subr.mxu0 0.0
        %900 = vmatpush1.msra.mxu0 0.0
        %901 = vmatprep.subr.mxu0 0.0
        %902 = vmatpush1.msra.mxu0 0.0
        %903 = vmatprep.subr.mxu0 0.0
        %904 = vmatpush1.msra.mxu0 0.0
        %905 = vmatprep.subr.mxu0 0.0
        %906 = vmatpush1.msra.mxu0 0.0
        %907 = vmatprep.subr.mxu0 0.0
        %908 = vmatpush1.msra.mxu0 0.0
        %909 = vmatprep.subr.mxu0 0.0
        %910 = vmatpush1.msra.mxu0 0.0
        %911 = vmatprep.subr.mxu0 0.0
        %912 = vmatpush1.msra.mxu0 0.0
        %913 = vmatprep.subr.mxu0 0.0
        %914 = vmatpush1.msra.mxu0 0.0
        %915 = vmatprep.subr.mxu0 0.0
        %916 = vmatpush1.msra.mxu0 0.0
        %917 = vmatprep.subr.mxu0 0.0
        %918 = vmatpush1.msra.mxu0 0.0
        %919 = vmatprep.subr.mxu0 0.0
        %920 = vmatpush1.msra.mxu0 0.0
        %921 = vmatprep.subr.mxu0 0.0
        %922 = vmatpush1.msra.mxu0 0.0
        %923 = vmatprep.subr.mxu0 0.0
        %924 = vmatpush1.msra.mxu0 0.0
        %925 = vmatprep.subr.mxu0 0.0
        %926 = vmatpush1.msra.mxu0 0.0
        %927 = vmatprep.subr.mxu0 0.0
        %928 = vmatpush1.msra.mxu0 0.0
        %929 = vmatprep.subr.mxu0 0.0
        %930 = vmatpush1.msra.mxu0 0.0
        %931 = vmatprep.subr.mxu0 0.0
        %932 = vmatpush1.msra.mxu0 0.0
        %933 = vmatprep.subr.mxu0 0.0
        %934 = vmatpush1.msra.mxu0 0.0
        %935 = vmatprep.subr.mxu0 0.0
        %936 = vmatpush1.msra.mxu0 0.0
        %937 = vmatprep.subr.mxu0 0.0
        %938 = vmatpush1.msra.mxu0 0.0
        %939 = vmatprep.subr.mxu0 0.0
        %940 = vmatpush1.msra.mxu0 0.0
        %941 = vmatprep.subr.mxu0 0.0
        %942 = vmatpush1.msra.mxu0 0.0
        %943 = vmatprep.subr.mxu0 0.0
        %944 = vmatpush1.msra.mxu0 0.0
        %945 = vmatprep.subr.mxu0 0.0
        %946 = vmatpush1.msra.mxu0 0.0
        %947 = vmatprep.subr.mxu0 0.0
        %948 = vmatpush1.msra.mxu0 0.0
        %949 = vmatprep.subr.mxu0 0.0
        %950 = vmatpush1.msra.mxu0 0.0
        %951 = vmatprep.subr.mxu0 0.0
        %952 = vmatpush1.msra.mxu0 0.0
        %953 = vmatprep.subr.mxu0 0.0
        %954 = vmatpush1.msra.mxu0 0.0
        %955 = vmatprep.subr.mxu0 0.0
        %956 = vmatpush1.msra.mxu0 0.0
        %957 = vmatprep.mubr.f32.mxu0 0.0
        %v958 = vand.u32 %v337, 4294901760
        %959 = vmatmul.mubr.f32.gmra.mrb[0].mxu0 %v958
        %v960 = vpop.f32.mrb[0].mxu0
        %v961 = vadd.f32 %v864, %v960
        %v962 = vpop.f32.mrb[0].mxu0
        %v963 = vadd.f32 %v866, %v962
        %964 = vmatprep.mubr.f32.mxu0 0.0
        %v965 = vand.u32 %v340, 4294901760
        %966 = vmatmul.mubr.f32.gmra.mrb[0].mxu0 %v965
        %v967 = vpop.f32.mrb[0].mxu0
        %v968 = vadd.f32 %v871, %v967
        %v969 = vpop.f32.mrb[0].mxu0
        %v970 = vadd.f32 %v873, %v969
        %971 = vmatprep.mubr.f32.mxu0 0.0
        %v972 = vand.u32 %v343, 4294901760
        %973 = vmatmul.mubr.f32.gmra.mrb[0].mxu0 %v972
        %v974 = vpop.f32.mrb[0].mxu0
        %v975 = vadd.f32 %v878, %v974
        %v976 = vpop.f32.mrb[0].mxu0
        %v977 = vadd.f32 %v880, %v976
        %978 = vmatprep.mubr.f32.mxu0 0.0
        %v979 = vand.u32 %v346, 4294901760
        %980 = vmatmul.mubr.f32.gmra.mrb[0].mxu0 %v979
        %v981 = vpop.f32.mrb[0].mxu0
        %v982 = vadd.f32 %v885, %v981
        %v983 = vpop.f32.mrb[0].mxu0
        %v984 = vadd.f32 %v887, %v983
        %985 = vdwg.mxu0
        %v986 = vand.u32 %v302, 4294901760
        %987 = vmatprep.subr.mxu0 %v986
        %v988 = vand.u32 %v301, 4294901760
        %989 = vmatpush1.msra.mxu0 %v988
        %v990 = vand.u32 %v306, 4294901760
        %991 = vmatprep.subr.mxu0 %v990
        %v992 = vand.u32 %v305, 4294901760
        %993 = vmatpush1.msra.mxu0 %v992
        %994 = vmatprep.subr.mxu0 0.0
        %995 = vmatpush1.msra.mxu0 0.0
        %996 = vmatprep.subr.mxu0 0.0
        %997 = vmatpush1.msra.mxu0 0.0
        %998 = vmatprep.subr.mxu0 0.0
        %999 = vmatpush1.msra.mxu0 0.0
        %1000 = vmatprep.subr.mxu0 0.0
        %1001 = vmatpush1.msra.mxu0 0.0
        %1002 = vmatprep.subr.mxu0 0.0
        %1003 = vmatpush1.msra.mxu0 0.0
        %1004 = vmatprep.subr.mxu0 0.0
        %1005 = vmatpush1.msra.mxu0 0.0
        %1006 = vmatprep.subr.mxu0 0.0
        %1007 = vmatpush1.msra.mxu0 0.0
        %1008 = vmatprep.subr.mxu0 0.0
        %1009 = vmatpush1.msra.mxu0 0.0
        %1010 = vmatprep.subr.mxu0 0.0
        %1011 = vmatpush1.msra.mxu0 0.0
        %1012 = vmatprep.subr.mxu0 0.0
        %1013 = vmatpush1.msra.mxu0 0.0
        %1014 = vmatprep.subr.mxu0 0.0
        %1015 = vmatpush1.msra.mxu0 0.0
        %1016 = vmatprep.subr.mxu0 0.0
        %1017 = vmatpush1.msra.mxu0 0.0
        %1018 = vmatprep.subr.mxu0 0.0
        %1019 = vmatpush1.msra.mxu0 0.0
        %1020 = vmatprep.subr.mxu0 0.0
        %1021 = vmatpush1.msra.mxu0 0.0
        %1022 = vmatprep.subr.mxu0 0.0
        %1023 = vmatpush1.msra.mxu0 0.0
        %1024 = vmatprep.subr.mxu0 0.0
        %1025 = vmatpush1.msra.mxu0 0.0
        %1026 = vmatprep.subr.mxu0 0.0
        %1027 = vmatpush1.msra.mxu0 0.0
        %1028 = vmatprep.subr.mxu0 0.0
        %1029 = vmatpush1.msra.mxu0 0.0
        %1030 = vmatprep.subr.mxu0 0.0
        %1031 = vmatpush1.msra.mxu0 0.0
        %1032 = vmatprep.subr.mxu0 0.0
        %1033 = vmatpush1.msra.mxu0 0.0
        %1034 = vmatprep.subr.mxu0 0.0
        %1035 = vmatpush1.msra.mxu0 0.0
        %1036 = vmatprep.subr.mxu0 0.0
        %1037 = vmatpush1.msra.mxu0 0.0
        %1038 = vmatprep.subr.mxu0 0.0
        %1039 = vmatpush1.msra.mxu0 0.0
        %1040 = vmatprep.subr.mxu0 0.0
        %1041 = vmatpush1.msra.mxu0 0.0
        %1042 = vmatprep.subr.mxu0 0.0
        %1043 = vmatpush1.msra.mxu0 0.0
        %1044 = vmatprep.subr.mxu0 0.0
        %1045 = vmatpush1.msra.mxu0 0.0
        %1046 = vmatprep.subr.mxu0 0.0
        %1047 = vmatpush1.msra.mxu0 0.0
        %1048 = vmatprep.subr.mxu0 0.0
        %1049 = vmatpush1.msra.mxu0 0.0
        %1050 = vmatprep.subr.mxu0 0.0
        %1051 = vmatpush1.msra.mxu0 0.0
        %1052 = vmatprep.subr.mxu0 0.0
        %1053 = vmatpush1.msra.mxu0 0.0
        %1054 = vmatprep.mubr.f32.mxu0 0.0
        %v1055 = vand.u32 %v337, 4294901760
        %v1056 = vsub.f32 %v337, %v1055
        %v1057 = vand.u32 %v1056, 4294901760
        %v1058 = vsub.f32 %v1056, %v1057
        %v1059 = vand.u32 %v1058, 4294901760
        %1060 = vmatmul.mubr.f32.gmra.mrb[0].mxu0 %v1059
        %v1061 = vpop.f32.mrb[0].mxu0
        %v1062 = vadd.f32 %v318, %v1061
        %v1063 = vpop.f32.mrb[0].mxu0
        %v1064 = vadd.f32 %v318, %v1063
        %1065 = vmatprep.mubr.f32.mxu0 0.0
        %v1066 = vand.u32 %v340, 4294901760
        %v1067 = vsub.f32 %v340, %v1066
        %v1068 = vand.u32 %v1067, 4294901760
        %v1069 = vsub.f32 %v1067, %v1068
        %v1070 = vand.u32 %v1069, 4294901760
        %1071 = vmatmul.mubr.f32.gmra.mrb[0].mxu0 %v1070
        %v1072 = vpop.f32.mrb[0].mxu0
        %v1073 = vadd.f32 %v323, %v1072
        %v1074 = vpop.f32.mrb[0].mxu0
        %v1075 = vadd.f32 %v323, %v1074
        %1076 = vmatprep.mubr.f32.mxu0 0.0
        %v1077 = vand.u32 %v343, 4294901760
        %v1078 = vsub.f32 %v343, %v1077
        %v1079 = vand.u32 %v1078, 4294901760
        %v1080 = vsub.f32 %v1078, %v1079
        %v1081 = vand.u32 %v1080, 4294901760
        %1082 = vmatmul.mubr.f32.gmra.mrb[0].mxu0 %v1081
        %v1083 = vpop.f32.mrb[0].mxu0
        %v1084 = vadd.f32 %v328, %v1083
        %v1085 = vpop.f32.mrb[0].mxu0
        %v1086 = vadd.f32 %v328, %v1085
        %1087 = vmatprep.mubr.f32.mxu0 0.0
        %v1088 = vand.u32 %v346, 4294901760
        %v1089 = vsub.f32 %v346, %v1088
        %v1090 = vand.u32 %v1089, 4294901760
        %v1091 = vsub.f32 %v1089, %v1090
        %v1092 = vand.u32 %v1091, 4294901760
        %1093 = vmatmul.mubr.f32.gmra.mrb[0].mxu0 %v1092
        %v1094 = vpop.f32.mrb[0].mxu0
        %v1095 = vadd.f32 %v333, %v1094
        %v1096 = vpop.f32.mrb[0].mxu0
        %v1097 = vadd.f32 %v333, %v1096
        %1098 = vdwg.mxu0
        %v1099 = vand.u32 %v302, 4294901760
        %v1100 = vsub.f32 %v302, %v1099
        %v1101 = vand.u32 %v1100, 4294901760
        %v1102 = vsub.f32 %v1100, %v1101
        %v1103 = vand.u32 %v1102, 4294901760
        %1104 = vmatprep.subr.mxu0 %v1103
        %v1105 = vand.u32 %v301, 4294901760
        %v1106 = vsub.f32 %v301, %v1105
        %v1107 = vand.u32 %v1106, 4294901760
        %v1108 = vsub.f32 %v1106, %v1107
        %v1109 = vand.u32 %v1108, 4294901760
        %1110 = vmatpush1.msra.mxu0 %v1109
        %v1111 = vand.u32 %v306, 4294901760
        %v1112 = vsub.f32 %v306, %v1111
        %v1113 = vand.u32 %v1112, 4294901760
        %v1114 = vsub.f32 %v1112, %v1113
        %v1115 = vand.u32 %v1114, 4294901760
        %1116 = vmatprep.subr.mxu0 %v1115
        %v1117 = vand.u32 %v305, 4294901760
        %v1118 = vsub.f32 %v305, %v1117
        %v1119 = vand.u32 %v1118, 4294901760
        %v1120 = vsub.f32 %v1118, %v1119
        %v1121 = vand.u32 %v1120, 4294901760
        %1122 = vmatpush1.msra.mxu0 %v1121
        %1123 = vmatprep.subr.mxu0 0.0
        %1124 = vmatpush1.msra.mxu0 0.0
        %1125 = vmatprep.subr.mxu0 0.0
        %1126 = vmatpush1.msra.mxu0 0.0
        %1127 = vmatprep.subr.mxu0 0.0
        %1128 = vmatpush1.msra.mxu0 0.0
        %1129 = vmatprep.subr.mxu0 0.0
        %1130 = vmatpush1.msra.mxu0 0.0
        %1131 = vmatprep.subr.mxu0 0.0
        %1132 = vmatpush1.msra.mxu0 0.0
        %1133 = vmatprep.subr.mxu0 0.0
        %1134 = vmatpush1.msra.mxu0 0.0
        %1135 = vmatprep.subr.mxu0 0.0
        %1136 = vmatpush1.msra.mxu0 0.0
        %1137 = vmatprep.subr.mxu0 0.0
        %1138 = vmatpush1.msra.mxu0 0.0
        %1139 = vmatprep.subr.mxu0 0.0
        %1140 = vmatpush1.msra.mxu0 0.0
        %1141 = vmatprep.subr.mxu0 0.0
        %1142 = vmatpush1.msra.mxu0 0.0
        %1143 = vmatprep.subr.mxu0 0.0
        %1144 = vmatpush1.msra.mxu0 0.0
        %1145 = vmatprep.subr.mxu0 0.0
        %1146 = vmatpush1.msra.mxu0 0.0
        %1147 = vmatprep.subr.mxu0 0.0
        %1148 = vmatpush1.msra.mxu0 0.0
        %1149 = vmatprep.subr.mxu0 0.0
        %1150 = vmatpush1.msra.mxu0 0.0
        %1151 = vmatprep.subr.mxu0 0.0
        %1152 = vmatpush1.msra.mxu0 0.0
        %1153 = vmatprep.subr.mxu0 0.0
        %1154 = vmatpush1.msra.mxu0 0.0
        %1155 = vmatprep.subr.mxu0 0.0
        %1156 = vmatpush1.msra.mxu0 0.0
        %1157 = vmatprep.subr.mxu0 0.0
        %1158 = vmatpush1.msra.mxu0 0.0
        %1159 = vmatprep.subr.mxu0 0.0
        %1160 = vmatpush1.msra.mxu0 0.0
        %1161 = vmatprep.subr.mxu0 0.0
        %1162 = vmatpush1.msra.mxu0 0.0
        %1163 = vmatprep.subr.mxu0 0.0
        %1164 = vmatpush1.msra.mxu0 0.0
        %1165 = vmatprep.subr.mxu0 0.0
        %1166 = vmatpush1.msra.mxu0 0.0
        %1167 = vmatprep.subr.mxu0 0.0
        %1168 = vmatpush1.msra.mxu0 0.0
        %1169 = vmatprep.subr.mxu0 0.0
        %1170 = vmatpush1.msra.mxu0 0.0
        %1171 = vmatprep.subr.mxu0 0.0
        %1172 = vmatpush1.msra.mxu0 0.0
        %1173 = vmatprep.subr.mxu0 0.0
        %1174 = vmatpush1.msra.mxu0 0.0
        %1175 = vmatprep.subr.mxu0 0.0
        %1176 = vmatpush1.msra.mxu0 0.0
        %1177 = vmatprep.subr.mxu0 0.0
        %1178 = vmatpush1.msra.mxu0 0.0
        %1179 = vmatprep.subr.mxu0 0.0
        %1180 = vmatpush1.msra.mxu0 0.0
        %1181 = vmatprep.subr.mxu0 0.0
        %1182 = vmatpush1.msra.mxu0 0.0
        %1183 = vmatprep.mubr.f32.mxu0 0.0
        %v1184 = vand.u32 %v337, 4294901760
        %1185 = vmatmul.mubr.f32.gmra.mrb[0].mxu0 %v1184
        %v1186 = vpop.f32.mrb[0].mxu0
        %v1187 = vadd.f32 %v1062, %v1186
        %v1188 = vpop.f32.mrb[0].mxu0
        %v1189 = vadd.f32 %v1064, %v1188
        %1190 = vmatprep.mubr.f32.mxu0 0.0
        %v1191 = vand.u32 %v340, 4294901760
        %1192 = vmatmul.mubr.f32.gmra.mrb[0].mxu0 %v1191
        %v1193 = vpop.f32.mrb[0].mxu0
        %v1194 = vadd.f32 %v1073, %v1193
        %v1195 = vpop.f32.mrb[0].mxu0
        %v1196 = vadd.f32 %v1075, %v1195
        %1197 = vmatprep.mubr.f32.mxu0 0.0
        %v1198 = vand.u32 %v343, 4294901760
        %1199 = vmatmul.mubr.f32.gmra.mrb[0].mxu0 %v1198
        %v1200 = vpop.f32.mrb[0].mxu0
        %v1201 = vadd.f32 %v1084, %v1200
        %v1202 = vpop.f32.mrb[0].mxu0
        %v1203 = vadd.f32 %v1086, %v1202
        %1204 = vmatprep.mubr.f32.mxu0 0.0
        %v1205 = vand.u32 %v346, 4294901760
        %1206 = vmatmul.mubr.f32.gmra.mrb[0].mxu0 %v1205
        %v1207 = vpop.f32.mrb[0].mxu0
        %v1208 = vadd.f32 %v1095, %v1207
        %v1209 = vpop.f32.mrb[0].mxu0
        %v1210 = vadd.f32 %v1097, %v1209
        %1211 = vdwg.mxu0
        %v1212 = vand.u32 %v302, 4294901760
        %v1213 = vsub.f32 %v302, %v1212
        %1214 = vmatprep.subr.mxu0 %v1213
        %v1215 = vand.u32 %v301, 4294901760
        %v1216 = vsub.f32 %v301, %v1215
        %1217 = vmatpush1.msra.mxu0 %v1216
        %v1218 = vand.u32 %v306, 4294901760
        %v1219 = vsub.f32 %v306, %v1218
        %1220 = vmatprep.subr.mxu0 %v1219
        %v1221 = vand.u32 %v305, 4294901760
        %v1222 = vsub.f32 %v305, %v1221
        %1223 = vmatpush1.msra.mxu0 %v1222
        %1224 = vmatprep.subr.mxu0 0.0
        %1225 = vmatpush1.msra.mxu0 0.0
        %1226 = vmatprep.subr.mxu0 0.0
        %1227 = vmatpush1.msra.mxu0 0.0
        %1228 = vmatprep.subr.mxu0 0.0
        %1229 = vmatpush1.msra.mxu0 0.0
        %1230 = vmatprep.subr.mxu0 0.0
        %1231 = vmatpush1.msra.mxu0 0.0
        %1232 = vmatprep.subr.mxu0 0.0
        %1233 = vmatpush1.msra.mxu0 0.0
        %1234 = vmatprep.subr.mxu0 0.0
        %1235 = vmatpush1.msra.mxu0 0.0
        %1236 = vmatprep.subr.mxu0 0.0
        %1237 = vmatpush1.msra.mxu0 0.0
        %1238 = vmatprep.subr.mxu0 0.0
        %1239 = vmatpush1.msra.mxu0 0.0
        %1240 = vmatprep.subr.mxu0 0.0
        %1241 = vmatpush1.msra.mxu0 0.0
        %1242 = vmatprep.subr.mxu0 0.0
        %1243 = vmatpush1.msra.mxu0 0.0
        %1244 = vmatprep.subr.mxu0 0.0
        %1245 = vmatpush1.msra.mxu0 0.0
        %1246 = vmatprep.subr.mxu0 0.0
        %1247 = vmatpush1.msra.mxu0 0.0
        %1248 = vmatprep.subr.mxu0 0.0
        %1249 = vmatpush1.msra.mxu0 0.0
        %1250 = vmatprep.subr.mxu0 0.0
        %1251 = vmatpush1.msra.mxu0 0.0
        %1252 = vmatprep.subr.mxu0 0.0
        %1253 = vmatpush1.msra.mxu0 0.0
        %1254 = vmatprep.subr.mxu0 0.0
        %1255 = vmatpush1.msra.mxu0 0.0
        %1256 = vmatprep.subr.mxu0 0.0
        %1257 = vmatpush1.msra.mxu0 0.0
        %1258 = vmatprep.subr.mxu0 0.0
        %1259 = vmatpush1.msra.mxu0 0.0
        %1260 = vmatprep.subr.mxu0 0.0
        %1261 = vmatpush1.msra.mxu0 0.0
        %1262 = vmatprep.subr.mxu0 0.0
        %1263 = vmatpush1.msra.mxu0 0.0
        %1264 = vmatprep.subr.mxu0 0.0
        %1265 = vmatpush1.msra.mxu0 0.0
        %1266 = vmatprep.subr.mxu0 0.0
        %1267 = vmatpush1.msra.mxu0 0.0
        %1268 = vmatprep.subr.mxu0 0.0
        %1269 = vmatpush1.msra.mxu0 0.0
        %1270 = vmatprep.subr.mxu0 0.0
        %1271 = vmatpush1.msra.mxu0 0.0
        %1272 = vmatprep.subr.mxu0 0.0
        %1273 = vmatpush1.msra.mxu0 0.0
        %1274 = vmatprep.subr.mxu0 0.0
        %1275 = vmatpush1.msra.mxu0 0.0
        %1276 = vmatprep.subr.mxu0 0.0
        %1277 = vmatpush1.msra.mxu0 0.0
        %1278 = vmatprep.subr.mxu0 0.0
        %1279 = vmatpush1.msra.mxu0 0.0
        %1280 = vmatprep.subr.mxu0 0.0
        %1281 = vmatpush1.msra.mxu0 0.0
        %1282 = vmatprep.subr.mxu0 0.0
        %1283 = vmatpush1.msra.mxu0 0.0
        %1284 = vmatprep.mubr.f32.mxu0 0.0
        %v1285 = vand.u32 %v337, 4294901760
        %v1286 = vsub.f32 %v337, %v1285
        %1287 = vmatmul.mubr.f32.gmra.mrb[0].mxu0 %v1286
        %v1288 = vpop.f32.mrb[0].mxu0
        %v1289 = vadd.f32 %v1187, %v1288
        %v1290 = vpop.f32.mrb[0].mxu0
        %v1291 = vadd.f32 %v1189, %v1290
        %1292 = vmatprep.mubr.f32.mxu0 0.0
        %v1293 = vand.u32 %v340, 4294901760
        %v1294 = vsub.f32 %v340, %v1293
        %1295 = vmatmul.mubr.f32.gmra.mrb[0].mxu0 %v1294
        %v1296 = vpop.f32.mrb[0].mxu0
        %v1297 = vadd.f32 %v1194, %v1296
        %v1298 = vpop.f32.mrb[0].mxu0
        %v1299 = vadd.f32 %v1196, %v1298
        %1300 = vmatprep.mubr.f32.mxu0 0.0
        %v1301 = vand.u32 %v343, 4294901760
        %v1302 = vsub.f32 %v343, %v1301
        %1303 = vmatmul.mubr.f32.gmra.mrb[0].mxu0 %v1302
        %v1304 = vpop.f32.mrb[0].mxu0
        %v1305 = vadd.f32 %v1201, %v1304
        %v1306 = vpop.f32.mrb[0].mxu0
        %v1307 = vadd.f32 %v1203, %v1306
        %1308 = vmatprep.mubr.f32.mxu0 0.0
        %v1309 = vand.u32 %v346, 4294901760
        %v1310 = vsub.f32 %v346, %v1309
        %1311 = vmatmul.mubr.f32.gmra.mrb[0].mxu0 %v1310
        %v1312 = vpop.f32.mrb[0].mxu0
        %v1313 = vadd.f32 %v1208, %v1312
        %v1314 = vpop.f32.mrb[0].mxu0
        %v1315 = vadd.f32 %v1210, %v1314
        %1316 = vdwg.mxu0
        %v1317 = vand.u32 %v302, 4294901760
        %1318 = vmatprep.subr.mxu0 %v1317
        %v1319 = vand.u32 %v301, 4294901760
        %1320 = vmatpush1.msra.mxu0 %v1319
        %v1321 = vand.u32 %v306, 4294901760
        %1322 = vmatprep.subr.mxu0 %v1321
        %v1323 = vand.u32 %v305, 4294901760
        %1324 = vmatpush1.msra.mxu0 %v1323
        %1325 = vmatprep.subr.mxu0 0.0
        %1326 = vmatpush1.msra.mxu0 0.0
        %1327 = vmatprep.subr.mxu0 0.0
        %1328 = vmatpush1.msra.mxu0 0.0
        %1329 = vmatprep.subr.mxu0 0.0
        %1330 = vmatpush1.msra.mxu0 0.0
        %1331 = vmatprep.subr.mxu0 0.0
        %1332 = vmatpush1.msra.mxu0 0.0
        %1333 = vmatprep.subr.mxu0 0.0
        %1334 = vmatpush1.msra.mxu0 0.0
        %1335 = vmatprep.subr.mxu0 0.0
        %1336 = vmatpush1.msra.mxu0 0.0
        %1337 = vmatprep.subr.mxu0 0.0
        %1338 = vmatpush1.msra.mxu0 0.0
        %1339 = vmatprep.subr.mxu0 0.0
        %1340 = vmatpush1.msra.mxu0 0.0
        %1341 = vmatprep.subr.mxu0 0.0
        %1342 = vmatpush1.msra.mxu0 0.0
        %1343 = vmatprep.subr.mxu0 0.0
        %1344 = vmatpush1.msra.mxu0 0.0
        %1345 = vmatprep.subr.mxu0 0.0
        %1346 = vmatpush1.msra.mxu0 0.0
        %1347 = vmatprep.subr.mxu0 0.0
        %1348 = vmatpush1.msra.mxu0 0.0
        %1349 = vmatprep.subr.mxu0 0.0
        %1350 = vmatpush1.msra.mxu0 0.0
        %1351 = vmatprep.subr.mxu0 0.0
        %1352 = vmatpush1.msra.mxu0 0.0
        %1353 = vmatprep.subr.mxu0 0.0
        %1354 = vmatpush1.msra.mxu0 0.0
        %1355 = vmatprep.subr.mxu0 0.0
        %1356 = vmatpush1.msra.mxu0 0.0
        %1357 = vmatprep.subr.mxu0 0.0
        %1358 = vmatpush1.msra.mxu0 0.0
        %1359 = vmatprep.subr.mxu0 0.0
        %1360 = vmatpush1.msra.mxu0 0.0
        %1361 = vmatprep.subr.mxu0 0.0
        %1362 = vmatpush1.msra.mxu0 0.0
        %1363 = vmatprep.subr.mxu0 0.0
        %1364 = vmatpush1.msra.mxu0 0.0
        %1365 = vmatprep.subr.mxu0 0.0
        %1366 = vmatpush1.msra.mxu0 0.0
        %1367 = vmatprep.subr.mxu0 0.0
        %1368 = vmatpush1.msra.mxu0 0.0
        %1369 = vmatprep.subr.mxu0 0.0
        %1370 = vmatpush1.msra.mxu0 0.0
        %1371 = vmatprep.subr.mxu0 0.0
        %1372 = vmatpush1.msra.mxu0 0.0
        %1373 = vmatprep.subr.mxu0 0.0
        %1374 = vmatpush1.msra.mxu0 0.0
        %1375 = vmatprep.subr.mxu0 0.0
        %1376 = vmatpush1.msra.mxu0 0.0
        %1377 = vmatprep.subr.mxu0 0.0
        %1378 = vmatpush1.msra.mxu0 0.0
        %1379 = vmatprep.subr.mxu0 0.0
        %1380 = vmatpush1.msra.mxu0 0.0
        %1381 = vmatprep.subr.mxu0 0.0
        %1382 = vmatpush1.msra.mxu0 0.0
        %1383 = vmatprep.subr.mxu0 0.0
        %1384 = vmatpush1.msra.mxu0 0.0
        %1385 = vmatprep.mubr.f32.mxu0 0.0
        %v1386 = vand.u32 %v337, 4294901760
        %v1387 = vsub.f32 %v337, %v1386
        %v1388 = vand.u32 %v1387, 4294901760
        %1389 = vmatmul.mubr.f32.gmra.mrb[0].mxu0 %v1388
        %v1390 = vpop.f32.mrb[0].mxu0
        %v1391 = vadd.f32 %v1289, %v1390
        %v1392 = vpop.f32.mrb[0].mxu0
        %v1393 = vadd.f32 %v1291, %v1392
        %1394 = vmatprep.mubr.f32.mxu0 0.0
        %v1395 = vand.u32 %v340, 4294901760
        %v1396 = vsub.f32 %v340, %v1395
        %v1397 = vand.u32 %v1396, 4294901760
        %1398 = vmatmul.mubr.f32.gmra.mrb[0].mxu0 %v1397
        %v1399 = vpop.f32.mrb[0].mxu0
        %v1400 = vadd.f32 %v1297, %v1399
        %v1401 = vpop.f32.mrb[0].mxu0
        %v1402 = vadd.f32 %v1299, %v1401
        %1403 = vmatprep.mubr.f32.mxu0 0.0
        %v1404 = vand.u32 %v343, 4294901760
        %v1405 = vsub.f32 %v343, %v1404
        %v1406 = vand.u32 %v1405, 4294901760
        %1407 = vmatmul.mubr.f32.gmra.mrb[0].mxu0 %v1406
        %v1408 = vpop.f32.mrb[0].mxu0
        %v1409 = vadd.f32 %v1305, %v1408
        %v1410 = vpop.f32.mrb[0].mxu0
        %v1411 = vadd.f32 %v1307, %v1410
        %1412 = vmatprep.mubr.f32.mxu0 0.0
        %v1413 = vand.u32 %v346, 4294901760
        %v1414 = vsub.f32 %v346, %v1413
        %v1415 = vand.u32 %v1414, 4294901760
        %1416 = vmatmul.mubr.f32.gmra.mrb[0].mxu0 %v1415
        %v1417 = vpop.f32.mrb[0].mxu0
        %v1418 = vadd.f32 %v1313, %v1417
        %v1419 = vpop.f32.mrb[0].mxu0
        %v1420 = vadd.f32 %v1315, %v1419
        %1421 = vdwg.mxu0
        %v1422 = vand.u32 %v302, 4294901760
        %v1423 = vsub.f32 %v302, %v1422
        %v1424 = vand.u32 %v1423, 4294901760
        %1425 = vmatprep.subr.mxu0 %v1424
        %v1426 = vand.u32 %v301, 4294901760
        %v1427 = vsub.f32 %v301, %v1426
        %v1428 = vand.u32 %v1427, 4294901760
        %1429 = vmatpush1.msra.mxu0 %v1428
        %v1430 = vand.u32 %v306, 4294901760
        %v1431 = vsub.f32 %v306, %v1430
        %v1432 = vand.u32 %v1431, 4294901760
        %1433 = vmatprep.subr.mxu0 %v1432
        %v1434 = vand.u32 %v305, 4294901760
        %v1435 = vsub.f32 %v305, %v1434
        %v1436 = vand.u32 %v1435, 4294901760
        %1437 = vmatpush1.msra.mxu0 %v1436
        %1438 = vmatprep.subr.mxu0 0.0
        %1439 = vmatpush1.msra.mxu0 0.0
        %1440 = vmatprep.subr.mxu0 0.0
        %1441 = vmatpush1.msra.mxu0 0.0
        %1442 = vmatprep.subr.mxu0 0.0
        %1443 = vmatpush1.msra.mxu0 0.0
        %1444 = vmatprep.subr.mxu0 0.0
        %1445 = vmatpush1.msra.mxu0 0.0
        %1446 = vmatprep.subr.mxu0 0.0
        %1447 = vmatpush1.msra.mxu0 0.0
        %1448 = vmatprep.subr.mxu0 0.0
        %1449 = vmatpush1.msra.mxu0 0.0
        %1450 = vmatprep.subr.mxu0 0.0
        %1451 = vmatpush1.msra.mxu0 0.0
        %1452 = vmatprep.subr.mxu0 0.0
        %1453 = vmatpush1.msra.mxu0 0.0
        %1454 = vmatprep.subr.mxu0 0.0
        %1455 = vmatpush1.msra.mxu0 0.0
        %1456 = vmatprep.subr.mxu0 0.0
        %1457 = vmatpush1.msra.mxu0 0.0
        %1458 = vmatprep.subr.mxu0 0.0
        %1459 = vmatpush1.msra.mxu0 0.0
        %1460 = vmatprep.subr.mxu0 0.0
        %1461 = vmatpush1.msra.mxu0 0.0
        %1462 = vmatprep.subr.mxu0 0.0
        %1463 = vmatpush1.msra.mxu0 0.0
        %1464 = vmatprep.subr.mxu0 0.0
        %1465 = vmatpush1.msra.mxu0 0.0
        %1466 = vmatprep.subr.mxu0 0.0
        %1467 = vmatpush1.msra.mxu0 0.0
        %1468 = vmatprep.subr.mxu0 0.0
        %1469 = vmatpush1.msra.mxu0 0.0
        %1470 = vmatprep.subr.mxu0 0.0
        %1471 = vmatpush1.msra.mxu0 0.0
        %1472 = vmatprep.subr.mxu0 0.0
        %1473 = vmatpush1.msra.mxu0 0.0
        %1474 = vmatprep.subr.mxu0 0.0
        %1475 = vmatpush1.msra.mxu0 0.0
        %1476 = vmatprep.subr.mxu0 0.0
        %1477 = vmatpush1.msra.mxu0 0.0
        %1478 = vmatprep.subr.mxu0 0.0
        %1479 = vmatpush1.msra.mxu0 0.0
        %1480 = vmatprep.subr.mxu0 0.0
        %1481 = vmatpush1.msra.mxu0 0.0
        %1482 = vmatprep.subr.mxu0 0.0
        %1483 = vmatpush1.msra.mxu0 0.0
        %1484 = vmatprep.subr.mxu0 0.0
        %1485 = vmatpush1.msra.mxu0 0.0
        %1486 = vmatprep.subr.mxu0 0.0
        %1487 = vmatpush1.msra.mxu0 0.0
        %1488 = vmatprep.subr.mxu0 0.0
        %1489 = vmatpush1.msra.mxu0 0.0
        %1490 = vmatprep.subr.mxu0 0.0
        %1491 = vmatpush1.msra.mxu0 0.0
        %1492 = vmatprep.subr.mxu0 0.0
        %1493 = vmatpush1.msra.mxu0 0.0
        %1494 = vmatprep.subr.mxu0 0.0
        %1495 = vmatpush1.msra.mxu0 0.0
        %1496 = vmatprep.subr.mxu0 0.0
        %1497 = vmatpush1.msra.mxu0 0.0
        %1498 = vmatprep.mubr.f32.mxu0 0.0
        %v1499 = vand.u32 %v337, 4294901760
        %1500 = vmatmul.mubr.f32.gmra.mrb[0].mxu0 %v1499
        %v1501 = vpop.f32.mrb[0].mxu0
        %v1502 = vadd.f32 %v1391, %v1501
        %v1503 = vpop.f32.mrb[0].mxu0
        %v1504 = vadd.f32 %v1393, %v1503
        %1505 = vmatprep.mubr.f32.mxu0 0.0
        %v1506 = vand.u32 %v340, 4294901760
        %1507 = vmatmul.mubr.f32.gmra.mrb[0].mxu0 %v1506
        %v1508 = vpop.f32.mrb[0].mxu0
        %v1509 = vadd.f32 %v1400, %v1508
        %v1510 = vpop.f32.mrb[0].mxu0
        %v1511 = vadd.f32 %v1402, %v1510
        %1512 = vmatprep.mubr.f32.mxu0 0.0
        %v1513 = vand.u32 %v343, 4294901760
        %1514 = vmatmul.mubr.f32.gmra.mrb[0].mxu0 %v1513
        %v1515 = vpop.f32.mrb[0].mxu0
        %v1516 = vadd.f32 %v1409, %v1515
        %v1517 = vpop.f32.mrb[0].mxu0
        %v1518 = vadd.f32 %v1411, %v1517
        %1519 = vmatprep.mubr.f32.mxu0 0.0
        %v1520 = vand.u32 %v346, 4294901760
        %1521 = vmatmul.mubr.f32.gmra.mrb[0].mxu0 %v1520
        %v1522 = vpop.f32.mrb[0].mxu0
        %v1523 = vadd.f32 %v1418, %v1522
        %v1524 = vpop.f32.mrb[0].mxu0
        %v1525 = vadd.f32 %v1420, %v1524
        %1526 = vdwg.mxu0
        %v1527 = vand.u32 %v302, 4294901760
        %1528 = vmatprep.subr.mxu0 %v1527
        %v1529 = vand.u32 %v301, 4294901760
        %1530 = vmatpush1.msra.mxu0 %v1529
        %v1531 = vand.u32 %v306, 4294901760
        %1532 = vmatprep.subr.mxu0 %v1531
        %v1533 = vand.u32 %v305, 4294901760
        %1534 = vmatpush1.msra.mxu0 %v1533
        %1535 = vmatprep.subr.mxu0 0.0
        %1536 = vmatpush1.msra.mxu0 0.0
        %1537 = vmatprep.subr.mxu0 0.0
        %1538 = vmatpush1.msra.mxu0 0.0
        %1539 = vmatprep.subr.mxu0 0.0
        %1540 = vmatpush1.msra.mxu0 0.0
        %1541 = vmatprep.subr.mxu0 0.0
        %1542 = vmatpush1.msra.mxu0 0.0
        %1543 = vmatprep.subr.mxu0 0.0
        %1544 = vmatpush1.msra.mxu0 0.0
        %1545 = vmatprep.subr.mxu0 0.0
        %1546 = vmatpush1.msra.mxu0 0.0
        %1547 = vmatprep.subr.mxu0 0.0
        %1548 = vmatpush1.msra.mxu0 0.0
        %1549 = vmatprep.subr.mxu0 0.0
        %1550 = vmatpush1.msra.mxu0 0.0
        %1551 = vmatprep.subr.mxu0 0.0
        %1552 = vmatpush1.msra.mxu0 0.0
        %1553 = vmatprep.subr.mxu0 0.0
        %1554 = vmatpush1.msra.mxu0 0.0
        %1555 = vmatprep.subr.mxu0 0.0
        %1556 = vmatpush1.msra.mxu0 0.0
        %1557 = vmatprep.subr.mxu0 0.0
        %1558 = vmatpush1.msra.mxu0 0.0
        %1559 = vmatprep.subr.mxu0 0.0
        %1560 = vmatpush1.msra.mxu0 0.0
        %1561 = vmatprep.subr.mxu0 0.0
        %1562 = vmatpush1.msra.mxu0 0.0
        %1563 = vmatprep.subr.mxu0 0.0
        %1564 = vmatpush1.msra.mxu0 0.0
        %1565 = vmatprep.subr.mxu0 0.0
        %1566 = vmatpush1.msra.mxu0 0.0
        %1567 = vmatprep.subr.mxu0 0.0
        %1568 = vmatpush1.msra.mxu0 0.0
        %1569 = vmatprep.subr.mxu0 0.0
        %1570 = vmatpush1.msra.mxu0 0.0
        %1571 = vmatprep.subr.mxu0 0.0
        %1572 = vmatpush1.msra.mxu0 0.0
        %1573 = vmatprep.subr.mxu0 0.0
        %1574 = vmatpush1.msra.mxu0 0.0
        %1575 = vmatprep.subr.mxu0 0.0
        %1576 = vmatpush1.msra.mxu0 0.0
        %1577 = vmatprep.subr.mxu0 0.0
        %1578 = vmatpush1.msra.mxu0 0.0
        %1579 = vmatprep.subr.mxu0 0.0
        %1580 = vmatpush1.msra.mxu0 0.0
        %1581 = vmatprep.subr.mxu0 0.0
        %1582 = vmatpush1.msra.mxu0 0.0
        %1583 = vmatprep.subr.mxu0 0.0
        %1584 = vmatpush1.msra.mxu0 0.0
        %1585 = vmatprep.subr.mxu0 0.0
        %1586 = vmatpush1.msra.mxu0 0.0
        %1587 = vmatprep.subr.mxu0 0.0
        %1588 = vmatpush1.msra.mxu0 0.0
        %1589 = vmatprep.subr.mxu0 0.0
        %1590 = vmatpush1.msra.mxu0 0.0
        %1591 = vmatprep.subr.mxu0 0.0
        %1592 = vmatpush1.msra.mxu0 0.0
        %1593 = vmatprep.subr.mxu0 0.0
        %1594 = vmatpush1.msra.mxu0 0.0
        %1595 = vmatprep.mubr.f32.mxu0 0.0
        %v1596 = vand.u32 %v337, 4294901760
        %1597 = vmatmul.mubr.f32.gmra.mrb[0].mxu0 %v1596
        %v1598 = vpop.f32.mrb[0].mxu0
        %v1599 = vadd.f32 %v1502, %v1598
        %v1600 = vpop.f32.mrb[0].mxu0
        %v1601 = vadd.f32 %v1504, %v1600
        %1602 = vmatprep.mubr.f32.mxu0 0.0
        %v1603 = vand.u32 %v340, 4294901760
        %1604 = vmatmul.mubr.f32.gmra.mrb[0].mxu0 %v1603
        %v1605 = vpop.f32.mrb[0].mxu0
        %v1606 = vadd.f32 %v1509, %v1605
        %v1607 = vpop.f32.mrb[0].mxu0
        %v1608 = vadd.f32 %v1511, %v1607
        %1609 = vmatprep.mubr.f32.mxu0 0.0
        %v1610 = vand.u32 %v343, 4294901760
        %1611 = vmatmul.mubr.f32.gmra.mrb[0].mxu0 %v1610
        %v1612 = vpop.f32.mrb[0].mxu0
        %v1613 = vadd.f32 %v1516, %v1612
        %v1614 = vpop.f32.mrb[0].mxu0
        %v1615 = vadd.f32 %v1518, %v1614
        %1616 = vmatprep.mubr.f32.mxu0 0.0
        %v1617 = vand.u32 %v346, 4294901760
        %1618 = vmatmul.mubr.f32.gmra.mrb[0].mxu0 %v1617
        %v1619 = vpop.f32.mrb[0].mxu0
        %v1620 = vadd.f32 %v1523, %v1619
        %v1621 = vpop.f32.mrb[0].mxu0
        %v1622 = vadd.f32 %v1525, %v1621
        %1623 = vdwg.mxu0
        %v1624 = vtanh.pop %v961
        %v1625 = vtanh.pop %v963
        %v1626 = vtanh.pop %v1599
        %v1627 = vtanh.pop %v1601
        %v1628 = vtanh.pop %v968
        %v1629 = vtanh.pop %v970
        %v1630 = vtanh.pop %v1606
        %v1631 = vtanh.pop %v1608
        %v1632 = vtanh.pop %v975
        %v1633 = vtanh.pop %v977
        %v1634 = vtanh.pop %v1613
        %v1635 = vtanh.pop %v1615
        %v1636 = vtanh.pop %v982
        %v1637 = vtanh.pop %v984
        %v1638 = vtanh.pop %v1620
        %v1639 = vtanh.pop %v1622
        %v1640 = vld [vmem:[%s3] sm:$0xff]
        %v1641 = vld [vmem:[%s3 + $0x8] sm:$0xff]
        %v1642 = vld [vmem:[%s3 + $0x10] sm:$0xff]
        %v1643 = vld [vmem:[%s3 + $0x18] sm:$0xff]
        %v1644 = vld [vmem:[%s4] sm:$0xff]
        %v1645 = vld [vmem:[%s4 + $0x8] sm:$0xff]
        %v1646 = vld [vmem:[%s4 + $0x10] sm:$0xff]
        %v1647 = vld [vmem:[%s4 + $0x18] sm:$0xff]
        %1649 = vset.pattern.permute.xlu0 0
        %1650 = vperm.xlu0 %1649, %v1644
        %v1651 = vpop.permute.xlu0 %1650
        %1654 = vset.pattern.permute.xlu0 0
        %1655 = vperm.xlu0 %1654, %v1645
        %v1656 = vpop.permute.xlu0 %1655
        %1659 = vset.pattern.permute.xlu0 0
        %1660 = vperm.xlu0 %1659, %v1646
        %v1661 = vpop.permute.xlu0 %1660
        %1664 = vset.pattern.permute.xlu0 0
        %1665 = vperm.xlu0 %1664, %v1647
        %v1666 = vpop.permute.xlu0 %1665
        %vm1668 = vcmask 261120
        %v1670 = vsel %vm1668, %v1640, 0
        %v1673 = vsel %vm1668, %v1641, 0
        %v1676 = vsel %vm1668, %v1642, 0
        %v1679 = vsel %vm1668, %v1643, 0
        %v1681 = vand.u32 %v1625, 4294901760
        %1682 = vmatprep.subr.mxu0 %v1681
        %v1683 = vand.u32 %v1624, 4294901760
        %1684 = vmatpush1.msra.mxu0 %v1683
        %v1685 = vand.u32 %v1629, 4294901760
        %1686 = vmatprep.subr.mxu0 %v1685
        %v1687 = vand.u32 %v1628, 4294901760
        %1688 = vmatpush1.msra.mxu0 %v1687
        %v1689 = vand.u32 %v1633, 4294901760
        %1690 = vmatprep.subr.mxu0 %v1689
        %v1691 = vand.u32 %v1632, 4294901760
        %1692 = vmatpush1.msra.mxu0 %v1691
        %v1693 = vand.u32 %v1637, 4294901760
        %1694 = vmatprep.subr.mxu0 %v1693
        %v1695 = vand.u32 %v1636, 4294901760
        %1696 = vmatpush1.msra.mxu0 %v1695
        %1697 = vmatprep.subr.mxu0 0.0
        %1698 = vmatpush1.msra.mxu0 0.0
        %1699 = vmatprep.subr.mxu0 0.0
        %1700 = vmatpush1.msra.mxu0 0.0
        %1701 = vmatprep.subr.mxu0 0.0
        %1702 = vmatpush1.msra.mxu0 0.0
        %1703 = vmatprep.subr.mxu0 0.0
        %1704 = vmatpush1.msra.mxu0 0.0
        %1705 = vmatprep.subr.mxu0 0.0
        %1706 = vmatpush1.msra.mxu0 0.0
        %1707 = vmatprep.subr.mxu0 0.0
        %1708 = vmatpush1.msra.mxu0 0.0
        %1709 = vmatprep.subr.mxu0 0.0
        %1710 = vmatpush1.msra.mxu0 0.0
        %1711 = vmatprep.subr.mxu0 0.0
        %1712 = vmatpush1.msra.mxu0 0.0
        %1713 = vmatprep.subr.mxu0 0.0
        %1714 = vmatpush1.msra.mxu0 0.0
        %1715 = vmatprep.subr.mxu0 0.0
        %1716 = vmatpush1.msra.mxu0 0.0
        %1717 = vmatprep.subr.mxu0 0.0
        %1718 = vmatpush1.msra.mxu0 0.0
        %1719 = vmatprep.subr.mxu0 0.0
        %1720 = vmatpush1.msra.mxu0 0.0
        %1721 = vmatprep.subr.mxu0 0.0
        %1722 = vmatpush1.msra.mxu0 0.0
        %1723 = vmatprep.subr.mxu0 0.0
        %1724 = vmatpush1.msra.mxu0 0.0
        %1725 = vmatprep.subr.mxu0 0.0
        %1726 = vmatpush1.msra.mxu0 0.0
        %1727 = vmatprep.subr.mxu0 0.0
        %1728 = vmatpush1.msra.mxu0 0.0
        %1729 = vmatprep.subr.mxu0 0.0
        %1730 = vmatpush1.msra.mxu0 0.0
        %1731 = vmatprep.subr.mxu0 0.0
        %1732 = vmatpush1.msra.mxu0 0.0
        %1733 = vmatprep.subr.mxu0 0.0
        %1734 = vmatpush1.msra.mxu0 0.0
        %1735 = vmatprep.subr.mxu0 0.0
        %1736 = vmatpush1.msra.mxu0 0.0
        %1737 = vmatprep.subr.mxu0 0.0
        %1738 = vmatpush1.msra.mxu0 0.0
        %1739 = vmatprep.subr.mxu0 0.0
        %1740 = vmatpush1.msra.mxu0 0.0
        %1741 = vmatprep.subr.mxu0 0.0
        %1742 = vmatpush1.msra.mxu0 0.0
        %1743 = vmatprep.subr.mxu0 0.0
        %1744 = vmatpush1.msra.mxu0 0.0
        %1745 = vmatprep.subr.mxu0 0.0
        %1746 = vmatpush1.msra.mxu0 0.0
        %1747 = vmatprep.subr.mxu0 0.0
        %1748 = vmatpush1.msra.mxu0 0.0
        %1749 = vmatprep.subr.mxu0 0.0
        %1750 = vmatpush1.msra.mxu0 0.0
        %1751 = vmatprep.subr.mxu0 0.0
        %1752 = vmatpush1.msra.mxu0 0.0
        %1753 = vmatprep.mubr.f32.mxu0 0.0
        %v1754 = vand.u32 %v1670, 4294901760
        %v1755 = vsub.f32 %v1670, %v1754
        %v1756 = vand.u32 %v1755, 4294901760
        %v1757 = vsub.f32 %v1755, %v1756
        %v1758 = vand.u32 %v1757, 4294901760
        %1759 = vmatmul.mubr.f32.gmra.mrb[0].mxu0 %v1758
        %v1760 = vpop.f32.mrb[0].mxu0
        %v1761 = vadd.f32 %v1651, %v1760
        %v1762 = vpop.f32.mrb[0].mxu0
        %v1763 = vadd.f32 %v1651, %v1762
        %1764 = vmatprep.mubr.f32.mxu0 0.0
        %v1765 = vand.u32 %v1673, 4294901760
        %v1766 = vsub.f32 %v1673, %v1765
        %v1767 = vand.u32 %v1766, 4294901760
        %v1768 = vsub.f32 %v1766, %v1767
        %v1769 = vand.u32 %v1768, 4294901760
        %1770 = vmatmul.mubr.f32.gmra.mrb[0].mxu0 %v1769
        %v1771 = vpop.f32.mrb[0].mxu0
        %v1772 = vadd.f32 %v1656, %v1771
        %v1773 = vpop.f32.mrb[0].mxu0
        %v1774 = vadd.f32 %v1656, %v1773
        %1775 = vmatprep.mubr.f32.mxu0 0.0
        %v1776 = vand.u32 %v1676, 4294901760
        %v1777 = vsub.f32 %v1676, %v1776
        %v1778 = vand.u32 %v1777, 4294901760
        %v1779 = vsub.f32 %v1777, %v1778
        %v1780 = vand.u32 %v1779, 4294901760
        %1781 = vmatmul.mubr.f32.gmra.mrb[0].mxu0 %v1780
        %v1782 = vpop.f32.mrb[0].mxu0
        %v1783 = vadd.f32 %v1661, %v1782
        %v1784 = vpop.f32.mrb[0].mxu0
        %v1785 = vadd.f32 %v1661, %v1784
        %1786 = vmatprep.mubr.f32.mxu0 0.0
        %v1787 = vand.u32 %v1679, 4294901760
        %v1788 = vsub.f32 %v1679, %v1787
        %v1789 = vand.u32 %v1788, 4294901760
        %v1790 = vsub.f32 %v1788, %v1789
        %v1791 = vand.u32 %v1790, 4294901760
        %1792 = vmatmul.mubr.f32.gmra.mrb[0].mxu0 %v1791
        %v1793 = vpop.f32.mrb[0].mxu0
        %v1794 = vadd.f32 %v1666, %v1793
        %v1795 = vpop.f32.mrb[0].mxu0
        %v1796 = vadd.f32 %v1666, %v1795
        %1797 = vdwg.mxu0
        %v1798 = vand.u32 %v1625, 4294901760
        %v1799 = vsub.f32 %v1625, %v1798
        %v1800 = vand.u32 %v1799, 4294901760
        %v1801 = vsub.f32 %v1799, %v1800
        %v1802 = vand.u32 %v1801, 4294901760
        %1803 = vmatprep.subr.mxu0 %v1802
        %v1804 = vand.u32 %v1624, 4294901760
        %v1805 = vsub.f32 %v1624, %v1804
        %v1806 = vand.u32 %v1805, 4294901760
        %v1807 = vsub.f32 %v1805, %v1806
        %v1808 = vand.u32 %v1807, 4294901760
        %1809 = vmatpush1.msra.mxu0 %v1808
        %v1810 = vand.u32 %v1629, 4294901760
        %v1811 = vsub.f32 %v1629, %v1810
        %v1812 = vand.u32 %v1811, 4294901760
        %v1813 = vsub.f32 %v1811, %v1812
        %v1814 = vand.u32 %v1813, 4294901760
        %1815 = vmatprep.subr.mxu0 %v1814
        %v1816 = vand.u32 %v1628, 4294901760
        %v1817 = vsub.f32 %v1628, %v1816
        %v1818 = vand.u32 %v1817, 4294901760
        %v1819 = vsub.f32 %v1817, %v1818
        %v1820 = vand.u32 %v1819, 4294901760
        %1821 = vmatpush1.msra.mxu0 %v1820
        %v1822 = vand.u32 %v1633, 4294901760
        %v1823 = vsub.f32 %v1633, %v1822
        %v1824 = vand.u32 %v1823, 4294901760
        %v1825 = vsub.f32 %v1823, %v1824
        %v1826 = vand.u32 %v1825, 4294901760
        %1827 = vmatprep.subr.mxu0 %v1826
        %v1828 = vand.u32 %v1632, 4294901760
        %v1829 = vsub.f32 %v1632, %v1828
        %v1830 = vand.u32 %v1829, 4294901760
        %v1831 = vsub.f32 %v1829, %v1830
        %v1832 = vand.u32 %v1831, 4294901760
        %1833 = vmatpush1.msra.mxu0 %v1832
        %v1834 = vand.u32 %v1637, 4294901760
        %v1835 = vsub.f32 %v1637, %v1834
        %v1836 = vand.u32 %v1835, 4294901760
        %v1837 = vsub.f32 %v1835, %v1836
        %v1838 = vand.u32 %v1837, 4294901760
        %1839 = vmatprep.subr.mxu0 %v1838
        %v1840 = vand.u32 %v1636, 4294901760
        %v1841 = vsub.f32 %v1636, %v1840
        %v1842 = vand.u32 %v1841, 4294901760
        %v1843 = vsub.f32 %v1841, %v1842
        %v1844 = vand.u32 %v1843, 4294901760
        %1845 = vmatpush1.msra.mxu0 %v1844
        %1846 = vmatprep.subr.mxu0 0.0
        %1847 = vmatpush1.msra.mxu0 0.0
        %1848 = vmatprep.subr.mxu0 0.0
        %1849 = vmatpush1.msra.mxu0 0.0
        %1850 = vmatprep.subr.mxu0 0.0
        %1851 = vmatpush1.msra.mxu0 0.0
        %1852 = vmatprep.subr.mxu0 0.0
        %1853 = vmatpush1.msra.mxu0 0.0
        %1854 = vmatprep.subr.mxu0 0.0
        %1855 = vmatpush1.msra.mxu0 0.0
        %1856 = vmatprep.subr.mxu0 0.0
        %1857 = vmatpush1.msra.mxu0 0.0
        %1858 = vmatprep.subr.mxu0 0.0
        %1859 = vmatpush1.msra.mxu0 0.0
        %1860 = vmatprep.subr.mxu0 0.0
        %1861 = vmatpush1.msra.mxu0 0.0
        %1862 = vmatprep.subr.mxu0 0.0
        %1863 = vmatpush1.msra.mxu0 0.0
        %1864 = vmatprep.subr.mxu0 0.0
        %1865 = vmatpush1.msra.mxu0 0.0
        %1866 = vmatprep.subr.mxu0 0.0
        %1867 = vmatpush1.msra.mxu0 0.0
        %1868 = vmatprep.subr.mxu0 0.0
        %1869 = vmatpush1.msra.mxu0 0.0
        %1870 = vmatprep.subr.mxu0 0.0
        %1871 = vmatpush1.msra.mxu0 0.0
        %1872 = vmatprep.subr.mxu0 0.0
        %1873 = vmatpush1.msra.mxu0 0.0
        %1874 = vmatprep.subr.mxu0 0.0
        %1875 = vmatpush1.msra.mxu0 0.0
        %1876 = vmatprep.subr.mxu0 0.0
        %1877 = vmatpush1.msra.mxu0 0.0
        %1878 = vmatprep.subr.mxu0 0.0
        %1879 = vmatpush1.msra.mxu0 0.0
        %1880 = vmatprep.subr.mxu0 0.0
        %1881 = vmatpush1.msra.mxu0 0.0
        %1882 = vmatprep.subr.mxu0 0.0
        %1883 = vmatpush1.msra.mxu0 0.0
        %1884 = vmatprep.subr.mxu0 0.0
        %1885 = vmatpush1.msra.mxu0 0.0
        %1886 = vmatprep.subr.mxu0 0.0
        %1887 = vmatpush1.msra.mxu0 0.0
        %1888 = vmatprep.subr.mxu0 0.0
        %1889 = vmatpush1.msra.mxu0 0.0
        %1890 = vmatprep.subr.mxu0 0.0
        %1891 = vmatpush1.msra.mxu0 0.0
        %1892 = vmatprep.subr.mxu0 0.0
        %1893 = vmatpush1.msra.mxu0 0.0
        %1894 = vmatprep.subr.mxu0 0.0
        %1895 = vmatpush1.msra.mxu0 0.0
        %1896 = vmatprep.subr.mxu0 0.0
        %1897 = vmatpush1.msra.mxu0 0.0
        %1898 = vmatprep.subr.mxu0 0.0
        %1899 = vmatpush1.msra.mxu0 0.0
        %1900 = vmatprep.subr.mxu0 0.0
        %1901 = vmatpush1.msra.mxu0 0.0
        %1902 = vmatprep.mubr.f32.mxu0 0.0
        %v1903 = vand.u32 %v1670, 4294901760
        %1904 = vmatmul.mubr.f32.gmra.mrb[0].mxu0 %v1903
        %v1905 = vpop.f32.mrb[0].mxu0
        %v1906 = vadd.f32 %v1761, %v1905
        %v1907 = vpop.f32.mrb[0].mxu0
        %v1908 = vadd.f32 %v1763, %v1907
        %1909 = vmatprep.mubr.f32.mxu0 0.0
        %v1910 = vand.u32 %v1673, 4294901760
        %1911 = vmatmul.mubr.f32.gmra.mrb[0].mxu0 %v1910
        %v1912 = vpop.f32.mrb[0].mxu0
        %v1913 = vadd.f32 %v1772, %v1912
        %v1914 = vpop.f32.mrb[0].mxu0
        %v1915 = vadd.f32 %v1774, %v1914
        %1916 = vmatprep.mubr.f32.mxu0 0.0
        %v1917 = vand.u32 %v1676, 4294901760
        %1918 = vmatmul.mubr.f32.gmra.mrb[0].mxu0 %v1917
        %v1919 = vpop.f32.mrb[0].mxu0
        %v1920 = vadd.f32 %v1783, %v1919
        %v1921 = vpop.f32.mrb[0].mxu0
        %v1922 = vadd.f32 %v1785, %v1921
        %1923 = vmatprep.mubr.f32.mxu0 0.0
        %v1924 = vand.u32 %v1679, 4294901760
        %1925 = vmatmul.mubr.f32.gmra.mrb[0].mxu0 %v1924
        %v1926 = vpop.f32.mrb[0].mxu0
        %v1927 = vadd.f32 %v1794, %v1926
        %v1928 = vpop.f32.mrb[0].mxu0
        %v1929 = vadd.f32 %v1796, %v1928
        %1930 = vdwg.mxu0
        %v1931 = vand.u32 %v1625, 4294901760
        %v1932 = vsub.f32 %v1625, %v1931
        %1933 = vmatprep.subr.mxu0 %v1932
        %v1934 = vand.u32 %v1624, 4294901760
        %v1935 = vsub.f32 %v1624, %v1934
        %1936 = vmatpush1.msra.mxu0 %v1935
        %v1937 = vand.u32 %v1629, 4294901760
        %v1938 = vsub.f32 %v1629, %v1937
        %1939 = vmatprep.subr.mxu0 %v1938
        %v1940 = vand.u32 %v1628, 4294901760
        %v1941 = vsub.f32 %v1628, %v1940
        %1942 = vmatpush1.msra.mxu0 %v1941
        %v1943 = vand.u32 %v1633, 4294901760
        %v1944 = vsub.f32 %v1633, %v1943
        %1945 = vmatprep.subr.mxu0 %v1944
        %v1946 = vand.u32 %v1632, 4294901760
        %v1947 = vsub.f32 %v1632, %v1946
        %1948 = vmatpush1.msra.mxu0 %v1947
        %v1949 = vand.u32 %v1637, 4294901760
        %v1950 = vsub.f32 %v1637, %v1949
        %1951 = vmatprep.subr.mxu0 %v1950
        %v1952 = vand.u32 %v1636, 4294901760
        %v1953 = vsub.f32 %v1636, %v1952
        %1954 = vmatpush1.msra.mxu0 %v1953
        %1955 = vmatprep.subr.mxu0 0.0
        %1956 = vmatpush1.msra.mxu0 0.0
        %1957 = vmatprep.subr.mxu0 0.0
        %1958 = vmatpush1.msra.mxu0 0.0
        %1959 = vmatprep.subr.mxu0 0.0
        %1960 = vmatpush1.msra.mxu0 0.0
        %1961 = vmatprep.subr.mxu0 0.0
        %1962 = vmatpush1.msra.mxu0 0.0
        %1963 = vmatprep.subr.mxu0 0.0
        %1964 = vmatpush1.msra.mxu0 0.0
        %1965 = vmatprep.subr.mxu0 0.0
        %1966 = vmatpush1.msra.mxu0 0.0
        %1967 = vmatprep.subr.mxu0 0.0
        %1968 = vmatpush1.msra.mxu0 0.0
        %1969 = vmatprep.subr.mxu0 0.0
        %1970 = vmatpush1.msra.mxu0 0.0
        %1971 = vmatprep.subr.mxu0 0.0
        %1972 = vmatpush1.msra.mxu0 0.0
        %1973 = vmatprep.subr.mxu0 0.0
        %1974 = vmatpush1.msra.mxu0 0.0
        %1975 = vmatprep.subr.mxu0 0.0
        %1976 = vmatpush1.msra.mxu0 0.0
        %1977 = vmatprep.subr.mxu0 0.0
        %1978 = vmatpush1.msra.mxu0 0.0
        %1979 = vmatprep.subr.mxu0 0.0
        %1980 = vmatpush1.msra.mxu0 0.0
        %1981 = vmatprep.subr.mxu0 0.0
        %1982 = vmatpush1.msra.mxu0 0.0
        %1983 = vmatprep.subr.mxu0 0.0
        %1984 = vmatpush1.msra.mxu0 0.0
        %1985 = vmatprep.subr.mxu0 0.0
        %1986 = vmatpush1.msra.mxu0 0.0
        %1987 = vmatprep.subr.mxu0 0.0
        %1988 = vmatpush1.msra.mxu0 0.0
        %1989 = vmatprep.subr.mxu0 0.0
        %1990 = vmatpush1.msra.mxu0 0.0
        %1991 = vmatprep.subr.mxu0 0.0
        %1992 = vmatpush1.msra.mxu0 0.0
        %1993 = vmatprep.subr.mxu0 0.0
        %1994 = vmatpush1.msra.mxu0 0.0
        %1995 = vmatprep.subr.mxu0 0.0
        %1996 = vmatpush1.msra.mxu0 0.0
        %1997 = vmatprep.subr.mxu0 0.0
        %1998 = vmatpush1.msra.mxu0 0.0
        %1999 = vmatprep.subr.mxu0 0.0
        %2000 = vmatpush1.msra.mxu0 0.0
        %2001 = vmatprep.subr.mxu0 0.0
        %2002 = vmatpush1.msra.mxu0 0.0
        %2003 = vmatprep.subr.mxu0 0.0
        %2004 = vmatpush1.msra.mxu0 0.0
        %2005 = vmatprep.subr.mxu0 0.0
        %2006 = vmatpush1.msra.mxu0 0.0
        %2007 = vmatprep.subr.mxu0 0.0
        %2008 = vmatpush1.msra.mxu0 0.0
        %2009 = vmatprep.subr.mxu0 0.0
        %2010 = vmatpush1.msra.mxu0 0.0
        %2011 = vmatprep.mubr.f32.mxu0 0.0
        %v2012 = vand.u32 %v1670, 4294901760
        %v2013 = vsub.f32 %v1670, %v2012
        %2014 = vmatmul.mubr.f32.gmra.mrb[0].mxu0 %v2013
        %v2015 = vpop.f32.mrb[0].mxu0
        %v2016 = vadd.f32 %v1906, %v2015
        %v2017 = vpop.f32.mrb[0].mxu0
        %v2018 = vadd.f32 %v1908, %v2017
        %2019 = vmatprep.mubr.f32.mxu0 0.0
        %v2020 = vand.u32 %v1673, 4294901760
        %v2021 = vsub.f32 %v1673, %v2020
        %2022 = vmatmul.mubr.f32.gmra.mrb[0].mxu0 %v2021
        %v2023 = vpop.f32.mrb[0].mxu0
        %v2024 = vadd.f32 %v1913, %v2023
        %v2025 = vpop.f32.mrb[0].mxu0
        %v2026 = vadd.f32 %v1915, %v2025
        %2027 = vmatprep.mubr.f32.mxu0 0.0
        %v2028 = vand.u32 %v1676, 4294901760
        %v2029 = vsub.f32 %v1676, %v2028
        %2030 = vmatmul.mubr.f32.gmra.mrb[0].mxu0 %v2029
        %v2031 = vpop.f32.mrb[0].mxu0
        %v2032 = vadd.f32 %v1920, %v2031
        %v2033 = vpop.f32.mrb[0].mxu0
        %v2034 = vadd.f32 %v1922, %v2033
        %2035 = vmatprep.mubr.f32.mxu0 0.0
        %v2036 = vand.u32 %v1679, 4294901760
        %v2037 = vsub.f32 %v1679, %v2036
        %2038 = vmatmul.mubr.f32.gmra.mrb[0].mxu0 %v2037
        %v2039 = vpop.f32.mrb[0].mxu0
        %v2040 = vadd.f32 %v1927, %v2039
        %v2041 = vpop.f32.mrb[0].mxu0
        %v2042 = vadd.f32 %v1929, %v2041
        %2043 = vdwg.mxu0
        %v2044 = vand.u32 %v1625, 4294901760
        %2045 = vmatprep.subr.mxu0 %v2044
        %v2046 = vand.u32 %v1624, 4294901760
        %2047 = vmatpush1.msra.mxu0 %v2046
        %v2048 = vand.u32 %v1629, 4294901760
        %2049 = vmatprep.subr.mxu0 %v2048
        %v2050 = vand.u32 %v1628, 4294901760
        %2051 = vmatpush1.msra.mxu0 %v2050
        %v2052 = vand.u32 %v1633, 4294901760
        %2053 = vmatprep.subr.mxu0 %v2052
        %v2054 = vand.u32 %v1632, 4294901760
        %2055 = vmatpush1.msra.mxu0 %v2054
        %v2056 = vand.u32 %v1637, 4294901760
        %2057 = vmatprep.subr.mxu0 %v2056
        %v2058 = vand.u32 %v1636, 4294901760
        %2059 = vmatpush1.msra.mxu0 %v2058
        %2060 = vmatprep.subr.mxu0 0.0
        %2061 = vmatpush1.msra.mxu0 0.0
        %2062 = vmatprep.subr.mxu0 0.0
        %2063 = vmatpush1.msra.mxu0 0.0
        %2064 = vmatprep.subr.mxu0 0.0
        %2065 = vmatpush1.msra.mxu0 0.0
        %2066 = vmatprep.subr.mxu0 0.0
        %2067 = vmatpush1.msra.mxu0 0.0
        %2068 = vmatprep.subr.mxu0 0.0
        %2069 = vmatpush1.msra.mxu0 0.0
        %2070 = vmatprep.subr.mxu0 0.0
        %2071 = vmatpush1.msra.mxu0 0.0
        %2072 = vmatprep.subr.mxu0 0.0
        %2073 = vmatpush1.msra.mxu0 0.0
        %2074 = vmatprep.subr.mxu0 0.0
        %2075 = vmatpush1.msra.mxu0 0.0
        %2076 = vmatprep.subr.mxu0 0.0
        %2077 = vmatpush1.msra.mxu0 0.0
        %2078 = vmatprep.subr.mxu0 0.0
        %2079 = vmatpush1.msra.mxu0 0.0
        %2080 = vmatprep.subr.mxu0 0.0
        %2081 = vmatpush1.msra.mxu0 0.0
        %2082 = vmatprep.subr.mxu0 0.0
        %2083 = vmatpush1.msra.mxu0 0.0
        %2084 = vmatprep.subr.mxu0 0.0
        %2085 = vmatpush1.msra.mxu0 0.0
        %2086 = vmatprep.subr.mxu0 0.0
        %2087 = vmatpush1.msra.mxu0 0.0
        %2088 = vmatprep.subr.mxu0 0.0
        %2089 = vmatpush1.msra.mxu0 0.0
        %2090 = vmatprep.subr.mxu0 0.0
        %2091 = vmatpush1.msra.mxu0 0.0
        %2092 = vmatprep.subr.mxu0 0.0
        %2093 = vmatpush1.msra.mxu0 0.0
        %2094 = vmatprep.subr.mxu0 0.0
        %2095 = vmatpush1.msra.mxu0 0.0
        %2096 = vmatprep.subr.mxu0 0.0
        %2097 = vmatpush1.msra.mxu0 0.0
        %2098 = vmatprep.subr.mxu0 0.0
        %2099 = vmatpush1.msra.mxu0 0.0
        %2100 = vmatprep.subr.mxu0 0.0
        %2101 = vmatpush1.msra.mxu0 0.0
        %2102 = vmatprep.subr.mxu0 0.0
        %2103 = vmatpush1.msra.mxu0 0.0
        %2104 = vmatprep.subr.mxu0 0.0
        %2105 = vmatpush1.msra.mxu0 0.0
        %2106 = vmatprep.subr.mxu0 0.0
        %2107 = vmatpush1.msra.mxu0 0.0
        %2108 = vmatprep.subr.mxu0 0.0
        %2109 = vmatpush1.msra.mxu0 0.0
        %2110 = vmatprep.subr.mxu0 0.0
        %2111 = vmatpush1.msra.mxu0 0.0
        %2112 = vmatprep.subr.mxu0 0.0
        %2113 = vmatpush1.msra.mxu0 0.0
        %2114 = vmatprep.subr.mxu0 0.0
        %2115 = vmatpush1.msra.mxu0 0.0
        %2116 = vmatprep.mubr.f32.mxu0 0.0
        %v2117 = vand.u32 %v1670, 4294901760
        %v2118 = vsub.f32 %v1670, %v2117
        %v2119 = vand.u32 %v2118, 4294901760
        %2120 = vmatmul.mubr.f32.gmra.mrb[0].mxu0 %v2119
        %v2121 = vpop.f32.mrb[0].mxu0
        %v2122 = vadd.f32 %v2016, %v2121
        %v2123 = vpop.f32.mrb[0].mxu0
        %v2124 = vadd.f32 %v2018, %v2123
        %2125 = vmatprep.mubr.f32.mxu0 0.0
        %v2126 = vand.u32 %v1673, 4294901760
        %v2127 = vsub.f32 %v1673, %v2126
        %v2128 = vand.u32 %v2127, 4294901760
        %2129 = vmatmul.mubr.f32.gmra.mrb[0].mxu0 %v2128
        %v2130 = vpop.f32.mrb[0].mxu0
        %v2131 = vadd.f32 %v2024, %v2130
        %v2132 = vpop.f32.mrb[0].mxu0
        %v2133 = vadd.f32 %v2026, %v2132
        %2134 = vmatprep.mubr.f32.mxu0 0.0
        %v2135 = vand.u32 %v1676, 4294901760
        %v2136 = vsub.f32 %v1676, %v2135
        %v2137 = vand.u32 %v2136, 4294901760
        %2138 = vmatmul.mubr.f32.gmra.mrb[0].mxu0 %v2137
        %v2139 = vpop.f32.mrb[0].mxu0
        %v2140 = vadd.f32 %v2032, %v2139
        %v2141 = vpop.f32.mrb[0].mxu0
        %v2142 = vadd.f32 %v2034, %v2141
        %2143 = vmatprep.mubr.f32.mxu0 0.0
        %v2144 = vand.u32 %v1679, 4294901760
        %v2145 = vsub.f32 %v1679, %v2144
        %v2146 = vand.u32 %v2145, 4294901760
        %2147 = vmatmul.mubr.f32.gmra.mrb[0].mxu0 %v2146
        %v2148 = vpop.f32.mrb[0].mxu0
        %v2149 = vadd.f32 %v2040, %v2148
        %v2150 = vpop.f32.mrb[0].mxu0
        %v2151 = vadd.f32 %v2042, %v2150
        %2152 = vdwg.mxu0
        %v2153 = vand.u32 %v1625, 4294901760
        %v2154 = vsub.f32 %v1625, %v2153
        %v2155 = vand.u32 %v2154, 4294901760
        %2156 = vmatprep.subr.mxu0 %v2155
        %v2157 = vand.u32 %v1624, 4294901760
        %v2158 = vsub.f32 %v1624, %v2157
        %v2159 = vand.u32 %v2158, 4294901760
        %2160 = vmatpush1.msra.mxu0 %v2159
        %v2161 = vand.u32 %v1629, 4294901760
        %v2162 = vsub.f32 %v1629, %v2161
        %v2163 = vand.u32 %v2162, 4294901760
        %2164 = vmatprep.subr.mxu0 %v2163
        %v2165 = vand.u32 %v1628, 4294901760
        %v2166 = vsub.f32 %v1628, %v2165
        %v2167 = vand.u32 %v2166, 4294901760
        %2168 = vmatpush1.msra.mxu0 %v2167
        %v2169 = vand.u32 %v1633, 4294901760
        %v2170 = vsub.f32 %v1633, %v2169
        %v2171 = vand.u32 %v2170, 4294901760
        %2172 = vmatprep.subr.mxu0 %v2171
        %v2173 = vand.u32 %v1632, 4294901760
        %v2174 = vsub.f32 %v1632, %v2173
        %v2175 = vand.u32 %v2174, 4294901760
        %2176 = vmatpush1.msra.mxu0 %v2175
        %v2177 = vand.u32 %v1637, 4294901760
        %v2178 = vsub.f32 %v1637, %v2177
        %v2179 = vand.u32 %v2178, 4294901760
        %2180 = vmatprep.subr.mxu0 %v2179
        %v2181 = vand.u32 %v1636, 4294901760
        %v2182 = vsub.f32 %v1636, %v2181
        %v2183 = vand.u32 %v2182, 4294901760
        %2184 = vmatpush1.msra.mxu0 %v2183
        %2185 = vmatprep.subr.mxu0 0.0
        %2186 = vmatpush1.msra.mxu0 0.0
        %2187 = vmatprep.subr.mxu0 0.0
        %2188 = vmatpush1.msra.mxu0 0.0
        %2189 = vmatprep.subr.mxu0 0.0
        %2190 = vmatpush1.msra.mxu0 0.0
        %2191 = vmatprep.subr.mxu0 0.0
        %2192 = vmatpush1.msra.mxu0 0.0
        %2193 = vmatprep.subr.mxu0 0.0
        %2194 = vmatpush1.msra.mxu0 0.0
        %2195 = vmatprep.subr.mxu0 0.0
        %2196 = vmatpush1.msra.mxu0 0.0
        %2197 = vmatprep.subr.mxu0 0.0
        %2198 = vmatpush1.msra.mxu0 0.0
        %2199 = vmatprep.subr.mxu0 0.0
        %2200 = vmatpush1.msra.mxu0 0.0
        %2201 = vmatprep.subr.mxu0 0.0
        %2202 = vmatpush1.msra.mxu0 0.0
        %2203 = vmatprep.subr.mxu0 0.0
        %2204 = vmatpush1.msra.mxu0 0.0
        %2205 = vmatprep.subr.mxu0 0.0
        %2206 = vmatpush1.msra.mxu0 0.0
        %2207 = vmatprep.subr.mxu0 0.0
        %2208 = vmatpush1.msra.mxu0 0.0
        %2209 = vmatprep.subr.mxu0 0.0
        %2210 = vmatpush1.msra.mxu0 0.0
        %2211 = vmatprep.subr.mxu0 0.0
        %2212 = vmatpush1.msra.mxu0 0.0
        %2213 = vmatprep.subr.mxu0 0.0
        %2214 = vmatpush1.msra.mxu0 0.0
        %2215 = vmatprep.subr.mxu0 0.0
        %2216 = vmatpush1.msra.mxu0 0.0
        %2217 = vmatprep.subr.mxu0 0.0
        %2218 = vmatpush1.msra.mxu0 0.0
        %2219 = vmatprep.subr.mxu0 0.0
        %2220 = vmatpush1.msra.mxu0 0.0
        %2221 = vmatprep.subr.mxu0 0.0
        %2222 = vmatpush1.msra.mxu0 0.0
        %2223 = vmatprep.subr.mxu0 0.0
        %2224 = vmatpush1.msra.mxu0 0.0
        %2225 = vmatprep.subr.mxu0 0.0
        %2226 = vmatpush1.msra.mxu0 0.0
        %2227 = vmatprep.subr.mxu0 0.0
        %2228 = vmatpush1.msra.mxu0 0.0
        %2229 = vmatprep.subr.mxu0 0.0
        %2230 = vmatpush1.msra.mxu0 0.0
        %2231 = vmatprep.subr.mxu0 0.0
        %2232 = vmatpush1.msra.mxu0 0.0
        %2233 = vmatprep.subr.mxu0 0.0
        %2234 = vmatpush1.msra.mxu0 0.0
        %2235 = vmatprep.subr.mxu0 0.0
        %2236 = vmatpush1.msra.mxu0 0.0
        %2237 = vmatprep.subr.mxu0 0.0
        %2238 = vmatpush1.msra.mxu0 0.0
        %2239 = vmatprep.subr.mxu0 0.0
        %2240 = vmatpush1.msra.mxu0 0.0
        %2241 = vmatprep.mubr.f32.mxu0 0.0
        %v2242 = vand.u32 %v1670, 4294901760
        %2243 = vmatmul.mubr.f32.gmra.mrb[0].mxu0 %v2242
        %v2244 = vpop.f32.mrb[0].mxu0
        %v2245 = vadd.f32 %v2122, %v2244
        %v2246 = vpop.f32.mrb[0].mxu0
        %v2247 = vadd.f32 %v2124, %v2246
        %2248 = vmatprep.mubr.f32.mxu0 0.0
        %v2249 = vand.u32 %v1673, 4294901760
        %2250 = vmatmul.mubr.f32.gmra.mrb[0].mxu0 %v2249
        %v2251 = vpop.f32.mrb[0].mxu0
        %v2252 = vadd.f32 %v2131, %v2251
        %v2253 = vpop.f32.mrb[0].mxu0
        %v2254 = vadd.f32 %v2133, %v2253
        %2255 = vmatprep.mubr.f32.mxu0 0.0
        %v2256 = vand.u32 %v1676, 4294901760
        %2257 = vmatmul.mubr.f32.gmra.mrb[0].mxu0 %v2256
        %v2258 = vpop.f32.mrb[0].mxu0
        %v2259 = vadd.f32 %v2140, %v2258
        %v2260 = vpop.f32.mrb[0].mxu0
        %v2261 = vadd.f32 %v2142, %v2260
        %2262 = vmatprep.mubr.f32.mxu0 0.0
        %v2263 = vand.u32 %v1679, 4294901760
        %2264 = vmatmul.mubr.f32.gmra.mrb[0].mxu0 %v2263
        %v2265 = vpop.f32.mrb[0].mxu0
        %v2266 = vadd.f32 %v2149, %v2265
        %v2267 = vpop.f32.mrb[0].mxu0
        %v2268 = vadd.f32 %v2151, %v2267
        %2269 = vdwg.mxu0
        %v2270 = vand.u32 %v1625, 4294901760
        %2271 = vmatprep.subr.mxu0 %v2270
        %v2272 = vand.u32 %v1624, 4294901760
        %2273 = vmatpush1.msra.mxu0 %v2272
        %v2274 = vand.u32 %v1629, 4294901760
        %2275 = vmatprep.subr.mxu0 %v2274
        %v2276 = vand.u32 %v1628, 4294901760
        %2277 = vmatpush1.msra.mxu0 %v2276
        %v2278 = vand.u32 %v1633, 4294901760
        %2279 = vmatprep.subr.mxu0 %v2278
        %v2280 = vand.u32 %v1632, 4294901760
        %2281 = vmatpush1.msra.mxu0 %v2280
        %v2282 = vand.u32 %v1637, 4294901760
        %2283 = vmatprep.subr.mxu0 %v2282
        %v2284 = vand.u32 %v1636, 4294901760
        %2285 = vmatpush1.msra.mxu0 %v2284
        %2286 = vmatprep.subr.mxu0 0.0
        %2287 = vmatpush1.msra.mxu0 0.0
        %2288 = vmatprep.subr.mxu0 0.0
        %2289 = vmatpush1.msra.mxu0 0.0
        %2290 = vmatprep.subr.mxu0 0.0
        %2291 = vmatpush1.msra.mxu0 0.0
        %2292 = vmatprep.subr.mxu0 0.0
        %2293 = vmatpush1.msra.mxu0 0.0
        %2294 = vmatprep.subr.mxu0 0.0
        %2295 = vmatpush1.msra.mxu0 0.0
        %2296 = vmatprep.subr.mxu0 0.0
        %2297 = vmatpush1.msra.mxu0 0.0
        %2298 = vmatprep.subr.mxu0 0.0
        %2299 = vmatpush1.msra.mxu0 0.0
        %2300 = vmatprep.subr.mxu0 0.0
        %2301 = vmatpush1.msra.mxu0 0.0
        %2302 = vmatprep.subr.mxu0 0.0
        %2303 = vmatpush1.msra.mxu0 0.0
        %2304 = vmatprep.subr.mxu0 0.0
        %2305 = vmatpush1.msra.mxu0 0.0
        %2306 = vmatprep.subr.mxu0 0.0
        %2307 = vmatpush1.msra.mxu0 0.0
        %2308 = vmatprep.subr.mxu0 0.0
        %2309 = vmatpush1.msra.mxu0 0.0
        %2310 = vmatprep.subr.mxu0 0.0
        %2311 = vmatpush1.msra.mxu0 0.0
        %2312 = vmatprep.subr.mxu0 0.0
        %2313 = vmatpush1.msra.mxu0 0.0
        %2314 = vmatprep.subr.mxu0 0.0
        %2315 = vmatpush1.msra.mxu0 0.0
        %2316 = vmatprep.subr.mxu0 0.0
        %2317 = vmatpush1.msra.mxu0 0.0
        %2318 = vmatprep.subr.mxu0 0.0
        %2319 = vmatpush1.msra.mxu0 0.0
        %2320 = vmatprep.subr.mxu0 0.0
        %2321 = vmatpush1.msra.mxu0 0.0
        %2322 = vmatprep.subr.mxu0 0.0
        %2323 = vmatpush1.msra.mxu0 0.0
        %2324 = vmatprep.subr.mxu0 0.0
        %2325 = vmatpush1.msra.mxu0 0.0
        %2326 = vmatprep.subr.mxu0 0.0
        %2327 = vmatpush1.msra.mxu0 0.0
        %2328 = vmatprep.subr.mxu0 0.0
        %2329 = vmatpush1.msra.mxu0 0.0
        %2330 = vmatprep.subr.mxu0 0.0
        %2331 = vmatpush1.msra.mxu0 0.0
        %2332 = vmatprep.subr.mxu0 0.0
        %2333 = vmatpush1.msra.mxu0 0.0
        %2334 = vmatprep.subr.mxu0 0.0
        %2335 = vmatpush1.msra.mxu0 0.0
        %2336 = vmatprep.subr.mxu0 0.0
        %2337 = vmatpush1.msra.mxu0 0.0
        %2338 = vmatprep.subr.mxu0 0.0
        %2339 = vmatpush1.msra.mxu0 0.0
        %2340 = vmatprep.subr.mxu0 0.0
        %2341 = vmatpush1.msra.mxu0 0.0
        %2342 = vmatprep.mubr.f32.mxu0 0.0
        %v2343 = vand.u32 %v1670, 4294901760
        %2344 = vmatmul.mubr.f32.gmra.mrb[0].mxu0 %v2343
        %v2345 = vpop.f32.mrb[0].mxu0
        %v2346 = vadd.f32 %v2245, %v2345
        %v2347 = vpop.f32.mrb[0].mxu0
        %v2348 = vadd.f32 %v2247, %v2347
        %2349 = vmatprep.mubr.f32.mxu0 0.0
        %v2350 = vand.u32 %v1673, 4294901760
        %2351 = vmatmul.mubr.f32.gmra.mrb[0].mxu0 %v2350
        %v2352 = vpop.f32.mrb[0].mxu0
        %v2353 = vadd.f32 %v2252, %v2352
        %v2354 = vpop.f32.mrb[0].mxu0
        %v2355 = vadd.f32 %v2254, %v2354
        %2356 = vmatprep.mubr.f32.mxu0 0.0
        %v2357 = vand.u32 %v1676, 4294901760
        %2358 = vmatmul.mubr.f32.gmra.mrb[0].mxu0 %v2357
        %v2359 = vpop.f32.mrb[0].mxu0
        %v2360 = vadd.f32 %v2259, %v2359
        %v2361 = vpop.f32.mrb[0].mxu0
        %v2362 = vadd.f32 %v2261, %v2361
        %2363 = vmatprep.mubr.f32.mxu0 0.0
        %v2364 = vand.u32 %v1679, 4294901760
        %2365 = vmatmul.mubr.f32.gmra.mrb[0].mxu0 %v2364
        %v2366 = vpop.f32.mrb[0].mxu0
        %v2367 = vadd.f32 %v2266, %v2366
        %v2368 = vpop.f32.mrb[0].mxu0
        %v2369 = vadd.f32 %v2268, %v2368
        %2370 = vdwg.mxu0
        %v2371 = vand.u32 %v1627, 4294901760
        %2372 = vmatprep.subr.mxu0 %v2371
        %v2373 = vand.u32 %v1626, 4294901760
        %2374 = vmatpush1.msra.mxu0 %v2373
        %v2375 = vand.u32 %v1631, 4294901760
        %2376 = vmatprep.subr.mxu0 %v2375
        %v2377 = vand.u32 %v1630, 4294901760
        %2378 = vmatpush1.msra.mxu0 %v2377
        %v2379 = vand.u32 %v1635, 4294901760
        %2380 = vmatprep.subr.mxu0 %v2379
        %v2381 = vand.u32 %v1634, 4294901760
        %2382 = vmatpush1.msra.mxu0 %v2381
        %v2383 = vand.u32 %v1639, 4294901760
        %2384 = vmatprep.subr.mxu0 %v2383
        %v2385 = vand.u32 %v1638, 4294901760
        %2386 = vmatpush1.msra.mxu0 %v2385
        %2387 = vmatprep.subr.mxu0 0.0
        %2388 = vmatpush1.msra.mxu0 0.0
        %2389 = vmatprep.subr.mxu0 0.0
        %2390 = vmatpush1.msra.mxu0 0.0
        %2391 = vmatprep.subr.mxu0 0.0
        %2392 = vmatpush1.msra.mxu0 0.0
        %2393 = vmatprep.subr.mxu0 0.0
        %2394 = vmatpush1.msra.mxu0 0.0
        %2395 = vmatprep.subr.mxu0 0.0
        %2396 = vmatpush1.msra.mxu0 0.0
        %2397 = vmatprep.subr.mxu0 0.0
        %2398 = vmatpush1.msra.mxu0 0.0
        %2399 = vmatprep.subr.mxu0 0.0
        %2400 = vmatpush1.msra.mxu0 0.0
        %2401 = vmatprep.subr.mxu0 0.0
        %2402 = vmatpush1.msra.mxu0 0.0
        %2403 = vmatprep.subr.mxu0 0.0
        %2404 = vmatpush1.msra.mxu0 0.0
        %2405 = vmatprep.subr.mxu0 0.0
        %2406 = vmatpush1.msra.mxu0 0.0
        %2407 = vmatprep.subr.mxu0 0.0
        %2408 = vmatpush1.msra.mxu0 0.0
        %2409 = vmatprep.subr.mxu0 0.0
        %2410 = vmatpush1.msra.mxu0 0.0
        %2411 = vmatprep.subr.mxu0 0.0
        %2412 = vmatpush1.msra.mxu0 0.0
        %2413 = vmatprep.subr.mxu0 0.0
        %2414 = vmatpush1.msra.mxu0 0.0
        %2415 = vmatprep.subr.mxu0 0.0
        %2416 = vmatpush1.msra.mxu0 0.0
        %2417 = vmatprep.subr.mxu0 0.0
        %2418 = vmatpush1.msra.mxu0 0.0
        %2419 = vmatprep.subr.mxu0 0.0
        %2420 = vmatpush1.msra.mxu0 0.0
        %2421 = vmatprep.subr.mxu0 0.0
        %2422 = vmatpush1.msra.mxu0 0.0
        %2423 = vmatprep.subr.mxu0 0.0
        %2424 = vmatpush1.msra.mxu0 0.0
        %2425 = vmatprep.subr.mxu0 0.0
        %2426 = vmatpush1.msra.mxu0 0.0
        %2427 = vmatprep.subr.mxu0 0.0
        %2428 = vmatpush1.msra.mxu0 0.0
        %2429 = vmatprep.subr.mxu0 0.0
        %2430 = vmatpush1.msra.mxu0 0.0
        %2431 = vmatprep.subr.mxu0 0.0
        %2432 = vmatpush1.msra.mxu0 0.0
        %2433 = vmatprep.subr.mxu0 0.0
        %2434 = vmatpush1.msra.mxu0 0.0
        %2435 = vmatprep.subr.mxu0 0.0
        %2436 = vmatpush1.msra.mxu0 0.0
        %2437 = vmatprep.subr.mxu0 0.0
        %2438 = vmatpush1.msra.mxu0 0.0
        %2439 = vmatprep.subr.mxu0 0.0
        %2440 = vmatpush1.msra.mxu0 0.0
        %2441 = vmatprep.subr.mxu0 0.0
        %2442 = vmatpush1.msra.mxu0 0.0
        %2443 = vmatprep.mubr.f32.mxu0 0.0
        %v2444 = vand.u32 %v1670, 4294901760
        %v2445 = vsub.f32 %v1670, %v2444
        %v2446 = vand.u32 %v2445, 4294901760
        %v2447 = vsub.f32 %v2445, %v2446
        %v2448 = vand.u32 %v2447, 4294901760
        %2449 = vmatmul.mubr.f32.gmra.mrb[0].mxu0 %v2448
        %v2450 = vpop.f32.mrb[0].mxu0
        %v2451 = vadd.f32 %v1651, %v2450
        %v2452 = vpop.f32.mrb[0].mxu0
        %v2453 = vadd.f32 %v1651, %v2452
        %2454 = vmatprep.mubr.f32.mxu0 0.0
        %v2455 = vand.u32 %v1673, 4294901760
        %v2456 = vsub.f32 %v1673, %v2455
        %v2457 = vand.u32 %v2456, 4294901760
        %v2458 = vsub.f32 %v2456, %v2457
        %v2459 = vand.u32 %v2458, 4294901760
        %2460 = vmatmul.mubr.f32.gmra.mrb[0].mxu0 %v2459
        %v2461 = vpop.f32.mrb[0].mxu0
        %v2462 = vadd.f32 %v1656, %v2461
        %v2463 = vpop.f32.mrb[0].mxu0
        %v2464 = vadd.f32 %v1656, %v2463
        %2465 = vmatprep.mubr.f32.mxu0 0.0
        %v2466 = vand.u32 %v1676, 4294901760
        %v2467 = vsub.f32 %v1676, %v2466
        %v2468 = vand.u32 %v2467, 4294901760
        %v2469 = vsub.f32 %v2467, %v2468
        %v2470 = vand.u32 %v2469, 4294901760
        %2471 = vmatmul.mubr.f32.gmra.mrb[0].mxu0 %v2470
        %v2472 = vpop.f32.mrb[0].mxu0
        %v2473 = vadd.f32 %v1661, %v2472
        %v2474 = vpop.f32.mrb[0].mxu0
        %v2475 = vadd.f32 %v1661, %v2474
        %2476 = vmatprep.mubr.f32.mxu0 0.0
        %v2477 = vand.u32 %v1679, 4294901760
        %v2478 = vsub.f32 %v1679, %v2477
        %v2479 = vand.u32 %v2478, 4294901760
        %v2480 = vsub.f32 %v2478, %v2479
        %v2481 = vand.u32 %v2480, 4294901760
        %2482 = vmatmul.mubr.f32.gmra.mrb[0].mxu0 %v2481
        %v2483 = vpop.f32.mrb[0].mxu0
        %v2484 = vadd.f32 %v1666, %v2483
        %v2485 = vpop.f32.mrb[0].mxu0
        %v2486 = vadd.f32 %v1666, %v2485
        %2487 = vdwg.mxu0
        %v2488 = vand.u32 %v1627, 4294901760
        %v2489 = vsub.f32 %v1627, %v2488
        %v2490 = vand.u32 %v2489, 4294901760
        %v2491 = vsub.f32 %v2489, %v2490
        %v2492 = vand.u32 %v2491, 4294901760
        %2493 = vmatprep.subr.mxu0 %v2492
        %v2494 = vand.u32 %v1626, 4294901760
        %v2495 = vsub.f32 %v1626, %v2494
        %v2496 = vand.u32 %v2495, 4294901760
        %v2497 = vsub.f32 %v2495, %v2496
        %v2498 = vand.u32 %v2497, 4294901760
        %2499 = vmatpush1.msra.mxu0 %v2498
        %v2500 = vand.u32 %v1631, 4294901760
        %v2501 = vsub.f32 %v1631, %v2500
        %v2502 = vand.u32 %v2501, 4294901760
        %v2503 = vsub.f32 %v2501, %v2502
        %v2504 = vand.u32 %v2503, 4294901760
        %2505 = vmatprep.subr.mxu0 %v2504
        %v2506 = vand.u32 %v1630, 4294901760
        %v2507 = vsub.f32 %v1630, %v2506
        %v2508 = vand.u32 %v2507, 4294901760
        %v2509 = vsub.f32 %v2507, %v2508
        %v2510 = vand.u32 %v2509, 4294901760
        %2511 = vmatpush1.msra.mxu0 %v2510
        %v2512 = vand.u32 %v1635, 4294901760
        %v2513 = vsub.f32 %v1635, %v2512
        %v2514 = vand.u32 %v2513, 4294901760
        %v2515 = vsub.f32 %v2513, %v2514
        %v2516 = vand.u32 %v2515, 4294901760
        %2517 = vmatprep.subr.mxu0 %v2516
        %v2518 = vand.u32 %v1634, 4294901760
        %v2519 = vsub.f32 %v1634, %v2518
        %v2520 = vand.u32 %v2519, 4294901760
        %v2521 = vsub.f32 %v2519, %v2520
        %v2522 = vand.u32 %v2521, 4294901760
        %2523 = vmatpush1.msra.mxu0 %v2522
        %v2524 = vand.u32 %v1639, 4294901760
        %v2525 = vsub.f32 %v1639, %v2524
        %v2526 = vand.u32 %v2525, 4294901760
        %v2527 = vsub.f32 %v2525, %v2526
        %v2528 = vand.u32 %v2527, 4294901760
        %2529 = vmatprep.subr.mxu0 %v2528
        %v2530 = vand.u32 %v1638, 4294901760
        %v2531 = vsub.f32 %v1638, %v2530
        %v2532 = vand.u32 %v2531, 4294901760
        %v2533 = vsub.f32 %v2531, %v2532
        %v2534 = vand.u32 %v2533, 4294901760
        %2535 = vmatpush1.msra.mxu0 %v2534
        %2536 = vmatprep.subr.mxu0 0.0
        %2537 = vmatpush1.msra.mxu0 0.0
        %2538 = vmatprep.subr.mxu0 0.0
        %2539 = vmatpush1.msra.mxu0 0.0
        %2540 = vmatprep.subr.mxu0 0.0
        %2541 = vmatpush1.msra.mxu0 0.0
        %2542 = vmatprep.subr.mxu0 0.0
        %2543 = vmatpush1.msra.mxu0 0.0
        %2544 = vmatprep.subr.mxu0 0.0
        %2545 = vmatpush1.msra.mxu0 0.0
        %2546 = vmatprep.subr.mxu0 0.0
        %2547 = vmatpush1.msra.mxu0 0.0
        %2548 = vmatprep.subr.mxu0 0.0
        %2549 = vmatpush1.msra.mxu0 0.0
        %2550 = vmatprep.subr.mxu0 0.0
        %2551 = vmatpush1.msra.mxu0 0.0
        %2552 = vmatprep.subr.mxu0 0.0
        %2553 = vmatpush1.msra.mxu0 0.0
        %2554 = vmatprep.subr.mxu0 0.0
        %2555 = vmatpush1.msra.mxu0 0.0
        %2556 = vmatprep.subr.mxu0 0.0
        %2557 = vmatpush1.msra.mxu0 0.0
        %2558 = vmatprep.subr.mxu0 0.0
        %2559 = vmatpush1.msra.mxu0 0.0
        %2560 = vmatprep.subr.mxu0 0.0
        %2561 = vmatpush1.msra.mxu0 0.0
        %2562 = vmatprep.subr.mxu0 0.0
        %2563 = vmatpush1.msra.mxu0 0.0
        %2564 = vmatprep.subr.mxu0 0.0
        %2565 = vmatpush1.msra.mxu0 0.0
        %2566 = vmatprep.subr.mxu0 0.0
        %2567 = vmatpush1.msra.mxu0 0.0
        %2568 = vmatprep.subr.mxu0 0.0
        %2569 = vmatpush1.msra.mxu0 0.0
        %2570 = vmatprep.subr.mxu0 0.0
        %2571 = vmatpush1.msra.mxu0 0.0
        %2572 = vmatprep.subr.mxu0 0.0
        %2573 = vmatpush1.msra.mxu0 0.0
        %2574 = vmatprep.subr.mxu0 0.0
        %2575 = vmatpush1.msra.mxu0 0.0
        %2576 = vmatprep.subr.mxu0 0.0
        %2577 = vmatpush1.msra.mxu0 0.0
        %2578 = vmatprep.subr.mxu0 0.0
        %2579 = vmatpush1.msra.mxu0 0.0
        %2580 = vmatprep.subr.mxu0 0.0
        %2581 = vmatpush1.msra.mxu0 0.0
        %2582 = vmatprep.subr.mxu0 0.0
        %2583 = vmatpush1.msra.mxu0 0.0
        %2584 = vmatprep.subr.mxu0 0.0
        %2585 = vmatpush1.msra.mxu0 0.0
        %2586 = vmatprep.subr.mxu0 0.0
        %2587 = vmatpush1.msra.mxu0 0.0
        %2588 = vmatprep.subr.mxu0 0.0
        %2589 = vmatpush1.msra.mxu0 0.0
        %2590 = vmatprep.subr.mxu0 0.0
        %2591 = vmatpush1.msra.mxu0 0.0
        %2592 = vmatprep.mubr.f32.mxu0 0.0
        %v2593 = vand.u32 %v1670, 4294901760
        %2594 = vmatmul.mubr.f32.gmra.mrb[0].mxu0 %v2593
        %v2595 = vpop.f32.mrb[0].mxu0
        %v2596 = vadd.f32 %v2451, %v2595
        %v2597 = vpop.f32.mrb[0].mxu0
        %v2598 = vadd.f32 %v2453, %v2597
        %2599 = vmatprep.mubr.f32.mxu0 0.0
        %v2600 = vand.u32 %v1673, 4294901760
        %2601 = vmatmul.mubr.f32.gmra.mrb[0].mxu0 %v2600
        %v2602 = vpop.f32.mrb[0].mxu0
        %v2603 = vadd.f32 %v2462, %v2602
        %v2604 = vpop.f32.mrb[0].mxu0
        %v2605 = vadd.f32 %v2464, %v2604
        %2606 = vmatprep.mubr.f32.mxu0 0.0
        %v2607 = vand.u32 %v1676, 4294901760
        %2608 = vmatmul.mubr.f32.gmra.mrb[0].mxu0 %v2607
        %v2609 = vpop.f32.mrb[0].mxu0
        %v2610 = vadd.f32 %v2473, %v2609
        %v2611 = vpop.f32.mrb[0].mxu0
        %v2612 = vadd.f32 %v2475, %v2611
        %2613 = vmatprep.mubr.f32.mxu0 0.0
        %v2614 = vand.u32 %v1679, 4294901760
        %2615 = vmatmul.mubr.f32.gmra.mrb[0].mxu0 %v2614
        %v2616 = vpop.f32.mrb[0].mxu0
        %v2617 = vadd.f32 %v2484, %v2616
        %v2618 = vpop.f32.mrb[0].mxu0
        %v2619 = vadd.f32 %v2486, %v2618
        %2620 = vdwg.mxu0
        %v2621 = vand.u32 %v1627, 4294901760
        %v2622 = vsub.f32 %v1627, %v2621
        %2623 = vmatprep.subr.mxu0 %v2622
        %v2624 = vand.u32 %v1626, 4294901760
        %v2625 = vsub.f32 %v1626, %v2624
        %2626 = vmatpush1.msra.mxu0 %v2625
        %v2627 = vand.u32 %v1631, 4294901760
        %v2628 = vsub.f32 %v1631, %v2627
        %2629 = vmatprep.subr.mxu0 %v2628
        %v2630 = vand.u32 %v1630, 4294901760
        %v2631 = vsub.f32 %v1630, %v2630
        %2632 = vmatpush1.msra.mxu0 %v2631
        %v2633 = vand.u32 %v1635, 4294901760
        %v2634 = vsub.f32 %v1635, %v2633
        %2635 = vmatprep.subr.mxu0 %v2634
        %v2636 = vand.u32 %v1634, 4294901760
        %v2637 = vsub.f32 %v1634, %v2636
        %2638 = vmatpush1.msra.mxu0 %v2637
        %v2639 = vand.u32 %v1639, 4294901760
        %v2640 = vsub.f32 %v1639, %v2639
        %2641 = vmatprep.subr.mxu0 %v2640
        %v2642 = vand.u32 %v1638, 4294901760
        %v2643 = vsub.f32 %v1638, %v2642
        %2644 = vmatpush1.msra.mxu0 %v2643
        %2645 = vmatprep.subr.mxu0 0.0
        %2646 = vmatpush1.msra.mxu0 0.0
        %2647 = vmatprep.subr.mxu0 0.0
        %2648 = vmatpush1.msra.mxu0 0.0
        %2649 = vmatprep.subr.mxu0 0.0
        %2650 = vmatpush1.msra.mxu0 0.0
        %2651 = vmatprep.subr.mxu0 0.0
        %2652 = vmatpush1.msra.mxu0 0.0
        %2653 = vmatprep.subr.mxu0 0.0
        %2654 = vmatpush1.msra.mxu0 0.0
        %2655 = vmatprep.subr.mxu0 0.0
        %2656 = vmatpush1.msra.mxu0 0.0
        %2657 = vmatprep.subr.mxu0 0.0
        %2658 = vmatpush1.msra.mxu0 0.0
        %2659 = vmatprep.subr.mxu0 0.0
        %2660 = vmatpush1.msra.mxu0 0.0
        %2661 = vmatprep.subr.mxu0 0.0
        %2662 = vmatpush1.msra.mxu0 0.0
        %2663 = vmatprep.subr.mxu0 0.0
        %2664 = vmatpush1.msra.mxu0 0.0
        %2665 = vmatprep.subr.mxu0 0.0
        %2666 = vmatpush1.msra.mxu0 0.0
        %2667 = vmatprep.subr.mxu0 0.0
        %2668 = vmatpush1.msra.mxu0 0.0
        %2669 = vmatprep.subr.mxu0 0.0
        %2670 = vmatpush1.msra.mxu0 0.0
        %2671 = vmatprep.subr.mxu0 0.0
        %2672 = vmatpush1.msra.mxu0 0.0
        %2673 = vmatprep.subr.mxu0 0.0
        %2674 = vmatpush1.msra.mxu0 0.0
        %2675 = vmatprep.subr.mxu0 0.0
        %2676 = vmatpush1.msra.mxu0 0.0
        %2677 = vmatprep.subr.mxu0 0.0
        %2678 = vmatpush1.msra.mxu0 0.0
        %2679 = vmatprep.subr.mxu0 0.0
        %2680 = vmatpush1.msra.mxu0 0.0
        %2681 = vmatprep.subr.mxu0 0.0
        %2682 = vmatpush1.msra.mxu0 0.0
        %2683 = vmatprep.subr.mxu0 0.0
        %2684 = vmatpush1.msra.mxu0 0.0
        %2685 = vmatprep.subr.mxu0 0.0
        %2686 = vmatpush1.msra.mxu0 0.0
        %2687 = vmatprep.subr.mxu0 0.0
        %2688 = vmatpush1.msra.mxu0 0.0
        %2689 = vmatprep.subr.mxu0 0.0
        %2690 = vmatpush1.msra.mxu0 0.0
        %2691 = vmatprep.subr.mxu0 0.0
        %2692 = vmatpush1.msra.mxu0 0.0
        %2693 = vmatprep.subr.mxu0 0.0
        %2694 = vmatpush1.msra.mxu0 0.0
        %2695 = vmatprep.subr.mxu0 0.0
        %2696 = vmatpush1.msra.mxu0 0.0
        %2697 = vmatprep.subr.mxu0 0.0
        %2698 = vmatpush1.msra.mxu0 0.0
        %2699 = vmatprep.subr.mxu0 0.0
        %2700 = vmatpush1.msra.mxu0 0.0
        %2701 = vmatprep.mubr.f32.mxu0 0.0
        %v2702 = vand.u32 %v1670, 4294901760
        %v2703 = vsub.f32 %v1670, %v2702
        %2704 = vmatmul.mubr.f32.gmra.mrb[0].mxu0 %v2703
        %v2705 = vpop.f32.mrb[0].mxu0
        %v2706 = vadd.f32 %v2596, %v2705
        %v2707 = vpop.f32.mrb[0].mxu0
        %v2708 = vadd.f32 %v2598, %v2707
        %2709 = vmatprep.mubr.f32.mxu0 0.0
        %v2710 = vand.u32 %v1673, 4294901760
        %v2711 = vsub.f32 %v1673, %v2710
        %2712 = vmatmul.mubr.f32.gmra.mrb[0].mxu0 %v2711
        %v2713 = vpop.f32.mrb[0].mxu0
        %v2714 = vadd.f32 %v2603, %v2713
        %v2715 = vpop.f32.mrb[0].mxu0
        %v2716 = vadd.f32 %v2605, %v2715
        %2717 = vmatprep.mubr.f32.mxu0 0.0
        %v2718 = vand.u32 %v1676, 4294901760
        %v2719 = vsub.f32 %v1676, %v2718
        %2720 = vmatmul.mubr.f32.gmra.mrb[0].mxu0 %v2719
        %v2721 = vpop.f32.mrb[0].mxu0
        %v2722 = vadd.f32 %v2610, %v2721
        %v2723 = vpop.f32.mrb[0].mxu0
        %v2724 = vadd.f32 %v2612, %v2723
        %2725 = vmatprep.mubr.f32.mxu0 0.0
        %v2726 = vand.u32 %v1679, 4294901760
        %v2727 = vsub.f32 %v1679, %v2726
        %2728 = vmatmul.mubr.f32.gmra.mrb[0].mxu0 %v2727
        %v2729 = vpop.f32.mrb[0].mxu0
        %v2730 = vadd.f32 %v2617, %v2729
        %v2731 = vpop.f32.mrb[0].mxu0
        %v2732 = vadd.f32 %v2619, %v2731
        %2733 = vdwg.mxu0
        %v2734 = vand.u32 %v1627, 4294901760
        %2735 = vmatprep.subr.mxu0 %v2734
        %v2736 = vand.u32 %v1626, 4294901760
        %2737 = vmatpush1.msra.mxu0 %v2736
        %v2738 = vand.u32 %v1631, 4294901760
        %2739 = vmatprep.subr.mxu0 %v2738
        %v2740 = vand.u32 %v1630, 4294901760
        %2741 = vmatpush1.msra.mxu0 %v2740
        %v2742 = vand.u32 %v1635, 4294901760
        %2743 = vmatprep.subr.mxu0 %v2742
        %v2744 = vand.u32 %v1634, 4294901760
        %2745 = vmatpush1.msra.mxu0 %v2744
        %v2746 = vand.u32 %v1639, 4294901760
        %2747 = vmatprep.subr.mxu0 %v2746
        %v2748 = vand.u32 %v1638, 4294901760
        %2749 = vmatpush1.msra.mxu0 %v2748
        %2750 = vmatprep.subr.mxu0 0.0
        %2751 = vmatpush1.msra.mxu0 0.0
        %2752 = vmatprep.subr.mxu0 0.0
        %2753 = vmatpush1.msra.mxu0 0.0
        %2754 = vmatprep.subr.mxu0 0.0
        %2755 = vmatpush1.msra.mxu0 0.0
        %2756 = vmatprep.subr.mxu0 0.0
        %2757 = vmatpush1.msra.mxu0 0.0
        %2758 = vmatprep.subr.mxu0 0.0
        %2759 = vmatpush1.msra.mxu0 0.0
        %2760 = vmatprep.subr.mxu0 0.0
        %2761 = vmatpush1.msra.mxu0 0.0
        %2762 = vmatprep.subr.mxu0 0.0
        %2763 = vmatpush1.msra.mxu0 0.0
        %2764 = vmatprep.subr.mxu0 0.0
        %2765 = vmatpush1.msra.mxu0 0.0
        %2766 = vmatprep.subr.mxu0 0.0
        %2767 = vmatpush1.msra.mxu0 0.0
        %2768 = vmatprep.subr.mxu0 0.0
        %2769 = vmatpush1.msra.mxu0 0.0
        %2770 = vmatprep.subr.mxu0 0.0
        %2771 = vmatpush1.msra.mxu0 0.0
        %2772 = vmatprep.subr.mxu0 0.0
        %2773 = vmatpush1.msra.mxu0 0.0
        %2774 = vmatprep.subr.mxu0 0.0
        %2775 = vmatpush1.msra.mxu0 0.0
        %2776 = vmatprep.subr.mxu0 0.0
        %2777 = vmatpush1.msra.mxu0 0.0
        %2778 = vmatprep.subr.mxu0 0.0
        %2779 = vmatpush1.msra.mxu0 0.0
        %2780 = vmatprep.subr.mxu0 0.0
        %2781 = vmatpush1.msra.mxu0 0.0
        %2782 = vmatprep.subr.mxu0 0.0
        %2783 = vmatpush1.msra.mxu0 0.0
        %2784 = vmatprep.subr.mxu0 0.0
        %2785 = vmatpush1.msra.mxu0 0.0
        %2786 = vmatprep.subr.mxu0 0.0
        %2787 = vmatpush1.msra.mxu0 0.0
        %2788 = vmatprep.subr.mxu0 0.0
        %2789 = vmatpush1.msra.mxu0 0.0
        %2790 = vmatprep.subr.mxu0 0.0
        %2791 = vmatpush1.msra.mxu0 0.0
        %2792 = vmatprep.subr.mxu0 0.0
        %2793 = vmatpush1.msra.mxu0 0.0
        %2794 = vmatprep.subr.mxu0 0.0
        %2795 = vmatpush1.msra.mxu0 0.0
        %2796 = vmatprep.subr.mxu0 0.0
        %2797 = vmatpush1.msra.mxu0 0.0
        %2798 = vmatprep.subr.mxu0 0.0
        %2799 = vmatpush1.msra.mxu0 0.0
        %2800 = vmatprep.subr.mxu0 0.0
        %2801 = vmatpush1.msra.mxu0 0.0
        %2802 = vmatprep.subr.mxu0 0.0
        %2803 = vmatpush1.msra.mxu0 0.0
        %2804 = vmatprep.subr.mxu0 0.0
        %2805 = vmatpush1.msra.mxu0 0.0
        %2806 = vmatprep.mubr.f32.mxu0 0.0
        %v2807 = vand.u32 %v1670, 4294901760
        %v2808 = vsub.f32 %v1670, %v2807
        %v2809 = vand.u32 %v2808, 4294901760
        %2810 = vmatmul.mubr.f32.gmra.mrb[0].mxu0 %v2809
        %v2811 = vpop.f32.mrb[0].mxu0
        %v2812 = vadd.f32 %v2706, %v2811
        %v2813 = vpop.f32.mrb[0].mxu0
        %v2814 = vadd.f32 %v2708, %v2813
        %2815 = vmatprep.mubr.f32.mxu0 0.0
        %v2816 = vand.u32 %v1673, 4294901760
        %v2817 = vsub.f32 %v1673, %v2816
        %v2818 = vand.u32 %v2817, 4294901760
        %2819 = vmatmul.mubr.f32.gmra.mrb[0].mxu0 %v2818
        %v2820 = vpop.f32.mrb[0].mxu0
        %v2821 = vadd.f32 %v2714, %v2820
        %v2822 = vpop.f32.mrb[0].mxu0
        %v2823 = vadd.f32 %v2716, %v2822
        %2824 = vmatprep.mubr.f32.mxu0 0.0
        %v2825 = vand.u32 %v1676, 4294901760
        %v2826 = vsub.f32 %v1676, %v2825
        %v2827 = vand.u32 %v2826, 4294901760
        %2828 = vmatmul.mubr.f32.gmra.mrb[0].mxu0 %v2827
        %v2829 = vpop.f32.mrb[0].mxu0
        %v2830 = vadd.f32 %v2722, %v2829
        %v2831 = vpop.f32.mrb[0].mxu0
        %v2832 = vadd.f32 %v2724, %v2831
        %2833 = vmatprep.mubr.f32.mxu0 0.0
        %v2834 = vand.u32 %v1679, 4294901760
        %v2835 = vsub.f32 %v1679, %v2834
        %v2836 = vand.u32 %v2835, 4294901760
        %2837 = vmatmul.mubr.f32.gmra.mrb[0].mxu0 %v2836
        %v2838 = vpop.f32.mrb[0].mxu0
        %v2839 = vadd.f32 %v2730, %v2838
        %v2840 = vpop.f32.mrb[0].mxu0
        %v2841 = vadd.f32 %v2732, %v2840
        %2842 = vdwg.mxu0
        %v2843 = vand.u32 %v1627, 4294901760
        %v2844 = vsub.f32 %v1627, %v2843
        %v2845 = vand.u32 %v2844, 4294901760
        %2846 = vmatprep.subr.mxu0 %v2845
        %v2847 = vand.u32 %v1626, 4294901760
        %v2848 = vsub.f32 %v1626, %v2847
        %v2849 = vand.u32 %v2848, 4294901760
        %2850 = vmatpush1.msra.mxu0 %v2849
        %v2851 = vand.u32 %v1631, 4294901760
        %v2852 = vsub.f32 %v1631, %v2851
        %v2853 = vand.u32 %v2852, 4294901760
        %2854 = vmatprep.subr.mxu0 %v2853
        %v2855 = vand.u32 %v1630, 4294901760
        %v2856 = vsub.f32 %v1630, %v2855
        %v2857 = vand.u32 %v2856, 4294901760
        %2858 = vmatpush1.msra.mxu0 %v2857
        %v2859 = vand.u32 %v1635, 4294901760
        %v2860 = vsub.f32 %v1635, %v2859
        %v2861 = vand.u32 %v2860, 4294901760
        %2862 = vmatprep.subr.mxu0 %v2861
        %v2863 = vand.u32 %v1634, 4294901760
        %v2864 = vsub.f32 %v1634, %v2863
        %v2865 = vand.u32 %v2864, 4294901760
        %2866 = vmatpush1.msra.mxu0 %v2865
        %v2867 = vand.u32 %v1639, 4294901760
        %v2868 = vsub.f32 %v1639, %v2867
        %v2869 = vand.u32 %v2868, 4294901760
        %2870 = vmatprep.subr.mxu0 %v2869
        %v2871 = vand.u32 %v1638, 4294901760
        %v2872 = vsub.f32 %v1638, %v2871
        %v2873 = vand.u32 %v2872, 4294901760
        %2874 = vmatpush1.msra.mxu0 %v2873
        %2875 = vmatprep.subr.mxu0 0.0
        %2876 = vmatpush1.msra.mxu0 0.0
        %2877 = vmatprep.subr.mxu0 0.0
        %2878 = vmatpush1.msra.mxu0 0.0
        %2879 = vmatprep.subr.mxu0 0.0
        %2880 = vmatpush1.msra.mxu0 0.0
        %2881 = vmatprep.subr.mxu0 0.0
        %2882 = vmatpush1.msra.mxu0 0.0
        %2883 = vmatprep.subr.mxu0 0.0
        %2884 = vmatpush1.msra.mxu0 0.0
        %2885 = vmatprep.subr.mxu0 0.0
        %2886 = vmatpush1.msra.mxu0 0.0
        %2887 = vmatprep.subr.mxu0 0.0
        %2888 = vmatpush1.msra.mxu0 0.0
        %2889 = vmatprep.subr.mxu0 0.0
        %2890 = vmatpush1.msra.mxu0 0.0
        %2891 = vmatprep.subr.mxu0 0.0
        %2892 = vmatpush1.msra.mxu0 0.0
        %2893 = vmatprep.subr.mxu0 0.0
        %2894 = vmatpush1.msra.mxu0 0.0
        %2895 = vmatprep.subr.mxu0 0.0
        %2896 = vmatpush1.msra.mxu0 0.0
        %2897 = vmatprep.subr.mxu0 0.0
        %2898 = vmatpush1.msra.mxu0 0.0
        %2899 = vmatprep.subr.mxu0 0.0
        %2900 = vmatpush1.msra.mxu0 0.0
        %2901 = vmatprep.subr.mxu0 0.0
        %2902 = vmatpush1.msra.mxu0 0.0
        %2903 = vmatprep.subr.mxu0 0.0
        %2904 = vmatpush1.msra.mxu0 0.0
        %2905 = vmatprep.subr.mxu0 0.0
        %2906 = vmatpush1.msra.mxu0 0.0
        %2907 = vmatprep.subr.mxu0 0.0
        %2908 = vmatpush1.msra.mxu0 0.0
        %2909 = vmatprep.subr.mxu0 0.0
        %2910 = vmatpush1.msra.mxu0 0.0
        %2911 = vmatprep.subr.mxu0 0.0
        %2912 = vmatpush1.msra.mxu0 0.0
        %2913 = vmatprep.subr.mxu0 0.0
        %2914 = vmatpush1.msra.mxu0 0.0
        %2915 = vmatprep.subr.mxu0 0.0
        %2916 = vmatpush1.msra.mxu0 0.0
        %2917 = vmatprep.subr.mxu0 0.0
        %2918 = vmatpush1.msra.mxu0 0.0
        %2919 = vmatprep.subr.mxu0 0.0
        %2920 = vmatpush1.msra.mxu0 0.0
        %2921 = vmatprep.subr.mxu0 0.0
        %2922 = vmatpush1.msra.mxu0 0.0
        %2923 = vmatprep.subr.mxu0 0.0
        %2924 = vmatpush1.msra.mxu0 0.0
        %2925 = vmatprep.subr.mxu0 0.0
        %2926 = vmatpush1.msra.mxu0 0.0
        %2927 = vmatprep.subr.mxu0 0.0
        %2928 = vmatpush1.msra.mxu0 0.0
        %2929 = vmatprep.subr.mxu0 0.0
        %2930 = vmatpush1.msra.mxu0 0.0
        %2931 = vmatprep.mubr.f32.mxu0 0.0
        %v2932 = vand.u32 %v1670, 4294901760
        %2933 = vmatmul.mubr.f32.gmra.mrb[0].mxu0 %v2932
        %v2934 = vpop.f32.mrb[0].mxu0
        %v2935 = vadd.f32 %v2812, %v2934
        %v2936 = vpop.f32.mrb[0].mxu0
        %v2937 = vadd.f32 %v2814, %v2936
        %2938 = vmatprep.mubr.f32.mxu0 0.0
        %v2939 = vand.u32 %v1673, 4294901760
        %2940 = vmatmul.mubr.f32.gmra.mrb[0].mxu0 %v2939
        %v2941 = vpop.f32.mrb[0].mxu0
        %v2942 = vadd.f32 %v2821, %v2941
        %v2943 = vpop.f32.mrb[0].mxu0
        %v2944 = vadd.f32 %v2823, %v2943
        %2945 = vmatprep.mubr.f32.mxu0 0.0
        %v2946 = vand.u32 %v1676, 4294901760
        %2947 = vmatmul.mubr.f32.gmra.mrb[0].mxu0 %v2946
        %v2948 = vpop.f32.mrb[0].mxu0
        %v2949 = vadd.f32 %v2830, %v2948
        %v2950 = vpop.f32.mrb[0].mxu0
        %v2951 = vadd.f32 %v2832, %v2950
        %2952 = vmatprep.mubr.f32.mxu0 0.0
        %v2953 = vand.u32 %v1679, 4294901760
        %2954 = vmatmul.mubr.f32.gmra.mrb[0].mxu0 %v2953
        %v2955 = vpop.f32.mrb[0].mxu0
        %v2956 = vadd.f32 %v2839, %v2955
        %v2957 = vpop.f32.mrb[0].mxu0
        %v2958 = vadd.f32 %v2841, %v2957
        %2959 = vdwg.mxu0
        %v2960 = vand.u32 %v1627, 4294901760
        %2961 = vmatprep.subr.mxu0 %v2960
        %v2962 = vand.u32 %v1626, 4294901760
        %2963 = vmatpush1.msra.mxu0 %v2962
        %v2964 = vand.u32 %v1631, 4294901760
        %2965 = vmatprep.subr.mxu0 %v2964
        %v2966 = vand.u32 %v1630, 4294901760
        %2967 = vmatpush1.msra.mxu0 %v2966
        %v2968 = vand.u32 %v1635, 4294901760
        %2969 = vmatprep.subr.mxu0 %v2968
        %v2970 = vand.u32 %v1634, 4294901760
        %2971 = vmatpush1.msra.mxu0 %v2970
        %v2972 = vand.u32 %v1639, 4294901760
        %2973 = vmatprep.subr.mxu0 %v2972
        %v2974 = vand.u32 %v1638, 4294901760
        %2975 = vmatpush1.msra.mxu0 %v2974
        %2976 = vmatprep.subr.mxu0 0.0
        %2977 = vmatpush1.msra.mxu0 0.0
        %2978 = vmatprep.subr.mxu0 0.0
        %2979 = vmatpush1.msra.mxu0 0.0
        %2980 = vmatprep.subr.mxu0 0.0
        %2981 = vmatpush1.msra.mxu0 0.0
        %2982 = vmatprep.subr.mxu0 0.0
        %2983 = vmatpush1.msra.mxu0 0.0
        %2984 = vmatprep.subr.mxu0 0.0
        %2985 = vmatpush1.msra.mxu0 0.0
        %2986 = vmatprep.subr.mxu0 0.0
        %2987 = vmatpush1.msra.mxu0 0.0
        %2988 = vmatprep.subr.mxu0 0.0
        %2989 = vmatpush1.msra.mxu0 0.0
        %2990 = vmatprep.subr.mxu0 0.0
        %2991 = vmatpush1.msra.mxu0 0.0
        %2992 = vmatprep.subr.mxu0 0.0
        %2993 = vmatpush1.msra.mxu0 0.0
        %2994 = vmatprep.subr.mxu0 0.0
        %2995 = vmatpush1.msra.mxu0 0.0
        %2996 = vmatprep.subr.mxu0 0.0
        %2997 = vmatpush1.msra.mxu0 0.0
        %2998 = vmatprep.subr.mxu0 0.0
        %2999 = vmatpush1.msra.mxu0 0.0
        %3000 = vmatprep.subr.mxu0 0.0
        %3001 = vmatpush1.msra.mxu0 0.0
        %3002 = vmatprep.subr.mxu0 0.0
        %3003 = vmatpush1.msra.mxu0 0.0
        %3004 = vmatprep.subr.mxu0 0.0
        %3005 = vmatpush1.msra.mxu0 0.0
        %3006 = vmatprep.subr.mxu0 0.0
        %3007 = vmatpush1.msra.mxu0 0.0
        %3008 = vmatprep.subr.mxu0 0.0
        %3009 = vmatpush1.msra.mxu0 0.0
        %3010 = vmatprep.subr.mxu0 0.0
        %3011 = vmatpush1.msra.mxu0 0.0
        %3012 = vmatprep.subr.mxu0 0.0
        %3013 = vmatpush1.msra.mxu0 0.0
        %3014 = vmatprep.subr.mxu0 0.0
        %3015 = vmatpush1.msra.mxu0 0.0
        %3016 = vmatprep.subr.mxu0 0.0
        %3017 = vmatpush1.msra.mxu0 0.0
        %3018 = vmatprep.subr.mxu0 0.0
        %3019 = vmatpush1.msra.mxu0 0.0
        %3020 = vmatprep.subr.mxu0 0.0
        %3021 = vmatpush1.msra.mxu0 0.0
        %3022 = vmatprep.subr.mxu0 0.0
        %3023 = vmatpush1.msra.mxu0 0.0
        %3024 = vmatprep.subr.mxu0 0.0
        %3025 = vmatpush1.msra.mxu0 0.0
        %3026 = vmatprep.subr.mxu0 0.0
        %3027 = vmatpush1.msra.mxu0 0.0
        %3028 = vmatprep.subr.mxu0 0.0
        %3029 = vmatpush1.msra.mxu0 0.0
        %3030 = vmatprep.subr.mxu0 0.0
        %3031 = vmatpush1.msra.mxu0 0.0
        %3032 = vmatprep.mubr.f32.mxu0 0.0
        %v3033 = vand.u32 %v1670, 4294901760
        %3034 = vmatmul.mubr.f32.gmra.mrb[0].mxu0 %v3033
        %v3035 = vpop.f32.mrb[0].mxu0
        %v3036 = vadd.f32 %v2935, %v3035
        %v3037 = vpop.f32.mrb[0].mxu0
        %v3038 = vadd.f32 %v2937, %v3037
        %3039 = vmatprep.mubr.f32.mxu0 0.0
        %v3040 = vand.u32 %v1673, 4294901760
        %3041 = vmatmul.mubr.f32.gmra.mrb[0].mxu0 %v3040
        %v3042 = vpop.f32.mrb[0].mxu0
        %v3043 = vadd.f32 %v2942, %v3042
        %v3044 = vpop.f32.mrb[0].mxu0
        %v3045 = vadd.f32 %v2944, %v3044
        %3046 = vmatprep.mubr.f32.mxu0 0.0
        %v3047 = vand.u32 %v1676, 4294901760
        %3048 = vmatmul.mubr.f32.gmra.mrb[0].mxu0 %v3047
        %v3049 = vpop.f32.mrb[0].mxu0
        %v3050 = vadd.f32 %v2949, %v3049
        %v3051 = vpop.f32.mrb[0].mxu0
        %v3052 = vadd.f32 %v2951, %v3051
        %3053 = vmatprep.mubr.f32.mxu0 0.0
        %v3054 = vand.u32 %v1679, 4294901760
        %3055 = vmatmul.mubr.f32.gmra.mrb[0].mxu0 %v3054
        %v3056 = vpop.f32.mrb[0].mxu0
        %v3057 = vadd.f32 %v2956, %v3056
        %v3058 = vpop.f32.mrb[0].mxu0
        %v3059 = vadd.f32 %v2958, %v3058
        %3060 = vdwg.mxu0
        %v3061 = vtanh.pop %v2346
        %v3062 = vtanh.pop %v2348
        %v3063 = vtanh.pop %v3036
        %v3064 = vtanh.pop %v3038
        %v3065 = vtanh.pop %v2353
        %v3066 = vtanh.pop %v2355
        %v3067 = vtanh.pop %v3043
        %v3068 = vtanh.pop %v3045
        %v3069 = vtanh.pop %v2360
        %v3070 = vtanh.pop %v2362
        %v3071 = vtanh.pop %v3050
        %v3072 = vtanh.pop %v3052
        %v3073 = vtanh.pop %v2367
        %v3074 = vtanh.pop %v2369
        %v3075 = vtanh.pop %v3057
        %v3076 = vtanh.pop %v3059
        %v3077 = vld [vmem:[%s5] sm:$0xf]
        %v3078 = vld [vmem:[%s6] sm:$0xf]
        %3080 = vset.pattern.permute.xlu0 0
        %3081 = vperm.xlu0 %3080, %v3078
        %v3082 = vpop.permute.xlu0 %3081
        %v3085 = vsel %vm1668, %v3077, 0
        %v3087 = vand.u32 %v3062, 4294901760
        %3088 = vmatprep.subr.mxu0 %v3087
        %v3089 = vand.u32 %v3061, 4294901760
        %3090 = vmatpush1.msra.mxu0 %v3089
        %v3091 = vand.u32 %v3066, 4294901760
        %3092 = vmatprep.subr.mxu0 %v3091
        %v3093 = vand.u32 %v3065, 4294901760
        %3094 = vmatpush1.msra.mxu0 %v3093
        %v3095 = vand.u32 %v3070, 4294901760
        %3096 = vmatprep.subr.mxu0 %v3095
        %v3097 = vand.u32 %v3069, 4294901760
        %3098 = vmatpush1.msra.mxu0 %v3097
        %v3099 = vand.u32 %v3074, 4294901760
        %3100 = vmatprep.subr.mxu0 %v3099
        %v3101 = vand.u32 %v3073, 4294901760
        %3102 = vmatpush1.msra.mxu0 %v3101
        %3103 = vmatprep.subr.mxu0 0.0
        %3104 = vmatpush1.msra.mxu0 0.0
        %3105 = vmatprep.subr.mxu0 0.0
        %3106 = vmatpush1.msra.mxu0 0.0
        %3107 = vmatprep.subr.mxu0 0.0
        %3108 = vmatpush1.msra.mxu0 0.0
        %3109 = vmatprep.subr.mxu0 0.0
        %3110 = vmatpush1.msra.mxu0 0.0
        %3111 = vmatprep.subr.mxu0 0.0
        %3112 = vmatpush1.msra.mxu0 0.0
        %3113 = vmatprep.subr.mxu0 0.0
        %3114 = vmatpush1.msra.mxu0 0.0
        %3115 = vmatprep.subr.mxu0 0.0
        %3116 = vmatpush1.msra.mxu0 0.0
        %3117 = vmatprep.subr.mxu0 0.0
        %3118 = vmatpush1.msra.mxu0 0.0
        %3119 = vmatprep.subr.mxu0 0.0
        %3120 = vmatpush1.msra.mxu0 0.0
        %3121 = vmatprep.subr.mxu0 0.0
        %3122 = vmatpush1.msra.mxu0 0.0
        %3123 = vmatprep.subr.mxu0 0.0
        %3124 = vmatpush1.msra.mxu0 0.0
        %3125 = vmatprep.subr.mxu0 0.0
        %3126 = vmatpush1.msra.mxu0 0.0
        %3127 = vmatprep.subr.mxu0 0.0
        %3128 = vmatpush1.msra.mxu0 0.0
        %3129 = vmatprep.subr.mxu0 0.0
        %3130 = vmatpush1.msra.mxu0 0.0
        %3131 = vmatprep.subr.mxu0 0.0
        %3132 = vmatpush1.msra.mxu0 0.0
        %3133 = vmatprep.subr.mxu0 0.0
        %3134 = vmatpush1.msra.mxu0 0.0
        %3135 = vmatprep.subr.mxu0 0.0
        %3136 = vmatpush1.msra.mxu0 0.0
        %3137 = vmatprep.subr.mxu0 0.0
        %3138 = vmatpush1.msra.mxu0 0.0
        %3139 = vmatprep.subr.mxu0 0.0
        %3140 = vmatpush1.msra.mxu0 0.0
        %3141 = vmatprep.subr.mxu0 0.0
        %3142 = vmatpush1.msra.mxu0 0.0
        %3143 = vmatprep.subr.mxu0 0.0
        %3144 = vmatpush1.msra.mxu0 0.0
        %3145 = vmatprep.subr.mxu0 0.0
        %3146 = vmatpush1.msra.mxu0 0.0
        %3147 = vmatprep.subr.mxu0 0.0
        %3148 = vmatpush1.msra.mxu0 0.0
        %3149 = vmatprep.subr.mxu0 0.0
        %3150 = vmatpush1.msra.mxu0 0.0
        %3151 = vmatprep.subr.mxu0 0.0
        %3152 = vmatpush1.msra.mxu0 0.0
        %3153 = vmatprep.subr.mxu0 0.0
        %3154 = vmatpush1.msra.mxu0 0.0
        %3155 = vmatprep.subr.mxu0 0.0
        %3156 = vmatpush1.msra.mxu0 0.0
        %3157 = vmatprep.subr.mxu0 0.0
        %3158 = vmatpush1.msra.mxu0 0.0
        %3159 = vmatprep.mubr.f32.mxu0 0.0
        %v3160 = vand.u32 %v3085, 4294901760
        %v3161 = vsub.f32 %v3085, %v3160
        %v3162 = vand.u32 %v3161, 4294901760
        %v3163 = vsub.f32 %v3161, %v3162
        %v3164 = vand.u32 %v3163, 4294901760
        %3165 = vmatmul.mubr.f32.gmra.mrb[0].mxu0 %v3164
        %v3166 = vpop.f32.mrb[0].mxu0
        %v3167 = vadd.f32 %v3082, %v3166
        %v3168 = vpop.f32.mrb[0].mxu0
        %v3169 = vadd.f32 %v3082, %v3168
        %3170 = vdwg.mxu0
        %v3171 = vand.u32 %v3062, 4294901760
        %v3172 = vsub.f32 %v3062, %v3171
        %v3173 = vand.u32 %v3172, 4294901760
        %v3174 = vsub.f32 %v3172, %v3173
        %v3175 = vand.u32 %v3174, 4294901760
        %3176 = vmatprep.subr.mxu0 %v3175
        %v3177 = vand.u32 %v3061, 4294901760
        %v3178 = vsub.f32 %v3061, %v3177
        %v3179 = vand.u32 %v3178, 4294901760
        %v3180 = vsub.f32 %v3178, %v3179
        %v3181 = vand.u32 %v3180, 4294901760
        %3182 = vmatpush1.msra.mxu0 %v3181
        %v3183 = vand.u32 %v3066, 4294901760
        %v3184 = vsub.f32 %v3066, %v3183
        %v3185 = vand.u32 %v3184, 4294901760
        %v3186 = vsub.f32 %v3184, %v3185
        %v3187 = vand.u32 %v3186, 4294901760
        %3188 = vmatprep.subr.mxu0 %v3187
        %v3189 = vand.u32 %v3065, 4294901760
        %v3190 = vsub.f32 %v3065, %v3189
        %v3191 = vand.u32 %v3190, 4294901760
        %v3192 = vsub.f32 %v3190, %v3191
        %v3193 = vand.u32 %v3192, 4294901760
        %3194 = vmatpush1.msra.mxu0 %v3193
        %v3195 = vand.u32 %v3070, 4294901760
        %v3196 = vsub.f32 %v3070, %v3195
        %v3197 = vand.u32 %v3196, 4294901760
        %v3198 = vsub.f32 %v3196, %v3197
        %v3199 = vand.u32 %v3198, 4294901760
        %3200 = vmatprep.subr.mxu0 %v3199
        %v3201 = vand.u32 %v3069, 4294901760
        %v3202 = vsub.f32 %v3069, %v3201
        %v3203 = vand.u32 %v3202, 4294901760
        %v3204 = vsub.f32 %v3202, %v3203
        %v3205 = vand.u32 %v3204, 4294901760
        %3206 = vmatpush1.msra.mxu0 %v3205
        %v3207 = vand.u32 %v3074, 4294901760
        %v3208 = vsub.f32 %v3074, %v3207
        %v3209 = vand.u32 %v3208, 4294901760
        %v3210 = vsub.f32 %v3208, %v3209
        %v3211 = vand.u32 %v3210, 4294901760
        %3212 = vmatprep.subr.mxu0 %v3211
        %v3213 = vand.u32 %v3073, 4294901760
        %v3214 = vsub.f32 %v3073, %v3213
        %v3215 = vand.u32 %v3214, 4294901760
        %v3216 = vsub.f32 %v3214, %v3215
        %v3217 = vand.u32 %v3216, 4294901760
        %3218 = vmatpush1.msra.mxu0 %v3217
        %3219 = vmatprep.subr.mxu0 0.0
        %3220 = vmatpush1.msra.mxu0 0.0
        %3221 = vmatprep.subr.mxu0 0.0
        %3222 = vmatpush1.msra.mxu0 0.0
        %3223 = vmatprep.subr.mxu0 0.0
        %3224 = vmatpush1.msra.mxu0 0.0
        %3225 = vmatprep.subr.mxu0 0.0
        %3226 = vmatpush1.msra.mxu0 0.0
        %3227 = vmatprep.subr.mxu0 0.0
        %3228 = vmatpush1.msra.mxu0 0.0
        %3229 = vmatprep.subr.mxu0 0.0
        %3230 = vmatpush1.msra.mxu0 0.0
        %3231 = vmatprep.subr.mxu0 0.0
        %3232 = vmatpush1.msra.mxu0 0.0
        %3233 = vmatprep.subr.mxu0 0.0
        %3234 = vmatpush1.msra.mxu0 0.0
        %3235 = vmatprep.subr.mxu0 0.0
        %3236 = vmatpush1.msra.mxu0 0.0
        %3237 = vmatprep.subr.mxu0 0.0
        %3238 = vmatpush1.msra.mxu0 0.0
        %3239 = vmatprep.subr.mxu0 0.0
        %3240 = vmatpush1.msra.mxu0 0.0
        %3241 = vmatprep.subr.mxu0 0.0
        %3242 = vmatpush1.msra.mxu0 0.0
        %3243 = vmatprep.subr.mxu0 0.0
        %3244 = vmatpush1.msra.mxu0 0.0
        %3245 = vmatprep.subr.mxu0 0.0
        %3246 = vmatpush1.msra.mxu0 0.0
        %3247 = vmatprep.subr.mxu0 0.0
        %3248 = vmatpush1.msra.mxu0 0.0
        %3249 = vmatprep.subr.mxu0 0.0
        %3250 = vmatpush1.msra.mxu0 0.0
        %3251 = vmatprep.subr.mxu0 0.0
        %3252 = vmatpush1.msra.mxu0 0.0
        %3253 = vmatprep.subr.mxu0 0.0
        %3254 = vmatpush1.msra.mxu0 0.0
        %3255 = vmatprep.subr.mxu0 0.0
        %3256 = vmatpush1.msra.mxu0 0.0
        %3257 = vmatprep.subr.mxu0 0.0
        %3258 = vmatpush1.msra.mxu0 0.0
        %3259 = vmatprep.subr.mxu0 0.0
        %3260 = vmatpush1.msra.mxu0 0.0
        %3261 = vmatprep.subr.mxu0 0.0
        %3262 = vmatpush1.msra.mxu0 0.0
        %3263 = vmatprep.subr.mxu0 0.0
        %3264 = vmatpush1.msra.mxu0 0.0
        %3265 = vmatprep.subr.mxu0 0.0
        %3266 = vmatpush1.msra.mxu0 0.0
        %3267 = vmatprep.subr.mxu0 0.0
        %3268 = vmatpush1.msra.mxu0 0.0
        %3269 = vmatprep.subr.mxu0 0.0
        %3270 = vmatpush1.msra.mxu0 0.0
        %3271 = vmatprep.subr.mxu0 0.0
        %3272 = vmatpush1.msra.mxu0 0.0
        %3273 = vmatprep.subr.mxu0 0.0
        %3274 = vmatpush1.msra.mxu0 0.0
        %3275 = vmatprep.mubr.f32.mxu0 0.0
        %v3276 = vand.u32 %v3085, 4294901760
        %3277 = vmatmul.mubr.f32.gmra.mrb[0].mxu0 %v3276
        %v3278 = vpop.f32.mrb[0].mxu0
        %v3279 = vadd.f32 %v3167, %v3278
        %v3280 = vpop.f32.mrb[0].mxu0
        %v3281 = vadd.f32 %v3169, %v3280
        %3282 = vdwg.mxu0
        %v3283 = vand.u32 %v3062, 4294901760
        %v3284 = vsub.f32 %v3062, %v3283
        %3285 = vmatprep.subr.mxu0 %v3284
        %v3286 = vand.u32 %v3061, 4294901760
        %v3287 = vsub.f32 %v3061, %v3286
        %3288 = vmatpush1.msra.mxu0 %v3287
        %v3289 = vand.u32 %v3066, 4294901760
        %v3290 = vsub.f32 %v3066, %v3289
        %3291 = vmatprep.subr.mxu0 %v3290
        %v3292 = vand.u32 %v3065, 4294901760
        %v3293 = vsub.f32 %v3065, %v3292
        %3294 = vmatpush1.msra.mxu0 %v3293
        %v3295 = vand.u32 %v3070, 4294901760
        %v3296 = vsub.f32 %v3070, %v3295
        %3297 = vmatprep.subr.mxu0 %v3296
        %v3298 = vand.u32 %v3069, 4294901760
        %v3299 = vsub.f32 %v3069, %v3298
        %3300 = vmatpush1.msra.mxu0 %v3299
        %v3301 = vand.u32 %v3074, 4294901760
        %v3302 = vsub.f32 %v3074, %v3301
        %3303 = vmatprep.subr.mxu0 %v3302
        %v3304 = vand.u32 %v3073, 4294901760
        %v3305 = vsub.f32 %v3073, %v3304
        %3306 = vmatpush1.msra.mxu0 %v3305
        %3307 = vmatprep.subr.mxu0 0.0
        %3308 = vmatpush1.msra.mxu0 0.0
        %3309 = vmatprep.subr.mxu0 0.0
        %3310 = vmatpush1.msra.mxu0 0.0
        %3311 = vmatprep.subr.mxu0 0.0
        %3312 = vmatpush1.msra.mxu0 0.0
        %3313 = vmatprep.subr.mxu0 0.0
        %3314 = vmatpush1.msra.mxu0 0.0
        %3315 = vmatprep.subr.mxu0 0.0
        %3316 = vmatpush1.msra.mxu0 0.0
        %3317 = vmatprep.subr.mxu0 0.0
        %3318 = vmatpush1.msra.mxu0 0.0
        %3319 = vmatprep.subr.mxu0 0.0
        %3320 = vmatpush1.msra.mxu0 0.0
        %3321 = vmatprep.subr.mxu0 0.0
        %3322 = vmatpush1.msra.mxu0 0.0
        %3323 = vmatprep.subr.mxu0 0.0
        %3324 = vmatpush1.msra.mxu0 0.0
        %3325 = vmatprep.subr.mxu0 0.0
        %3326 = vmatpush1.msra.mxu0 0.0
        %3327 = vmatprep.subr.mxu0 0.0
        %3328 = vmatpush1.msra.mxu0 0.0
        %3329 = vmatprep.subr.mxu0 0.0
        %3330 = vmatpush1.msra.mxu0 0.0
        %3331 = vmatprep.subr.mxu0 0.0
        %3332 = vmatpush1.msra.mxu0 0.0
        %3333 = vmatprep.subr.mxu0 0.0
        %3334 = vmatpush1.msra.mxu0 0.0
        %3335 = vmatprep.subr.mxu0 0.0
        %3336 = vmatpush1.msra.mxu0 0.0
        %3337 = vmatprep.subr.mxu0 0.0
        %3338 = vmatpush1.msra.mxu0 0.0
        %3339 = vmatprep.subr.mxu0 0.0
        %3340 = vmatpush1.msra.mxu0 0.0
        %3341 = vmatprep.subr.mxu0 0.0
        %3342 = vmatpush1.msra.mxu0 0.0
        %3343 = vmatprep.subr.mxu0 0.0
        %3344 = vmatpush1.msra.mxu0 0.0
        %3345 = vmatprep.subr.mxu0 0.0
        %3346 = vmatpush1.msra.mxu0 0.0
        %3347 = vmatprep.subr.mxu0 0.0
        %3348 = vmatpush1.msra.mxu0 0.0
        %3349 = vmatprep.subr.mxu0 0.0
        %3350 = vmatpush1.msra.mxu0 0.0
        %3351 = vmatprep.subr.mxu0 0.0
        %3352 = vmatpush1.msra.mxu0 0.0
        %3353 = vmatprep.subr.mxu0 0.0
        %3354 = vmatpush1.msra.mxu0 0.0
        %3355 = vmatprep.subr.mxu0 0.0
        %3356 = vmatpush1.msra.mxu0 0.0
        %3357 = vmatprep.subr.mxu0 0.0
        %3358 = vmatpush1.msra.mxu0 0.0
        %3359 = vmatprep.subr.mxu0 0.0
        %3360 = vmatpush1.msra.mxu0 0.0
        %3361 = vmatprep.subr.mxu0 0.0
        %3362 = vmatpush1.msra.mxu0 0.0
        %3363 = vmatprep.mubr.f32.mxu0 0.0
        %v3364 = vand.u32 %v3085, 4294901760
        %v3365 = vsub.f32 %v3085, %v3364
        %3366 = vmatmul.mubr.f32.gmra.mrb[0].mxu0 %v3365
        %v3367 = vpop.f32.mrb[0].mxu0
        %v3368 = vadd.f32 %v3279, %v3367
        %v3369 = vpop.f32.mrb[0].mxu0
        %v3370 = vadd.f32 %v3281, %v3369
        %3371 = vdwg.mxu0
        %v3372 = vand.u32 %v3062, 4294901760
        %3373 = vmatprep.subr.mxu0 %v3372
        %v3374 = vand.u32 %v3061, 4294901760
        %3375 = vmatpush1.msra.mxu0 %v3374
        %v3376 = vand.u32 %v3066, 4294901760
        %3377 = vmatprep.subr.mxu0 %v3376
        %v3378 = vand.u32 %v3065, 4294901760
        %3379 = vmatpush1.msra.mxu0 %v3378
        %v3380 = vand.u32 %v3070, 4294901760
        %3381 = vmatprep.subr.mxu0 %v3380
        %v3382 = vand.u32 %v3069, 4294901760
        %3383 = vmatpush1.msra.mxu0 %v3382
        %v3384 = vand.u32 %v3074, 4294901760
        %3385 = vmatprep.subr.mxu0 %v3384
        %v3386 = vand.u32 %v3073, 4294901760
        %3387 = vmatpush1.msra.mxu0 %v3386
        %3388 = vmatprep.subr.mxu0 0.0
        %3389 = vmatpush1.msra.mxu0 0.0
        %3390 = vmatprep.subr.mxu0 0.0
        %3391 = vmatpush1.msra.mxu0 0.0
        %3392 = vmatprep.subr.mxu0 0.0
        %3393 = vmatpush1.msra.mxu0 0.0
        %3394 = vmatprep.subr.mxu0 0.0
        %3395 = vmatpush1.msra.mxu0 0.0
        %3396 = vmatprep.subr.mxu0 0.0
        %3397 = vmatpush1.msra.mxu0 0.0
        %3398 = vmatprep.subr.mxu0 0.0
        %3399 = vmatpush1.msra.mxu0 0.0
        %3400 = vmatprep.subr.mxu0 0.0
        %3401 = vmatpush1.msra.mxu0 0.0
        %3402 = vmatprep.subr.mxu0 0.0
        %3403 = vmatpush1.msra.mxu0 0.0
        %3404 = vmatprep.subr.mxu0 0.0
        %3405 = vmatpush1.msra.mxu0 0.0
        %3406 = vmatprep.subr.mxu0 0.0
        %3407 = vmatpush1.msra.mxu0 0.0
        %3408 = vmatprep.subr.mxu0 0.0
        %3409 = vmatpush1.msra.mxu0 0.0
        %3410 = vmatprep.subr.mxu0 0.0
        %3411 = vmatpush1.msra.mxu0 0.0
        %3412 = vmatprep.subr.mxu0 0.0
        %3413 = vmatpush1.msra.mxu0 0.0
        %3414 = vmatprep.subr.mxu0 0.0
        %3415 = vmatpush1.msra.mxu0 0.0
        %3416 = vmatprep.subr.mxu0 0.0
        %3417 = vmatpush1.msra.mxu0 0.0
        %3418 = vmatprep.subr.mxu0 0.0
        %3419 = vmatpush1.msra.mxu0 0.0
        %3420 = vmatprep.subr.mxu0 0.0
        %3421 = vmatpush1.msra.mxu0 0.0
        %3422 = vmatprep.subr.mxu0 0.0
        %3423 = vmatpush1.msra.mxu0 0.0
        %3424 = vmatprep.subr.mxu0 0.0
        %3425 = vmatpush1.msra.mxu0 0.0
        %3426 = vmatprep.subr.mxu0 0.0
        %3427 = vmatpush1.msra.mxu0 0.0
        %3428 = vmatprep.subr.mxu0 0.0
        %3429 = vmatpush1.msra.mxu0 0.0
        %3430 = vmatprep.subr.mxu0 0.0
        %3431 = vmatpush1.msra.mxu0 0.0
        %3432 = vmatprep.subr.mxu0 0.0
        %3433 = vmatpush1.msra.mxu0 0.0
        %3434 = vmatprep.subr.mxu0 0.0
        %3435 = vmatpush1.msra.mxu0 0.0
        %3436 = vmatprep.subr.mxu0 0.0
        %3437 = vmatpush1.msra.mxu0 0.0
        %3438 = vmatprep.subr.mxu0 0.0
        %3439 = vmatpush1.msra.mxu0 0.0
        %3440 = vmatprep.subr.mxu0 0.0
        %3441 = vmatpush1.msra.mxu0 0.0
        %3442 = vmatprep.subr.mxu0 0.0
        %3443 = vmatpush1.msra.mxu0 0.0
        %3444 = vmatprep.mubr.f32.mxu0 0.0
        %v3445 = vand.u32 %v3085, 4294901760
        %v3446 = vsub.f32 %v3085, %v3445
        %v3447 = vand.u32 %v3446, 4294901760
        %3448 = vmatmul.mubr.f32.gmra.mrb[0].mxu0 %v3447
        %v3449 = vpop.f32.mrb[0].mxu0
        %v3450 = vadd.f32 %v3368, %v3449
        %v3451 = vpop.f32.mrb[0].mxu0
        %v3452 = vadd.f32 %v3370, %v3451
        %3453 = vdwg.mxu0
        %v3454 = vand.u32 %v3062, 4294901760
        %v3455 = vsub.f32 %v3062, %v3454
        %v3456 = vand.u32 %v3455, 4294901760
        %3457 = vmatprep.subr.mxu0 %v3456
        %v3458 = vand.u32 %v3061, 4294901760
        %v3459 = vsub.f32 %v3061, %v3458
        %v3460 = vand.u32 %v3459, 4294901760
        %3461 = vmatpush1.msra.mxu0 %v3460
        %v3462 = vand.u32 %v3066, 4294901760
        %v3463 = vsub.f32 %v3066, %v3462
        %v3464 = vand.u32 %v3463, 4294901760
        %3465 = vmatprep.subr.mxu0 %v3464
        %v3466 = vand.u32 %v3065, 4294901760
        %v3467 = vsub.f32 %v3065, %v3466
        %v3468 = vand.u32 %v3467, 4294901760
        %3469 = vmatpush1.msra.mxu0 %v3468
        %v3470 = vand.u32 %v3070, 4294901760
        %v3471 = vsub.f32 %v3070, %v3470
        %v3472 = vand.u32 %v3471, 4294901760
        %3473 = vmatprep.subr.mxu0 %v3472
        %v3474 = vand.u32 %v3069, 4294901760
        %v3475 = vsub.f32 %v3069, %v3474
        %v3476 = vand.u32 %v3475, 4294901760
        %3477 = vmatpush1.msra.mxu0 %v3476
        %v3478 = vand.u32 %v3074, 4294901760
        %v3479 = vsub.f32 %v3074, %v3478
        %v3480 = vand.u32 %v3479, 4294901760
        %3481 = vmatprep.subr.mxu0 %v3480
        %v3482 = vand.u32 %v3073, 4294901760
        %v3483 = vsub.f32 %v3073, %v3482
        %v3484 = vand.u32 %v3483, 4294901760
        %3485 = vmatpush1.msra.mxu0 %v3484
        %3486 = vmatprep.subr.mxu0 0.0
        %3487 = vmatpush1.msra.mxu0 0.0
        %3488 = vmatprep.subr.mxu0 0.0
        %3489 = vmatpush1.msra.mxu0 0.0
        %3490 = vmatprep.subr.mxu0 0.0
        %3491 = vmatpush1.msra.mxu0 0.0
        %3492 = vmatprep.subr.mxu0 0.0
        %3493 = vmatpush1.msra.mxu0 0.0
        %3494 = vmatprep.subr.mxu0 0.0
        %3495 = vmatpush1.msra.mxu0 0.0
        %3496 = vmatprep.subr.mxu0 0.0
        %3497 = vmatpush1.msra.mxu0 0.0
        %3498 = vmatprep.subr.mxu0 0.0
        %3499 = vmatpush1.msra.mxu0 0.0
        %3500 = vmatprep.subr.mxu0 0.0
        %3501 = vmatpush1.msra.mxu0 0.0
        %3502 = vmatprep.subr.mxu0 0.0
        %3503 = vmatpush1.msra.mxu0 0.0
        %3504 = vmatprep.subr.mxu0 0.0
        %3505 = vmatpush1.msra.mxu0 0.0
        %3506 = vmatprep.subr.mxu0 0.0
        %3507 = vmatpush1.msra.mxu0 0.0
        %3508 = vmatprep.subr.mxu0 0.0
        %3509 = vmatpush1.msra.mxu0 0.0
        %3510 = vmatprep.subr.mxu0 0.0
        %3511 = vmatpush1.msra.mxu0 0.0
        %3512 = vmatprep.subr.mxu0 0.0
        %3513 = vmatpush1.msra.mxu0 0.0
        %3514 = vmatprep.subr.mxu0 0.0
        %3515 = vmatpush1.msra.mxu0 0.0
        %3516 = vmatprep.subr.mxu0 0.0
        %3517 = vmatpush1.msra.mxu0 0.0
        %3518 = vmatprep.subr.mxu0 0.0
        %3519 = vmatpush1.msra.mxu0 0.0
        %3520 = vmatprep.subr.mxu0 0.0
        %3521 = vmatpush1.msra.mxu0 0.0
        %3522 = vmatprep.subr.mxu0 0.0
        %3523 = vmatpush1.msra.mxu0 0.0
        %3524 = vmatprep.subr.mxu0 0.0
        %3525 = vmatpush1.msra.mxu0 0.0
        %3526 = vmatprep.subr.mxu0 0.0
        %3527 = vmatpush1.msra.mxu0 0.0
        %3528 = vmatprep.subr.mxu0 0.0
        %3529 = vmatpush1.msra.mxu0 0.0
        %3530 = vmatprep.subr.mxu0 0.0
        %3531 = vmatpush1.msra.mxu0 0.0
        %3532 = vmatprep.subr.mxu0 0.0
        %3533 = vmatpush1.msra.mxu0 0.0
        %3534 = vmatprep.subr.mxu0 0.0
        %3535 = vmatpush1.msra.mxu0 0.0
        %3536 = vmatprep.subr.mxu0 0.0
        %3537 = vmatpush1.msra.mxu0 0.0
        %3538 = vmatprep.subr.mxu0 0.0
        %3539 = vmatpush1.msra.mxu0 0.0
        %3540 = vmatprep.subr.mxu0 0.0
        %3541 = vmatpush1.msra.mxu0 0.0
        %3542 = vmatprep.mubr.f32.mxu0 0.0
        %v3543 = vand.u32 %v3085, 4294901760
        %3544 = vmatmul.mubr.f32.gmra.mrb[0].mxu0 %v3543
        %v3545 = vpop.f32.mrb[0].mxu0
        %v3546 = vadd.f32 %v3450, %v3545
        %v3547 = vpop.f32.mrb[0].mxu0
        %v3548 = vadd.f32 %v3452, %v3547
        %3549 = vdwg.mxu0
        %v3550 = vand.u32 %v3062, 4294901760
        %3551 = vmatprep.subr.mxu0 %v3550
        %v3552 = vand.u32 %v3061, 4294901760
        %3553 = vmatpush1.msra.mxu0 %v3552
        %v3554 = vand.u32 %v3066, 4294901760
        %3555 = vmatprep.subr.mxu0 %v3554
        %v3556 = vand.u32 %v3065, 4294901760
        %3557 = vmatpush1.msra.mxu0 %v3556
        %v3558 = vand.u32 %v3070, 4294901760
        %3559 = vmatprep.subr.mxu0 %v3558
        %v3560 = vand.u32 %v3069, 4294901760
        %3561 = vmatpush1.msra.mxu0 %v3560
        %v3562 = vand.u32 %v3074, 4294901760
        %3563 = vmatprep.subr.mxu0 %v3562
        %v3564 = vand.u32 %v3073, 4294901760
        %3565 = vmatpush1.msra.mxu0 %v3564
        %3566 = vmatprep.subr.mxu0 0.0
        %3567 = vmatpush1.msra.mxu0 0.0
        %3568 = vmatprep.subr.mxu0 0.0
        %3569 = vmatpush1.msra.mxu0 0.0
        %3570 = vmatprep.subr.mxu0 0.0
        %3571 = vmatpush1.msra.mxu0 0.0
        %3572 = vmatprep.subr.mxu0 0.0
        %3573 = vmatpush1.msra.mxu0 0.0
        %3574 = vmatprep.subr.mxu0 0.0
        %3575 = vmatpush1.msra.mxu0 0.0
        %3576 = vmatprep.subr.mxu0 0.0
        %3577 = vmatpush1.msra.mxu0 0.0
        %3578 = vmatprep.subr.mxu0 0.0
        %3579 = vmatpush1.msra.mxu0 0.0
        %3580 = vmatprep.subr.mxu0 0.0
        %3581 = vmatpush1.msra.mxu0 0.0
        %3582 = vmatprep.subr.mxu0 0.0
        %3583 = vmatpush1.msra.mxu0 0.0
        %3584 = vmatprep.subr.mxu0 0.0
        %3585 = vmatpush1.msra.mxu0 0.0
        %3586 = vmatprep.subr.mxu0 0.0
        %3587 = vmatpush1.msra.mxu0 0.0
        %3588 = vmatprep.subr.mxu0 0.0
        %3589 = vmatpush1.msra.mxu0 0.0
        %3590 = vmatprep.subr.mxu0 0.0
        %3591 = vmatpush1.msra.mxu0 0.0
        %3592 = vmatprep.subr.mxu0 0.0
        %3593 = vmatpush1.msra.mxu0 0.0
        %3594 = vmatprep.subr.mxu0 0.0
        %3595 = vmatpush1.msra.mxu0 0.0
        %3596 = vmatprep.subr.mxu0 0.0
        %3597 = vmatpush1.msra.mxu0 0.0
        %3598 = vmatprep.subr.mxu0 0.0
        %3599 = vmatpush1.msra.mxu0 0.0
        %3600 = vmatprep.subr.mxu0 0.0
        %3601 = vmatpush1.msra.mxu0 0.0
        %3602 = vmatprep.subr.mxu0 0.0
        %3603 = vmatpush1.msra.mxu0 0.0
        %3604 = vmatprep.subr.mxu0 0.0
        %3605 = vmatpush1.msra.mxu0 0.0
        %3606 = vmatprep.subr.mxu0 0.0
        %3607 = vmatpush1.msra.mxu0 0.0
        %3608 = vmatprep.subr.mxu0 0.0
        %3609 = vmatpush1.msra.mxu0 0.0
        %3610 = vmatprep.subr.mxu0 0.0
        %3611 = vmatpush1.msra.mxu0 0.0
        %3612 = vmatprep.subr.mxu0 0.0
        %3613 = vmatpush1.msra.mxu0 0.0
        %3614 = vmatprep.subr.mxu0 0.0
        %3615 = vmatpush1.msra.mxu0 0.0
        %3616 = vmatprep.subr.mxu0 0.0
        %3617 = vmatpush1.msra.mxu0 0.0
        %3618 = vmatprep.subr.mxu0 0.0
        %3619 = vmatpush1.msra.mxu0 0.0
        %3620 = vmatprep.subr.mxu0 0.0
        %3621 = vmatpush1.msra.mxu0 0.0
        %3622 = vmatprep.mubr.f32.mxu0 0.0
        %v3623 = vand.u32 %v3085, 4294901760
        %3624 = vmatmul.mubr.f32.gmra.mrb[0].mxu0 %v3623
        %v3625 = vpop.f32.mrb[0].mxu0
        %v3626 = vadd.f32 %v3546, %v3625
        %v3627 = vpop.f32.mrb[0].mxu0
        %v3628 = vadd.f32 %v3548, %v3627
        %3629 = vdwg.mxu0
        %v3630 = vand.u32 %v3064, 4294901760
        %3631 = vmatprep.subr.mxu0 %v3630
        %v3632 = vand.u32 %v3063, 4294901760
        %3633 = vmatpush1.msra.mxu0 %v3632
        %v3634 = vand.u32 %v3068, 4294901760
        %3635 = vmatprep.subr.mxu0 %v3634
        %v3636 = vand.u32 %v3067, 4294901760
        %3637 = vmatpush1.msra.mxu0 %v3636
        %v3638 = vand.u32 %v3072, 4294901760
        %3639 = vmatprep.subr.mxu0 %v3638
        %v3640 = vand.u32 %v3071, 4294901760
        %3641 = vmatpush1.msra.mxu0 %v3640
        %v3642 = vand.u32 %v3076, 4294901760
        %3643 = vmatprep.subr.mxu0 %v3642
        %v3644 = vand.u32 %v3075, 4294901760
        %3645 = vmatpush1.msra.mxu0 %v3644
        %3646 = vmatprep.subr.mxu0 0.0
        %3647 = vmatpush1.msra.mxu0 0.0
        %3648 = vmatprep.subr.mxu0 0.0
        %3649 = vmatpush1.msra.mxu0 0.0
        %3650 = vmatprep.subr.mxu0 0.0
        %3651 = vmatpush1.msra.mxu0 0.0
        %3652 = vmatprep.subr.mxu0 0.0
        %3653 = vmatpush1.msra.mxu0 0.0
        %3654 = vmatprep.subr.mxu0 0.0
        %3655 = vmatpush1.msra.mxu0 0.0
        %3656 = vmatprep.subr.mxu0 0.0
        %3657 = vmatpush1.msra.mxu0 0.0
        %3658 = vmatprep.subr.mxu0 0.0
        %3659 = vmatpush1.msra.mxu0 0.0
        %3660 = vmatprep.subr.mxu0 0.0
        %3661 = vmatpush1.msra.mxu0 0.0
        %3662 = vmatprep.subr.mxu0 0.0
        %3663 = vmatpush1.msra.mxu0 0.0
        %3664 = vmatprep.subr.mxu0 0.0
        %3665 = vmatpush1.msra.mxu0 0.0
        %3666 = vmatprep.subr.mxu0 0.0
        %3667 = vmatpush1.msra.mxu0 0.0
        %3668 = vmatprep.subr.mxu0 0.0
        %3669 = vmatpush1.msra.mxu0 0.0
        %3670 = vmatprep.subr.mxu0 0.0
        %3671 = vmatpush1.msra.mxu0 0.0
        %3672 = vmatprep.subr.mxu0 0.0
        %3673 = vmatpush1.msra.mxu0 0.0
        %3674 = vmatprep.subr.mxu0 0.0
        %3675 = vmatpush1.msra.mxu0 0.0
        %3676 = vmatprep.subr.mxu0 0.0
        %3677 = vmatpush1.msra.mxu0 0.0
        %3678 = vmatprep.subr.mxu0 0.0
        %3679 = vmatpush1.msra.mxu0 0.0
        %3680 = vmatprep.subr.mxu0 0.0
        %3681 = vmatpush1.msra.mxu0 0.0
        %3682 = vmatprep.subr.mxu0 0.0
        %3683 = vmatpush1.msra.mxu0 0.0
        %3684 = vmatprep.subr.mxu0 0.0
        %3685 = vmatpush1.msra.mxu0 0.0
        %3686 = vmatprep.subr.mxu0 0.0
        %3687 = vmatpush1.msra.mxu0 0.0
        %3688 = vmatprep.subr.mxu0 0.0
        %3689 = vmatpush1.msra.mxu0 0.0
        %3690 = vmatprep.subr.mxu0 0.0
        %3691 = vmatpush1.msra.mxu0 0.0
        %3692 = vmatprep.subr.mxu0 0.0
        %3693 = vmatpush1.msra.mxu0 0.0
        %3694 = vmatprep.subr.mxu0 0.0
        %3695 = vmatpush1.msra.mxu0 0.0
        %3696 = vmatprep.subr.mxu0 0.0
        %3697 = vmatpush1.msra.mxu0 0.0
        %3698 = vmatprep.subr.mxu0 0.0
        %3699 = vmatpush1.msra.mxu0 0.0
        %3700 = vmatprep.subr.mxu0 0.0
        %3701 = vmatpush1.msra.mxu0 0.0
        %3702 = vmatprep.mubr.f32.mxu0 0.0
        %v3703 = vand.u32 %v3085, 4294901760
        %v3704 = vsub.f32 %v3085, %v3703
        %v3705 = vand.u32 %v3704, 4294901760
        %v3706 = vsub.f32 %v3704, %v3705
        %v3707 = vand.u32 %v3706, 4294901760
        %3708 = vmatmul.mubr.f32.gmra.mrb[0].mxu0 %v3707
        %v3709 = vpop.f32.mrb[0].mxu0
        %v3710 = vadd.f32 %v3082, %v3709
        %v3711 = vpop.f32.mrb[0].mxu0
        %v3712 = vadd.f32 %v3082, %v3711
        %3713 = vdwg.mxu0
        %v3714 = vand.u32 %v3064, 4294901760
        %v3715 = vsub.f32 %v3064, %v3714
        %v3716 = vand.u32 %v3715, 4294901760
        %v3717 = vsub.f32 %v3715, %v3716
        %v3718 = vand.u32 %v3717, 4294901760
        %3719 = vmatprep.subr.mxu0 %v3718
        %v3720 = vand.u32 %v3063, 4294901760
        %v3721 = vsub.f32 %v3063, %v3720
        %v3722 = vand.u32 %v3721, 4294901760
        %v3723 = vsub.f32 %v3721, %v3722
        %v3724 = vand.u32 %v3723, 4294901760
        %3725 = vmatpush1.msra.mxu0 %v3724
        %v3726 = vand.u32 %v3068, 4294901760
        %v3727 = vsub.f32 %v3068, %v3726
        %v3728 = vand.u32 %v3727, 4294901760
        %v3729 = vsub.f32 %v3727, %v3728
        %v3730 = vand.u32 %v3729, 4294901760
        %3731 = vmatprep.subr.mxu0 %v3730
        %v3732 = vand.u32 %v3067, 4294901760
        %v3733 = vsub.f32 %v3067, %v3732
        %v3734 = vand.u32 %v3733, 4294901760
        %v3735 = vsub.f32 %v3733, %v3734
        %v3736 = vand.u32 %v3735, 4294901760
        %3737 = vmatpush1.msra.mxu0 %v3736
        %v3738 = vand.u32 %v3072, 4294901760
        %v3739 = vsub.f32 %v3072, %v3738
        %v3740 = vand.u32 %v3739, 4294901760
        %v3741 = vsub.f32 %v3739, %v3740
        %v3742 = vand.u32 %v3741, 4294901760
        %3743 = vmatprep.subr.mxu0 %v3742
        %v3744 = vand.u32 %v3071, 4294901760
        %v3745 = vsub.f32 %v3071, %v3744
        %v3746 = vand.u32 %v3745, 4294901760
        %v3747 = vsub.f32 %v3745, %v3746
        %v3748 = vand.u32 %v3747, 4294901760
        %3749 = vmatpush1.msra.mxu0 %v3748
        %v3750 = vand.u32 %v3076, 4294901760
        %v3751 = vsub.f32 %v3076, %v3750
        %v3752 = vand.u32 %v3751, 4294901760
        %v3753 = vsub.f32 %v3751, %v3752
        %v3754 = vand.u32 %v3753, 4294901760
        %3755 = vmatprep.subr.mxu0 %v3754
        %v3756 = vand.u32 %v3075, 4294901760
        %v3757 = vsub.f32 %v3075, %v3756
        %v3758 = vand.u32 %v3757, 4294901760
        %v3759 = vsub.f32 %v3757, %v3758
        %v3760 = vand.u32 %v3759, 4294901760
        %3761 = vmatpush1.msra.mxu0 %v3760
        %3762 = vmatprep.subr.mxu0 0.0
        %3763 = vmatpush1.msra.mxu0 0.0
        %3764 = vmatprep.subr.mxu0 0.0
        %3765 = vmatpush1.msra.mxu0 0.0
        %3766 = vmatprep.subr.mxu0 0.0
        %3767 = vmatpush1.msra.mxu0 0.0
        %3768 = vmatprep.subr.mxu0 0.0
        %3769 = vmatpush1.msra.mxu0 0.0
        %3770 = vmatprep.subr.mxu0 0.0
        %3771 = vmatpush1.msra.mxu0 0.0
        %3772 = vmatprep.subr.mxu0 0.0
        %3773 = vmatpush1.msra.mxu0 0.0
        %3774 = vmatprep.subr.mxu0 0.0
        %3775 = vmatpush1.msra.mxu0 0.0
        %3776 = vmatprep.subr.mxu0 0.0
        %3777 = vmatpush1.msra.mxu0 0.0
        %3778 = vmatprep.subr.mxu0 0.0
        %3779 = vmatpush1.msra.mxu0 0.0
        %3780 = vmatprep.subr.mxu0 0.0
        %3781 = vmatpush1.msra.mxu0 0.0
        %3782 = vmatprep.subr.mxu0 0.0
        %3783 = vmatpush1.msra.mxu0 0.0
        %3784 = vmatprep.subr.mxu0 0.0
        %3785 = vmatpush1.msra.mxu0 0.0
        %3786 = vmatprep.subr.mxu0 0.0
        %3787 = vmatpush1.msra.mxu0 0.0
        %3788 = vmatprep.subr.mxu0 0.0
        %3789 = vmatpush1.msra.mxu0 0.0
        %3790 = vmatprep.subr.mxu0 0.0
        %3791 = vmatpush1.msra.mxu0 0.0
        %3792 = vmatprep.subr.mxu0 0.0
        %3793 = vmatpush1.msra.mxu0 0.0
        %3794 = vmatprep.subr.mxu0 0.0
        %3795 = vmatpush1.msra.mxu0 0.0
        %3796 = vmatprep.subr.mxu0 0.0
        %3797 = vmatpush1.msra.mxu0 0.0
        %3798 = vmatprep.subr.mxu0 0.0
        %3799 = vmatpush1.msra.mxu0 0.0
        %3800 = vmatprep.subr.mxu0 0.0
        %3801 = vmatpush1.msra.mxu0 0.0
        %3802 = vmatprep.subr.mxu0 0.0
        %3803 = vmatpush1.msra.mxu0 0.0
        %3804 = vmatprep.subr.mxu0 0.0
        %3805 = vmatpush1.msra.mxu0 0.0
        %3806 = vmatprep.subr.mxu0 0.0
        %3807 = vmatpush1.msra.mxu0 0.0
        %3808 = vmatprep.subr.mxu0 0.0
        %3809 = vmatpush1.msra.mxu0 0.0
        %3810 = vmatprep.subr.mxu0 0.0
        %3811 = vmatpush1.msra.mxu0 0.0
        %3812 = vmatprep.subr.mxu0 0.0
        %3813 = vmatpush1.msra.mxu0 0.0
        %3814 = vmatprep.subr.mxu0 0.0
        %3815 = vmatpush1.msra.mxu0 0.0
        %3816 = vmatprep.subr.mxu0 0.0
        %3817 = vmatpush1.msra.mxu0 0.0
        %3818 = vmatprep.mubr.f32.mxu0 0.0
        %v3819 = vand.u32 %v3085, 4294901760
        %3820 = vmatmul.mubr.f32.gmra.mrb[0].mxu0 %v3819
        %v3821 = vpop.f32.mrb[0].mxu0
        %v3822 = vadd.f32 %v3710, %v3821
        %v3823 = vpop.f32.mrb[0].mxu0
        %v3824 = vadd.f32 %v3712, %v3823
        %3825 = vdwg.mxu0
        %v3826 = vand.u32 %v3064, 4294901760
        %v3827 = vsub.f32 %v3064, %v3826
        %3828 = vmatprep.subr.mxu0 %v3827
        %v3829 = vand.u32 %v3063, 4294901760
        %v3830 = vsub.f32 %v3063, %v3829
        %3831 = vmatpush1.msra.mxu0 %v3830
        %v3832 = vand.u32 %v3068, 4294901760
        %v3833 = vsub.f32 %v3068, %v3832
        %3834 = vmatprep.subr.mxu0 %v3833
        %v3835 = vand.u32 %v3067, 4294901760
        %v3836 = vsub.f32 %v3067, %v3835
        %3837 = vmatpush1.msra.mxu0 %v3836
        %v3838 = vand.u32 %v3072, 4294901760
        %v3839 = vsub.f32 %v3072, %v3838
        %3840 = vmatprep.subr.mxu0 %v3839
        %v3841 = vand.u32 %v3071, 4294901760
        %v3842 = vsub.f32 %v3071, %v3841
        %3843 = vmatpush1.msra.mxu0 %v3842
        %v3844 = vand.u32 %v3076, 4294901760
        %v3845 = vsub.f32 %v3076, %v3844
        %3846 = vmatprep.subr.mxu0 %v3845
        %v3847 = vand.u32 %v3075, 4294901760
        %v3848 = vsub.f32 %v3075, %v3847
        %3849 = vmatpush1.msra.mxu0 %v3848
        %3850 = vmatprep.subr.mxu0 0.0
        %3851 = vmatpush1.msra.mxu0 0.0
        %3852 = vmatprep.subr.mxu0 0.0
        %3853 = vmatpush1.msra.mxu0 0.0
        %3854 = vmatprep.subr.mxu0 0.0
        %3855 = vmatpush1.msra.mxu0 0.0
        %3856 = vmatprep.subr.mxu0 0.0
        %3857 = vmatpush1.msra.mxu0 0.0
        %3858 = vmatprep.subr.mxu0 0.0
        %3859 = vmatpush1.msra.mxu0 0.0
        %3860 = vmatprep.subr.mxu0 0.0
        %3861 = vmatpush1.msra.mxu0 0.0
        %3862 = vmatprep.subr.mxu0 0.0
        %3863 = vmatpush1.msra.mxu0 0.0
        %3864 = vmatprep.subr.mxu0 0.0
        %3865 = vmatpush1.msra.mxu0 0.0
        %3866 = vmatprep.subr.mxu0 0.0
        %3867 = vmatpush1.msra.mxu0 0.0
        %3868 = vmatprep.subr.mxu0 0.0
        %3869 = vmatpush1.msra.mxu0 0.0
        %3870 = vmatprep.subr.mxu0 0.0
        %3871 = vmatpush1.msra.mxu0 0.0
        %3872 = vmatprep.subr.mxu0 0.0
        %3873 = vmatpush1.msra.mxu0 0.0
        %3874 = vmatprep.subr.mxu0 0.0
        %3875 = vmatpush1.msra.mxu0 0.0
        %3876 = vmatprep.subr.mxu0 0.0
        %3877 = vmatpush1.msra.mxu0 0.0
        %3878 = vmatprep.subr.mxu0 0.0
        %3879 = vmatpush1.msra.mxu0 0.0
        %3880 = vmatprep.subr.mxu0 0.0
        %3881 = vmatpush1.msra.mxu0 0.0
        %3882 = vmatprep.subr.mxu0 0.0
        %3883 = vmatpush1.msra.mxu0 0.0
        %3884 = vmatprep.subr.mxu0 0.0
        %3885 = vmatpush1.msra.mxu0 0.0
        %3886 = vmatprep.subr.mxu0 0.0
        %3887 = vmatpush1.msra.mxu0 0.0
        %3888 = vmatprep.subr.mxu0 0.0
        %3889 = vmatpush1.msra.mxu0 0.0
        %3890 = vmatprep.subr.mxu0 0.0
        %3891 = vmatpush1.msra.mxu0 0.0
        %3892 = vmatprep.subr.mxu0 0.0
        %3893 = vmatpush1.msra.mxu0 0.0
        %3894 = vmatprep.subr.mxu0 0.0
        %3895 = vmatpush1.msra.mxu0 0.0
        %3896 = vmatprep.subr.mxu0 0.0
        %3897 = vmatpush1.msra.mxu0 0.0
        %3898 = vmatprep.subr.mxu0 0.0
        %3899 = vmatpush1.msra.mxu0 0.0
        %3900 = vmatprep.subr.mxu0 0.0
        %3901 = vmatpush1.msra.mxu0 0.0
        %3902 = vmatprep.subr.mxu0 0.0
        %3903 = vmatpush1.msra.mxu0 0.0
        %3904 = vmatprep.subr.mxu0 0.0
        %3905 = vmatpush1.msra.mxu0 0.0
        %3906 = vmatprep.mubr.f32.mxu0 0.0
        %v3907 = vand.u32 %v3085, 4294901760
        %v3908 = vsub.f32 %v3085, %v3907
        %3909 = vmatmul.mubr.f32.gmra.mrb[0].mxu0 %v3908
        %v3910 = vpop.f32.mrb[0].mxu0
        %v3911 = vadd.f32 %v3822, %v3910
        %v3912 = vpop.f32.mrb[0].mxu0
        %v3913 = vadd.f32 %v3824, %v3912
        %3914 = vdwg.mxu0
        %v3915 = vand.u32 %v3064, 4294901760
        %3916 = vmatprep.subr.mxu0 %v3915
        %v3917 = vand.u32 %v3063, 4294901760
        %3918 = vmatpush1.msra.mxu0 %v3917
        %v3919 = vand.u32 %v3068, 4294901760
        %3920 = vmatprep.subr.mxu0 %v3919
        %v3921 = vand.u32 %v3067, 4294901760
        %3922 = vmatpush1.msra.mxu0 %v3921
        %v3923 = vand.u32 %v3072, 4294901760
        %3924 = vmatprep.subr.mxu0 %v3923
        %v3925 = vand.u32 %v3071, 4294901760
        %3926 = vmatpush1.msra.mxu0 %v3925
        %v3927 = vand.u32 %v3076, 4294901760
        %3928 = vmatprep.subr.mxu0 %v3927
        %v3929 = vand.u32 %v3075, 4294901760
        %3930 = vmatpush1.msra.mxu0 %v3929
        %3931 = vmatprep.subr.mxu0 0.0
        %3932 = vmatpush1.msra.mxu0 0.0
        %3933 = vmatprep.subr.mxu0 0.0
        %3934 = vmatpush1.msra.mxu0 0.0
        %3935 = vmatprep.subr.mxu0 0.0
        %3936 = vmatpush1.msra.mxu0 0.0
        %3937 = vmatprep.subr.mxu0 0.0
        %3938 = vmatpush1.msra.mxu0 0.0
        %3939 = vmatprep.subr.mxu0 0.0
        %3940 = vmatpush1.msra.mxu0 0.0
        %3941 = vmatprep.subr.mxu0 0.0
        %3942 = vmatpush1.msra.mxu0 0.0
        %3943 = vmatprep.subr.mxu0 0.0
        %3944 = vmatpush1.msra.mxu0 0.0
        %3945 = vmatprep.subr.mxu0 0.0
        %3946 = vmatpush1.msra.mxu0 0.0
        %3947 = vmatprep.subr.mxu0 0.0
        %3948 = vmatpush1.msra.mxu0 0.0
        %3949 = vmatprep.subr.mxu0 0.0
        %3950 = vmatpush1.msra.mxu0 0.0
        %3951 = vmatprep.subr.mxu0 0.0
        %3952 = vmatpush1.msra.mxu0 0.0
        %3953 = vmatprep.subr.mxu0 0.0
        %3954 = vmatpush1.msra.mxu0 0.0
        %3955 = vmatprep.subr.mxu0 0.0
        %3956 = vmatpush1.msra.mxu0 0.0
        %3957 = vmatprep.subr.mxu0 0.0
        %3958 = vmatpush1.msra.mxu0 0.0
        %3959 = vmatprep.subr.mxu0 0.0
        %3960 = vmatpush1.msra.mxu0 0.0
        %3961 = vmatprep.subr.mxu0 0.0
        %3962 = vmatpush1.msra.mxu0 0.0
        %3963 = vmatprep.subr.mxu0 0.0
        %3964 = vmatpush1.msra.mxu0 0.0
        %3965 = vmatprep.subr.mxu0 0.0
        %3966 = vmatpush1.msra.mxu0 0.0
        %3967 = vmatprep.subr.mxu0 0.0
        %3968 = vmatpush1.msra.mxu0 0.0
        %3969 = vmatprep.subr.mxu0 0.0
        %3970 = vmatpush1.msra.mxu0 0.0
        %3971 = vmatprep.subr.mxu0 0.0
        %3972 = vmatpush1.msra.mxu0 0.0
        %3973 = vmatprep.subr.mxu0 0.0
        %3974 = vmatpush1.msra.mxu0 0.0
        %3975 = vmatprep.subr.mxu0 0.0
        %3976 = vmatpush1.msra.mxu0 0.0
        %3977 = vmatprep.subr.mxu0 0.0
        %3978 = vmatpush1.msra.mxu0 0.0
        %3979 = vmatprep.subr.mxu0 0.0
        %3980 = vmatpush1.msra.mxu0 0.0
        %3981 = vmatprep.subr.mxu0 0.0
        %3982 = vmatpush1.msra.mxu0 0.0
        %3983 = vmatprep.subr.mxu0 0.0
        %3984 = vmatpush1.msra.mxu0 0.0
        %3985 = vmatprep.subr.mxu0 0.0
        %3986 = vmatpush1.msra.mxu0 0.0
        %3987 = vmatprep.mubr.f32.mxu0 0.0
        %v3988 = vand.u32 %v3085, 4294901760
        %v3989 = vsub.f32 %v3085, %v3988
        %v3990 = vand.u32 %v3989, 4294901760
        %3991 = vmatmul.mubr.f32.gmra.mrb[0].mxu0 %v3990
        %v3992 = vpop.f32.mrb[0].mxu0
        %v3993 = vadd.f32 %v3911, %v3992
        %v3994 = vpop.f32.mrb[0].mxu0
        %v3995 = vadd.f32 %v3913, %v3994
        %3996 = vdwg.mxu0
        %v3997 = vand.u32 %v3064, 4294901760
        %v3998 = vsub.f32 %v3064, %v3997
        %v3999 = vand.u32 %v3998, 4294901760
        %4000 = vmatprep.subr.mxu0 %v3999
        %v4001 = vand.u32 %v3063, 4294901760
        %v4002 = vsub.f32 %v3063, %v4001
        %v4003 = vand.u32 %v4002, 4294901760
        %4004 = vmatpush1.msra.mxu0 %v4003
        %v4005 = vand.u32 %v3068, 4294901760
        %v4006 = vsub.f32 %v3068, %v4005
        %v4007 = vand.u32 %v4006, 4294901760
        %4008 = vmatprep.subr.mxu0 %v4007
        %v4009 = vand.u32 %v3067, 4294901760
        %v4010 = vsub.f32 %v3067, %v4009
        %v4011 = vand.u32 %v4010, 4294901760
        %4012 = vmatpush1.msra.mxu0 %v4011
        %v4013 = vand.u32 %v3072, 4294901760
        %v4014 = vsub.f32 %v3072, %v4013
        %v4015 = vand.u32 %v4014, 4294901760
        %4016 = vmatprep.subr.mxu0 %v4015
        %v4017 = vand.u32 %v3071, 4294901760
        %v4018 = vsub.f32 %v3071, %v4017
        %v4019 = vand.u32 %v4018, 4294901760
        %4020 = vmatpush1.msra.mxu0 %v4019
        %v4021 = vand.u32 %v3076, 4294901760
        %v4022 = vsub.f32 %v3076, %v4021
        %v4023 = vand.u32 %v4022, 4294901760
        %4024 = vmatprep.subr.mxu0 %v4023
        %v4025 = vand.u32 %v3075, 4294901760
        %v4026 = vsub.f32 %v3075, %v4025
        %v4027 = vand.u32 %v4026, 4294901760
        %4028 = vmatpush1.msra.mxu0 %v4027
        %4029 = vmatprep.subr.mxu0 0.0
        %4030 = vmatpush1.msra.mxu0 0.0
        %4031 = vmatprep.subr.mxu0 0.0
        %4032 = vmatpush1.msra.mxu0 0.0
        %4033 = vmatprep.subr.mxu0 0.0
        %4034 = vmatpush1.msra.mxu0 0.0
        %4035 = vmatprep.subr.mxu0 0.0
        %4036 = vmatpush1.msra.mxu0 0.0
        %4037 = vmatprep.subr.mxu0 0.0
        %4038 = vmatpush1.msra.mxu0 0.0
        %4039 = vmatprep.subr.mxu0 0.0
        %4040 = vmatpush1.msra.mxu0 0.0
        %4041 = vmatprep.subr.mxu0 0.0
        %4042 = vmatpush1.msra.mxu0 0.0
        %4043 = vmatprep.subr.mxu0 0.0
        %4044 = vmatpush1.msra.mxu0 0.0
        %4045 = vmatprep.subr.mxu0 0.0
        %4046 = vmatpush1.msra.mxu0 0.0
        %4047 = vmatprep.subr.mxu0 0.0
        %4048 = vmatpush1.msra.mxu0 0.0
        %4049 = vmatprep.subr.mxu0 0.0
        %4050 = vmatpush1.msra.mxu0 0.0
        %4051 = vmatprep.subr.mxu0 0.0
        %4052 = vmatpush1.msra.mxu0 0.0
        %4053 = vmatprep.subr.mxu0 0.0
        %4054 = vmatpush1.msra.mxu0 0.0
        %4055 = vmatprep.subr.mxu0 0.0
        %4056 = vmatpush1.msra.mxu0 0.0
        %4057 = vmatprep.subr.mxu0 0.0
        %4058 = vmatpush1.msra.mxu0 0.0
        %4059 = vmatprep.subr.mxu0 0.0
        %4060 = vmatpush1.msra.mxu0 0.0
        %4061 = vmatprep.subr.mxu0 0.0
        %4062 = vmatpush1.msra.mxu0 0.0
        %4063 = vmatprep.subr.mxu0 0.0
        %4064 = vmatpush1.msra.mxu0 0.0
        %4065 = vmatprep.subr.mxu0 0.0
        %4066 = vmatpush1.msra.mxu0 0.0
        %4067 = vmatprep.subr.mxu0 0.0
        %4068 = vmatpush1.msra.mxu0 0.0
        %4069 = vmatprep.subr.mxu0 0.0
        %4070 = vmatpush1.msra.mxu0 0.0
        %4071 = vmatprep.subr.mxu0 0.0
        %4072 = vmatpush1.msra.mxu0 0.0
        %4073 = vmatprep.subr.mxu0 0.0
        %4074 = vmatpush1.msra.mxu0 0.0
        %4075 = vmatprep.subr.mxu0 0.0
        %4076 = vmatpush1.msra.mxu0 0.0
        %4077 = vmatprep.subr.mxu0 0.0
        %4078 = vmatpush1.msra.mxu0 0.0
        %4079 = vmatprep.subr.mxu0 0.0
        %4080 = vmatpush1.msra.mxu0 0.0
        %4081 = vmatprep.subr.mxu0 0.0
        %4082 = vmatpush1.msra.mxu0 0.0
        %4083 = vmatprep.subr.mxu0 0.0
        %4084 = vmatpush1.msra.mxu0 0.0
        %4085 = vmatprep.mubr.f32.mxu0 0.0
        %v4086 = vand.u32 %v3085, 4294901760
        %4087 = vmatmul.mubr.f32.gmra.mrb[0].mxu0 %v4086
        %v4088 = vpop.f32.mrb[0].mxu0
        %v4089 = vadd.f32 %v3993, %v4088
        %v4090 = vpop.f32.mrb[0].mxu0
        %v4091 = vadd.f32 %v3995, %v4090
        %4092 = vdwg.mxu0
        %v4093 = vand.u32 %v3064, 4294901760
        %4094 = vmatprep.subr.mxu0 %v4093
        %v4095 = vand.u32 %v3063, 4294901760
        %4096 = vmatpush1.msra.mxu0 %v4095
        %v4097 = vand.u32 %v3068, 4294901760
        %4098 = vmatprep.subr.mxu0 %v4097
        %v4099 = vand.u32 %v3067, 4294901760
        %4100 = vmatpush1.msra.mxu0 %v4099
        %v4101 = vand.u32 %v3072, 4294901760
        %4102 = vmatprep.subr.mxu0 %v4101
        %v4103 = vand.u32 %v3071, 4294901760
        %4104 = vmatpush1.msra.mxu0 %v4103
        %v4105 = vand.u32 %v3076, 4294901760
        %4106 = vmatprep.subr.mxu0 %v4105
        %v4107 = vand.u32 %v3075, 4294901760
        %4108 = vmatpush1.msra.mxu0 %v4107
        %4109 = vmatprep.subr.mxu0 0.0
        %4110 = vmatpush1.msra.mxu0 0.0
        %4111 = vmatprep.subr.mxu0 0.0
        %4112 = vmatpush1.msra.mxu0 0.0
        %4113 = vmatprep.subr.mxu0 0.0
        %4114 = vmatpush1.msra.mxu0 0.0
        %4115 = vmatprep.subr.mxu0 0.0
        %4116 = vmatpush1.msra.mxu0 0.0
        %4117 = vmatprep.subr.mxu0 0.0
        %4118 = vmatpush1.msra.mxu0 0.0
        %4119 = vmatprep.subr.mxu0 0.0
        %4120 = vmatpush1.msra.mxu0 0.0
        %4121 = vmatprep.subr.mxu0 0.0
        %4122 = vmatpush1.msra.mxu0 0.0
        %4123 = vmatprep.subr.mxu0 0.0
        %4124 = vmatpush1.msra.mxu0 0.0
        %4125 = vmatprep.subr.mxu0 0.0
        %4126 = vmatpush1.msra.mxu0 0.0
        %4127 = vmatprep.subr.mxu0 0.0
        %4128 = vmatpush1.msra.mxu0 0.0
        %4129 = vmatprep.subr.mxu0 0.0
        %4130 = vmatpush1.msra.mxu0 0.0
        %4131 = vmatprep.subr.mxu0 0.0
        %4132 = vmatpush1.msra.mxu0 0.0
        %4133 = vmatprep.subr.mxu0 0.0
        %4134 = vmatpush1.msra.mxu0 0.0
        %4135 = vmatprep.subr.mxu0 0.0
        %4136 = vmatpush1.msra.mxu0 0.0
        %4137 = vmatprep.subr.mxu0 0.0
        %4138 = vmatpush1.msra.mxu0 0.0
        %4139 = vmatprep.subr.mxu0 0.0
        %4140 = vmatpush1.msra.mxu0 0.0
        %4141 = vmatprep.subr.mxu0 0.0
        %4142 = vmatpush1.msra.mxu0 0.0
        %4143 = vmatprep.subr.mxu0 0.0
        %4144 = vmatpush1.msra.mxu0 0.0
        %4145 = vmatprep.subr.mxu0 0.0
        %4146 = vmatpush1.msra.mxu0 0.0
        %4147 = vmatprep.subr.mxu0 0.0
        %4148 = vmatpush1.msra.mxu0 0.0
        %4149 = vmatprep.subr.mxu0 0.0
        %4150 = vmatpush1.msra.mxu0 0.0
        %4151 = vmatprep.subr.mxu0 0.0
        %4152 = vmatpush1.msra.mxu0 0.0
        %4153 = vmatprep.subr.mxu0 0.0
        %4154 = vmatpush1.msra.mxu0 0.0
        %4155 = vmatprep.subr.mxu0 0.0
        %4156 = vmatpush1.msra.mxu0 0.0
        %4157 = vmatprep.subr.mxu0 0.0
        %4158 = vmatpush1.msra.mxu0 0.0
        %4159 = vmatprep.subr.mxu0 0.0
        %4160 = vmatpush1.msra.mxu0 0.0
        %4161 = vmatprep.subr.mxu0 0.0
        %4162 = vmatpush1.msra.mxu0 0.0
        %4163 = vmatprep.subr.mxu0 0.0
        %4164 = vmatpush1.msra.mxu0 0.0
        %4165 = vmatprep.mubr.f32.mxu0 0.0
        %v4166 = vand.u32 %v3085, 4294901760
        %4167 = vmatmul.mubr.f32.gmra.mrb[0].mxu0 %v4166
        %v4168 = vpop.f32.mrb[0].mxu0
        %v4169 = vadd.f32 %v4089, %v4168
        %v4170 = vpop.f32.mrb[0].mxu0
        %v4171 = vadd.f32 %v4091, %v4170
        %4172 = vdwg.mxu0
        %v4177 = vcombine.low %v3626, %v3628
        %v4178 = vcombine.low %v4169, %v4171
        %4181 = vst [vmem:[%s296] sm:$0xff] %v4177
        %4182 = vst [vmem:[%s296 + $0x8] sm:$0xff] %v4178
        %s4183 = sand.u32 %s184, 1
        %s4184 = scalar_lea.sflag [#allocation4], %s4183
        %s4185 = sand.u32 %s184, 1
        %s4186 = smul.addr %s4185, 16
        %s4187 = scalar_lea.vmem [#allocation5], %s4186
        // Predicated region
        $region53: #{tpu_custom_call.1} parent=47 // pred_check
          %p4188 = pneg %p194
        $region54: #{tpu_custom_call.1} parent=47 // pred_check_branch
          %4190 = sbr.rel (%p4188) target = $region56
        $region55: #{tpu_custom_call.1} parent=47 // pred_region
          %s4191 = smul.u32 4, %s24
          %s4193 = ssub.s32 256, 256
          %4194 = vsyncadd %s4184, %s4193
          %s4195 = smul.addr %s4191, 64
          %s4196 = scalar_lea.hbm %s7, %s4195
          %s4198 = sshll.u32 %s4187, 4
          %s4199 = int_to_ptr.vmem [resolvable:$true] %s4198
          %4201 = dma.vmem_to_hbm [thread:$0]  %s4199, 256, %s4196, %s4184
        $region56: #{tpu_custom_call.1} parent=47 // pred_fallthru
          _
      $region48: #{tpu_custom_call.1} parent=5 // pred_fallthru
        _
      %p4202 = scmp.le.s32.totalorder 2, %s19
      // Predicated region
      $region57: #{tpu_custom_call.1} parent=5 // pred_check
        %p4203 = pneg %p4202
      $region58: #{tpu_custom_call.1} parent=5 // pred_check_branch
        %4205 = sbr.rel (%p4203) target = $region60
      $region59: #{tpu_custom_call.1} parent=5 // pred_region
        %s4206 = ssub.s32 %s19, 2
        // Predicated region
        $region61: #{tpu_custom_call.1} parent=59 // pred_check
          %p4207 = pneg %p200
        $region62: #{tpu_custom_call.1} parent=59 // pred_check_branch
          %4209 = sbr.rel (%p4207) target = $region64
        $region63: #{tpu_custom_call.1} parent=59 // pred_region
          %s4210 = sand.u32 %s185, 1
          %s4211 = scalar_lea.sflag [#allocation4], %s4210
          %s4212 = sand.u32 %s185, 1
          %s4213 = smul.addr %s4212, 16
          %s4214 = scalar_lea.vmem [#allocation5], %s4213
          %4215 = dma.done %s4211, 256
        $region64: #{tpu_custom_call.1} parent=59 // pred_fallthru
          _
      $region60: #{tpu_custom_call.1} parent=5 // pred_fallthru
        _
    $region6: #{tpu_custom_call.1} parent=1 // loop_footer
      %s23 = sadd.s32 1, %s19
    $region7: #{tpu_custom_call.1} parent=1 // loop_footer_branch
      %18 = sbr.rel target = $region3
    $region8: #{tpu_custom_call.1} parent=1 // loop_exit
      _
    %4216 = vsyncpa [#allocation3], 1
    %s4217 = scalar_lea.sflag [#allocation3], 1
    %4218 = vsyncpa %s4217, 1
    %4219 = vsyncpa [#allocation4], 1
    %s4220 = scalar_lea.sflag [#allocation4], 1
    %4221 = vsyncpa %s4220, 1

</llo_original>
